<compile_context>
chip_gen: v7x
topology: tpu7x:2x2x1
jax: 0.10.0
libtpu: 0.0.40
codegen_flags: <defaults>
</compile_context>

<pallas_src>
import functools

import jax
import jax.numpy as jnp
import numpy as np
from jax.experimental import pallas as pl
from jax.experimental.pallas import tpu as pltpu

INPUT_SIZE = 4
HIDDEN_SIZE = 32   # small-shape stand-in for the default 100 (module is parameterizable)
NUM_LAYERS = 3
BATCH = 2
BATCH_PAD = 8      # pad batch to the 8-sublane vreg height inside the kernel
SEQ = 8


# ----------------------------- Pallas kernel ------------------------------

def fused_lstm_kernel(x_ref,
                      wih0_ref, whh0_ref, b0_ref,
                      wih1_ref, whh1_ref, b1_ref,
                      wih2_ref, whh2_ref, b2_ref,
                      fcw_ref, fcb_ref,
                      out_ref,
                      *, seq_len, batch_pad, hidden_size):
    """Whole forward pass: 3 stacked LSTM layers (wavefront) + Linear head in VMEM.

    x_ref:            (T*Bp, F_in) bf16, time-major, batch padded to Bp
    wih*/whh* refs:   bf16, pre-transposed to (in, 4H) / (H, 4H)
    b* refs:          (1, 4H) f32 combined b_ih + b_hh
    fcw_ref:          (1, H) f32, fcb_ref: (1, 1) f32
    out_ref:          (Bp, 1) f32
    Gate column order is (i, f, o, g); the g columns (weights AND bias) are
    pre-scaled by 2 so one full-vreg sigmoid covers all 4H lanes and
    tanh(x) = 2*sigmoid(2x) - 1.
    """
    T, Bp, H = seq_len, batch_pad, hidden_size
    f32, bf16 = jnp.float32, jnp.bfloat16

    # Load weights once (bf16 -> single-pass MXU with f32 accumulation).
    whh0 = whh0_ref[...]
    wih1 = wih1_ref[...]
    whh1 = whh1_ref[...]
    wih2 = wih2_ref[...]
    whh2 = whh2_ref[...]
    b1 = b1_ref[...]
    b2 = b2_ref[...]

    # Hoisted layer-0 input projection over all timesteps: one (T*Bp,F)x(F,4H) matmul.
    gx0 = jnp.dot(x_ref[...], wih0_ref[...],
                  preferred_element_type=f32) + b0_ref[...]          # (T*Bp, 4H) f32

    def cell_update(g, c):
        """One LSTM cell update from the full (Bp, 4H) gate preactivation."""
        sig = jax.nn.sigmoid(g)                 # ONE full-vreg (8,128) EUP pass
        i_g = sig[:, 0:H]
        f_g = sig[:, H:2 * H]
        o_g = sig[:, 2 * H:3 * H]
        g_g = 2.0 * sig[:, 3 * H:4 * H] - 1.0   # tanh via pre-scaled sigmoid
        c_new = f_g * c + i_g * g_g
        h_new = o_g * jnp.tanh(c_new)
        return h_new, c_new

    zeros = jnp.zeros((Bp, H), f32)
    h0, c0 = zeros, zeros
    h1, c1 = zeros, zeros
    h2, c2 = zeros, zeros

    # Per-timestep input projections for layers 1/2, produced as soon as the
    # previous layer's h_t exists (plain Python lists: unrolled SSA dataflow).
    gx1 = [None] * T
    gx2 = [None] * T

    # Wavefront: at step s the three cell updates are mutually independent
    # (layer0@t=s, layer1@t=s-1, layer2@t=s-2) -> critical path T+2 not 3*T.
    for s in range(T + 2):
        t0, t1, t2 = s, s - 1, s - 2
        if t0 < T:
            g = gx0[t0 * Bp:(t0 + 1) * Bp, :] + jnp.dot(
                h0.astype(bf16), whh0, preferred_element_type=f32)
            h0, c0 = cell_update(g, c0)
            gx1[t0] = jnp.dot(h0.astype(bf16), wih1,
                              preferred_element_type=f32) + b1
        if 0 <= t1 < T:
            g = gx1[t1] + jnp.dot(h1.astype(bf16), whh1,
                                  preferred_element_type=f32)
            h1, c1 = cell_update(g, c1)
            gx2[t1] = jnp.dot(h1.astype(bf16), wih2,
                              preferred_element_type=f32) + b2
        if 0 <= t2 < T:
            g = gx2[t2] + jnp.dot(h2.astype(bf16), whh2,
                                  preferred_element_type=f32)
            h2, c2 = cell_update(g, c2)

    # FC head: VPU multiply + lane reduce (no MXU push/drain for a 1-wide RHS).
    out_ref[...] = (jnp.sum(h2 * fcw_ref[...], axis=-1, keepdims=True)
                    + fcb_ref[...])


# ------------------------------ wrapper ------------------------------------

def lstm_model_forward(x_btf, kparams):
    """x_btf: (B, T, input_size), as in the PyTorch module (batch_first=True)."""
    B, T, F = x_btf.shape
    Bp = BATCH_PAD
    H = HIDDEN_SIZE

    # (B, T, F) -> time-major (T, B, F) -> pad batch to Bp -> flatten to (T*Bp, F).
    x_tbf = jnp.transpose(x_btf, (1, 0, 2))
    x_tbf = jnp.pad(x_tbf, ((0, 0), (0, Bp - B), (0, 0)))
    x_flat = x_tbf.reshape(T * Bp, F).astype(jnp.bfloat16)

    kernel = functools.partial(fused_lstm_kernel,
                               seq_len=T, batch_pad=Bp, hidden_size=H)
    vmem_specs = [pl.BlockSpec(memory_space=pltpu.MemorySpace.VMEM)
                  for _ in range(12)]

    out = pl.pallas_call(
        kernel,
        out_shape=jax.ShapeDtypeStruct((Bp, 1), jnp.float32),
        in_specs=vmem_specs,
        out_specs=pl.BlockSpec(memory_space=pltpu.MemorySpace.VMEM),
    )(x_flat,
      *kparams["lstm"][0], *kparams["lstm"][1], *kparams["lstm"][2],
      kparams["fc_w_row"], kparams["fc_b"])

    return out[:B]                                   # drop padded batch rows


# -------------------------- parameter construction ------------------------

def init_params(key, input_size, hidden_size, num_layers):
    """PyTorch-shaped params: W_ih (4H, in), W_hh (4H, H), b_ih/b_hh (4H,), gate
    order (i, f, g, o), uniform(-1/sqrt(H), 1/sqrt(H))."""
    bound = 1.0 / np.sqrt(hidden_size)
    params = {"lstm": []}
    for layer in range(num_layers):
        in_f = input_size if layer == 0 else hidden_size
        key, k1, k2, k3, k4 = jax.random.split(key, 5)
        w_ih = jax.random.uniform(k1, (4 * hidden_size, in_f), jnp.float32, -bound, bound)
        w_hh = jax.random.uniform(k2, (4 * hidden_size, hidden_size), jnp.float32, -bound, bound)
        b_ih = jax.random.uniform(k3, (4 * hidden_size,), jnp.float32, -bound, bound)
        b_hh = jax.random.uniform(k4, (4 * hidden_size,), jnp.float32, -bound, bound)
        params["lstm"].append((w_ih, w_hh, b_ih, b_hh))
    key, k5, k6 = jax.random.split(key, 3)
    params["fc_w"] = jax.random.uniform(k5, (1, hidden_size), jnp.float32, -bound, bound)
    params["fc_b"] = jax.random.uniform(k6, (1,), jnp.float32, -bound, bound)
    return params


def to_kernel_params(params, hidden_size):
    """Pre-transpose weights to (in, 4H), combine biases, reorder gate columns
    from PyTorch (i, f, g, o) to kernel layout (i, f, o, g), pre-scale the
    g-gate columns by 2 (tanh-via-sigmoid), and cast matmul weights to bf16."""
    H = hidden_size

    def reorder_scale(w):   # (..., 4H) cols (i,f,g,o) -> (i,f,o, 2*g)
        i = w[..., 0:H]
        f = w[..., H:2 * H]
        g = w[..., 2 * H:3 * H]
        o = w[..., 3 * H:4 * H]
        return jnp.concatenate([i, f, o, 2.0 * g], axis=-1)

    lstm = []
    for (w_ih, w_hh, b_ih, b_hh) in params["lstm"]:
        lstm.append((reorder_scale(w_ih.T).astype(jnp.bfloat16),
                     reorder_scale(w_hh.T).astype(jnp.bfloat16),
                     reorder_scale((b_ih + b_hh)[None, :])))        # f32 bias
    return {"lstm": lstm,
            "fc_w_row": params["fc_w"],             # (1, H) f32 (VPU mul + reduce)
            "fc_b": params["fc_b"].reshape(1, 1)}   # (1, 1)


# ------------------------ pure-JAX reference (check) -----------------------

def reference_forward(x_btf, params):
    """Matches PyTorch semantics exactly (gate order i,f,g,o, zero h0/c0, f32)."""
    B = x_btf.shape[0]
    H = HIDDEN_SIZE
    h_seq = jnp.transpose(x_btf, (1, 0, 2))        # (T, B, F)
    for (w_ih, w_hh, b_ih, b_hh) in params["lstm"]:
        w_ih_t, w_hh_t = w_ih.T, w_hh.T
        bias = (b_ih + b_hh)[None, :]

        def step(carry, x_t, w_ih_t=w_ih_t, w_hh_t=w_hh_t, bias=bias):
            h, c = carry
            g = x_t @ w_ih_t + h @ w_hh_t + bias
            i = jax.nn.sigmoid(g[:, 0 * H:1 * H])
            f = jax.nn.sigmoid(g[:, 1 * H:2 * H])
            gg = jnp.tanh(g[:, 2 * H:3 * H])
            o = jax.nn.sigmoid(g[:, 3 * H:4 * H])
            c = f * c + i * gg
            h = o * jnp.tanh(c)
            return (h, c), h

        init = (jnp.zeros((B, H), jnp.float32), jnp.zeros((B, H), jnp.float32))
        _, h_seq = jax.lax.scan(step, init, h_seq)
    return h_seq[-1] @ params["fc_w"].T + params["fc_b"][None, :]


# --------------------------------- main ------------------------------------

if __name__ == "__main__":
    key = jax.random.PRNGKey(0)
    key, xkey = jax.random.split(key)
    x = jax.random.normal(xkey, (BATCH, SEQ, INPUT_SIZE), jnp.float32)

    params = init_params(key, INPUT_SIZE, HIDDEN_SIZE, NUM_LAYERS)
    kparams = to_kernel_params(params, HIDDEN_SIZE)

    out = jax.block_until_ready(lstm_model_forward(x, kparams))
    ref = jax.block_until_ready(reference_forward(x, params))

    assert out.shape == (BATCH, 1), out.shape
    # Tolerance loosened for bf16 MXU operands (f32 accumulation, f32 state).
    np.testing.assert_allclose(np.asarray(out), np.asarray(ref), rtol=5e-2, atol=5e-2)

    print("KERNEL_OK")
</pallas_src>

<mosaic_0001>
module attributes {stable_mosaic.version = 11 : i64} {
  func.func @fused_lstm_kernel(%arg0: memref<64x4xbf16, #tpu.memory_space<vmem>>, %arg1: memref<4x128xbf16, #tpu.memory_space<vmem>>, %arg2: memref<32x128xbf16, #tpu.memory_space<vmem>>, %arg3: memref<1x128xf32, #tpu.memory_space<vmem>>, %arg4: memref<32x128xbf16, #tpu.memory_space<vmem>>, %arg5: memref<32x128xbf16, #tpu.memory_space<vmem>>, %arg6: memref<1x128xf32, #tpu.memory_space<vmem>>, %arg7: memref<32x128xbf16, #tpu.memory_space<vmem>>, %arg8: memref<32x128xbf16, #tpu.memory_space<vmem>>, %arg9: memref<1x128xf32, #tpu.memory_space<vmem>>, %arg10: memref<1x32xf32, #tpu.memory_space<vmem>>, %arg11: memref<1x1xf32, #tpu.memory_space<vmem>>, %arg12: memref<8x1xf32, #tpu.memory_space<vmem>>) attributes {dimension_semantics = [], scalar_prefetch = 0 : i64, scratch_operands = 0 : i64, tpu.core_type = #tpu.core_type<tc>} {
    %c0 = arith.constant 0 : index
    %c0_0 = arith.constant 0 : index
    %0 = vector.load %arg2[%c0, %c0_0] : memref<32x128xbf16, #tpu.memory_space<vmem>>, vector<32x128xbf16>
    %c0_1 = arith.constant 0 : index
    %c0_2 = arith.constant 0 : index
    %1 = vector.load %arg4[%c0_1, %c0_2] : memref<32x128xbf16, #tpu.memory_space<vmem>>, vector<32x128xbf16>
    %c0_3 = arith.constant 0 : index
    %c0_4 = arith.constant 0 : index
    %2 = vector.load %arg5[%c0_3, %c0_4] : memref<32x128xbf16, #tpu.memory_space<vmem>>, vector<32x128xbf16>
    %c0_5 = arith.constant 0 : index
    %c0_6 = arith.constant 0 : index
    %3 = vector.load %arg7[%c0_5, %c0_6] : memref<32x128xbf16, #tpu.memory_space<vmem>>, vector<32x128xbf16>
    %c0_7 = arith.constant 0 : index
    %c0_8 = arith.constant 0 : index
    %4 = vector.load %arg8[%c0_7, %c0_8] : memref<32x128xbf16, #tpu.memory_space<vmem>>, vector<32x128xbf16>
    %c0_9 = arith.constant 0 : index
    %c0_10 = arith.constant 0 : index
    %5 = vector.load %arg6[%c0_9, %c0_10] : memref<1x128xf32, #tpu.memory_space<vmem>>, vector<1x128xf32>
    %c0_11 = arith.constant 0 : index
    %c0_12 = arith.constant 0 : index
    %6 = vector.load %arg9[%c0_11, %c0_12] : memref<1x128xf32, #tpu.memory_space<vmem>>, vector<1x128xf32>
    %c0_13 = arith.constant 0 : index
    %c0_14 = arith.constant 0 : index
    %7 = vector.load %arg0[%c0_13, %c0_14] : memref<64x4xbf16, #tpu.memory_space<vmem>>, vector<64x4xbf16>
    %c0_15 = arith.constant 0 : index
    %c0_16 = arith.constant 0 : index
    %8 = vector.load %arg1[%c0_15, %c0_16] : memref<4x128xbf16, #tpu.memory_space<vmem>>, vector<4x128xbf16>
    %cst = arith.constant dense<0.000000e+00> : vector<64x128xf32>
    %9 = tpu.matmul %7, %8, %cst {dimension_numbers = #tpu.dot_dimension_numbers<[1], [0], [0], [1], [0, 0, 1, 1], [], []>} : vector<64x4xbf16>, vector<4x128xbf16>, vector<64x128xf32> -> vector<64x128xf32>
    %c0_17 = arith.constant 0 : index
    %c0_18 = arith.constant 0 : index
    %10 = vector.load %arg3[%c0_17, %c0_18] : memref<1x128xf32, #tpu.memory_space<vmem>>, vector<1x128xf32>
    %11 = vector.broadcast %10 : vector<1x128xf32> to vector<64x128xf32>
    %12 = arith.addf %9, %11 : vector<64x128xf32>
    %cst_19 = arith.constant 0.000000e+00 : f32
    %13 = vector.broadcast %cst_19 : f32 to vector<8x32xf32>
    %14 = vector.extract_strided_slice %12 {offsets = [0, 0], sizes = [8, 128], strides = [1, 1]} : vector<64x128xf32> to vector<8x128xf32>
    %15 = arith.truncf %13 : vector<8x32xf32> to vector<8x32xbf16>
    %cst_20 = arith.constant dense<0.000000e+00> : vector<8x128xf32>
    %16 = tpu.matmul %15, %0, %cst_20 {dimension_numbers = #tpu.dot_dimension_numbers<[1], [0], [0], [1], [0, 0, 1, 1], [], []>} : vector<8x32xbf16>, vector<32x128xbf16>, vector<8x128xf32> -> vector<8x128xf32>
    %17 = arith.addf %14, %16 : vector<8x128xf32>
    %18 = arith.negf %17 : vector<8x128xf32>
    %19 = math.exp %18 : vector<8x128xf32>
    %cst_21 = arith.constant 1.000000e+00 : f32
    %20 = vector.broadcast %cst_21 : f32 to vector<8x128xf32>
    %21 = arith.addf %20, %19 : vector<8x128xf32>
    %22 = arith.divf %20, %21 : vector<8x128xf32>
    %23 = vector.extract_strided_slice %22 {offsets = [0, 0], sizes = [8, 32], strides = [1, 1]} : vector<8x128xf32> to vector<8x32xf32>
    %24 = vector.extract_strided_slice %22 {offsets = [0, 32], sizes = [8, 32], strides = [1, 1]} : vector<8x128xf32> to vector<8x32xf32>
    %25 = vector.extract_strided_slice %22 {offsets = [0, 64], sizes = [8, 32], strides = [1, 1]} : vector<8x128xf32> to vector<8x32xf32>
    %26 = vector.extract_strided_slice %22 {offsets = [0, 96], sizes = [8, 32], strides = [1, 1]} : vector<8x128xf32> to vector<8x32xf32>
    %cst_22 = arith.constant 2.000000e+00 : f32
    %27 = vector.broadcast %cst_22 : f32 to vector<8x32xf32>
    %28 = arith.mulf %27, %26 : vector<8x32xf32>
    %cst_23 = arith.constant 1.000000e+00 : f32
    %29 = vector.broadcast %cst_23 : f32 to vector<8x32xf32>
    %30 = arith.subf %28, %29 : vector<8x32xf32>
    %31 = arith.mulf %24, %13 : vector<8x32xf32>
    %32 = arith.mulf %23, %30 : vector<8x32xf32>
    %33 = arith.addf %31, %32 : vector<8x32xf32>
    %34 = math.tanh %33 : vector<8x32xf32>
    %35 = arith.mulf %25, %34 : vector<8x32xf32>
    %36 = arith.truncf %35 : vector<8x32xf32> to vector<8x32xbf16>
    %cst_24 = arith.constant dense<0.000000e+00> : vector<8x128xf32>
    %37 = tpu.matmul %36, %1, %cst_24 {dimension_numbers = #tpu.dot_dimension_numbers<[1], [0], [0], [1], [0, 0, 1, 1], [], []>} : vector<8x32xbf16>, vector<32x128xbf16>, vector<8x128xf32> -> vector<8x128xf32>
    %38 = vector.broadcast %5 : vector<1x128xf32> to vector<8x128xf32>
    %39 = arith.addf %37, %38 : vector<8x128xf32>
    %40 = vector.extract_strided_slice %12 {offsets = [8, 0], sizes = [8, 128], strides = [1, 1]} : vector<64x128xf32> to vector<8x128xf32>
    %41 = arith.truncf %35 : vector<8x32xf32> to vector<8x32xbf16>
    %cst_25 = arith.constant dense<0.000000e+00> : vector<8x128xf32>
    %42 = tpu.matmul %41, %0, %cst_25 {dimension_numbers = #tpu.dot_dimension_numbers<[1], [0], [0], [1], [0, 0, 1, 1], [], []>} : vector<8x32xbf16>, vector<32x128xbf16>, vector<8x128xf32> -> vector<8x128xf32>
    %43 = arith.addf %40, %42 : vector<8x128xf32>
    %44 = arith.negf %43 : vector<8x128xf32>
    %45 = math.exp %44 : vector<8x128xf32>
    %cst_26 = arith.constant 1.000000e+00 : f32
    %46 = vector.broadcast %cst_26 : f32 to vector<8x128xf32>
    %47 = arith.addf %46, %45 : vector<8x128xf32>
    %48 = arith.divf %46, %47 : vector<8x128xf32>
    %49 = vector.extract_strided_slice %48 {offsets = [0, 0], sizes = [8, 32], strides = [1, 1]} : vector<8x128xf32> to vector<8x32xf32>
    %50 = vector.extract_strided_slice %48 {offsets = [0, 32], sizes = [8, 32], strides = [1, 1]} : vector<8x128xf32> to vector<8x32xf32>
    %51 = vector.extract_strided_slice %48 {offsets = [0, 64], sizes = [8, 32], strides = [1, 1]} : vector<8x128xf32> to vector<8x32xf32>
    %52 = vector.extract_strided_slice %48 {offsets = [0, 96], sizes = [8, 32], strides = [1, 1]} : vector<8x128xf32> to vector<8x32xf32>
    %cst_27 = arith.constant 2.000000e+00 : f32
    %53 = vector.broadcast %cst_27 : f32 to vector<8x32xf32>
    %54 = arith.mulf %53, %52 : vector<8x32xf32>
    %cst_28 = arith.constant 1.000000e+00 : f32
    %55 = vector.broadcast %cst_28 : f32 to vector<8x32xf32>
    %56 = arith.subf %54, %55 : vector<8x32xf32>
    %57 = arith.mulf %50, %33 : vector<8x32xf32>
    %58 = arith.mulf %49, %56 : vector<8x32xf32>
    %59 = arith.addf %57, %58 : vector<8x32xf32>
    %60 = math.tanh %59 : vector<8x32xf32>
    %61 = arith.mulf %51, %60 : vector<8x32xf32>
    %62 = arith.truncf %61 : vector<8x32xf32> to vector<8x32xbf16>
    %cst_29 = arith.constant dense<0.000000e+00> : vector<8x128xf32>
    %63 = tpu.matmul %62, %1, %cst_29 {dimension_numbers = #tpu.dot_dimension_numbers<[1], [0], [0], [1], [0, 0, 1, 1], [], []>} : vector<8x32xbf16>, vector<32x128xbf16>, vector<8x128xf32> -> vector<8x128xf32>
    %64 = vector.broadcast %5 : vector<1x128xf32> to vector<8x128xf32>
    %65 = arith.addf %63, %64 : vector<8x128xf32>
    %66 = arith.truncf %13 : vector<8x32xf32> to vector<8x32xbf16>
    %cst_30 = arith.constant dense<0.000000e+00> : vector<8x128xf32>
    %67 = tpu.matmul %66, %2, %cst_30 {dimension_numbers = #tpu.dot_dimension_numbers<[1], [0], [0], [1], [0, 0, 1, 1], [], []>} : vector<8x32xbf16>, vector<32x128xbf16>, vector<8x128xf32> -> vector<8x128xf32>
    %68 = arith.addf %39, %67 : vector<8x128xf32>
    %69 = arith.negf %68 : vector<8x128xf32>
    %70 = math.exp %69 : vector<8x128xf32>
    %cst_31 = arith.constant 1.000000e+00 : f32
    %71 = vector.broadcast %cst_31 : f32 to vector<8x128xf32>
    %72 = arith.addf %71, %70 : vector<8x128xf32>
    %73 = arith.divf %71, %72 : vector<8x128xf32>
    %74 = vector.extract_strided_slice %73 {offsets = [0, 0], sizes = [8, 32], strides = [1, 1]} : vector<8x128xf32> to vector<8x32xf32>
    %75 = vector.extract_strided_slice %73 {offsets = [0, 32], sizes = [8, 32], strides = [1, 1]} : vector<8x128xf32> to vector<8x32xf32>
    %76 = vector.extract_strided_slice %73 {offsets = [0, 64], sizes = [8, 32], strides = [1, 1]} : vector<8x128xf32> to vector<8x32xf32>
    %77 = vector.extract_strided_slice %73 {offsets = [0, 96], sizes = [8, 32], strides = [1, 1]} : vector<8x128xf32> to vector<8x32xf32>
    %cst_32 = arith.constant 2.000000e+00 : f32
    %78 = vector.broadcast %cst_32 : f32 to vector<8x32xf32>
    %79 = arith.mulf %78, %77 : vector<8x32xf32>
    %cst_33 = arith.constant 1.000000e+00 : f32
    %80 = vector.broadcast %cst_33 : f32 to vector<8x32xf32>
    %81 = arith.subf %79, %80 : vector<8x32xf32>
    %82 = arith.mulf %75, %13 : vector<8x32xf32>
    %83 = arith.mulf %74, %81 : vector<8x32xf32>
    %84 = arith.addf %82, %83 : vector<8x32xf32>
    %85 = math.tanh %84 : vector<8x32xf32>
    %86 = arith.mulf %76, %85 : vector<8x32xf32>
    %87 = arith.truncf %86 : vector<8x32xf32> to vector<8x32xbf16>
    %cst_34 = arith.constant dense<0.000000e+00> : vector<8x128xf32>
    %88 = tpu.matmul %87, %3, %cst_34 {dimension_numbers = #tpu.dot_dimension_numbers<[1], [0], [0], [1], [0, 0, 1, 1], [], []>} : vector<8x32xbf16>, vector<32x128xbf16>, vector<8x128xf32> -> vector<8x128xf32>
    %89 = vector.broadcast %6 : vector<1x128xf32> to vector<8x128xf32>
    %90 = arith.addf %88, %89 : vector<8x128xf32>
    %91 = vector.extract_strided_slice %12 {offsets = [16, 0], sizes = [8, 128], strides = [1, 1]} : vector<64x128xf32> to vector<8x128xf32>
    %92 = arith.truncf %61 : vector<8x32xf32> to vector<8x32xbf16>
    %cst_35 = arith.constant dense<0.000000e+00> : vector<8x128xf32>
    %93 = tpu.matmul %92, %0, %cst_35 {dimension_numbers = #tpu.dot_dimension_numbers<[1], [0], [0], [1], [0, 0, 1, 1], [], []>} : vector<8x32xbf16>, vector<32x128xbf16>, vector<8x128xf32> -> vector<8x128xf32>
    %94 = arith.addf %91, %93 : vector<8x128xf32>
    %95 = arith.negf %94 : vector<8x128xf32>
    %96 = math.exp %95 : vector<8x128xf32>
    %cst_36 = arith.constant 1.000000e+00 : f32
    %97 = vector.broadcast %cst_36 : f32 to vector<8x128xf32>
    %98 = arith.addf %97, %96 : vector<8x128xf32>
    %99 = arith.divf %97, %98 : vector<8x128xf32>
    %100 = vector.extract_strided_slice %99 {offsets = [0, 0], sizes = [8, 32], strides = [1, 1]} : vector<8x128xf32> to vector<8x32xf32>
    %101 = vector.extract_strided_slice %99 {offsets = [0, 32], sizes = [8, 32], strides = [1, 1]} : vector<8x128xf32> to vector<8x32xf32>
    %102 = vector.extract_strided_slice %99 {offsets = [0, 64], sizes = [8, 32], strides = [1, 1]} : vector<8x128xf32> to vector<8x32xf32>
    %103 = vector.extract_strided_slice %99 {offsets = [0, 96], sizes = [8, 32], strides = [1, 1]} : vector<8x128xf32> to vector<8x32xf32>
    %cst_37 = arith.constant 2.000000e+00 : f32
    %104 = vector.broadcast %cst_37 : f32 to vector<8x32xf32>
    %105 = arith.mulf %104, %103 : vector<8x32xf32>
    %cst_38 = arith.constant 1.000000e+00 : f32
    %106 = vector.broadcast %cst_38 : f32 to vector<8x32xf32>
    %107 = arith.subf %105, %106 : vector<8x32xf32>
    %108 = arith.mulf %101, %59 : vector<8x32xf32>
    %109 = arith.mulf %100, %107 : vector<8x32xf32>
    %110 = arith.addf %108, %109 : vector<8x32xf32>
    %111 = math.tanh %110 : vector<8x32xf32>
    %112 = arith.mulf %102, %111 : vector<8x32xf32>
    %113 = arith.truncf %112 : vector<8x32xf32> to vector<8x32xbf16>
    %cst_39 = arith.constant dense<0.000000e+00> : vector<8x128xf32>
    %114 = tpu.matmul %113, %1, %cst_39 {dimension_numbers = #tpu.dot_dimension_numbers<[1], [0], [0], [1], [0, 0, 1, 1], [], []>} : vector<8x32xbf16>, vector<32x128xbf16>, vector<8x128xf32> -> vector<8x128xf32>
    %115 = vector.broadcast %5 : vector<1x128xf32> to vector<8x128xf32>
    %116 = arith.addf %114, %115 : vector<8x128xf32>
    %117 = arith.truncf %86 : vector<8x32xf32> to vector<8x32xbf16>
    %cst_40 = arith.constant dense<0.000000e+00> : vector<8x128xf32>
    %118 = tpu.matmul %117, %2, %cst_40 {dimension_numbers = #tpu.dot_dimension_numbers<[1], [0], [0], [1], [0, 0, 1, 1], [], []>} : vector<8x32xbf16>, vector<32x128xbf16>, vector<8x128xf32> -> vector<8x128xf32>
    %119 = arith.addf %65, %118 : vector<8x128xf32>
    %120 = arith.negf %119 : vector<8x128xf32>
    %121 = math.exp %120 : vector<8x128xf32>
    %cst_41 = arith.constant 1.000000e+00 : f32
    %122 = vector.broadcast %cst_41 : f32 to vector<8x128xf32>
    %123 = arith.addf %122, %121 : vector<8x128xf32>
    %124 = arith.divf %122, %123 : vector<8x128xf32>
    %125 = vector.extract_strided_slice %124 {offsets = [0, 0], sizes = [8, 32], strides = [1, 1]} : vector<8x128xf32> to vector<8x32xf32>
    %126 = vector.extract_strided_slice %124 {offsets = [0, 32], sizes = [8, 32], strides = [1, 1]} : vector<8x128xf32> to vector<8x32xf32>
    %127 = vector.extract_strided_slice %124 {offsets = [0, 64], sizes = [8, 32], strides = [1, 1]} : vector<8x128xf32> to vector<8x32xf32>
    %128 = vector.extract_strided_slice %124 {offsets = [0, 96], sizes = [8, 32], strides = [1, 1]} : vector<8x128xf32> to vector<8x32xf32>
    %cst_42 = arith.constant 2.000000e+00 : f32
    %129 = vector.broadcast %cst_42 : f32 to vector<8x32xf32>
    %130 = arith.mulf %129, %128 : vector<8x32xf32>
    %cst_43 = arith.constant 1.000000e+00 : f32
    %131 = vector.broadcast %cst_43 : f32 to vector<8x32xf32>
    %132 = arith.subf %130, %131 : vector<8x32xf32>
    %133 = arith.mulf %126, %84 : vector<8x32xf32>
    %134 = arith.mulf %125, %132 : vector<8x32xf32>
    %135 = arith.addf %133, %134 : vector<8x32xf32>
    %136 = math.tanh %135 : vector<8x32xf32>
    %137 = arith.mulf %127, %136 : vector<8x32xf32>
    %138 = arith.truncf %137 : vector<8x32xf32> to vector<8x32xbf16>
    %cst_44 = arith.constant dense<0.000000e+00> : vector<8x128xf32>
    %139 = tpu.matmul %138, %3, %cst_44 {dimension_numbers = #tpu.dot_dimension_numbers<[1], [0], [0], [1], [0, 0, 1, 1], [], []>} : vector<8x32xbf16>, vector<32x128xbf16>, vector<8x128xf32> -> vector<8x128xf32>
    %140 = vector.broadcast %6 : vector<1x128xf32> to vector<8x128xf32>
    %141 = arith.addf %139, %140 : vector<8x128xf32>
    %142 = arith.truncf %13 : vector<8x32xf32> to vector<8x32xbf16>
    %cst_45 = arith.constant dense<0.000000e+00> : vector<8x128xf32>
    %143 = tpu.matmul %142, %4, %cst_45 {dimension_numbers = #tpu.dot_dimension_numbers<[1], [0], [0], [1], [0, 0, 1, 1], [], []>} : vector<8x32xbf16>, vector<32x128xbf16>, vector<8x128xf32> -> vector<8x128xf32>
    %144 = arith.addf %90, %143 : vector<8x128xf32>
    %145 = arith.negf %144 : vector<8x128xf32>
    %146 = math.exp %145 : vector<8x128xf32>
    %cst_46 = arith.constant 1.000000e+00 : f32
    %147 = vector.broadcast %cst_46 : f32 to vector<8x128xf32>
    %148 = arith.addf %147, %146 : vector<8x128xf32>
    %149 = arith.divf %147, %148 : vector<8x128xf32>
    %150 = vector.extract_strided_slice %149 {offsets = [0, 0], sizes = [8, 32], strides = [1, 1]} : vector<8x128xf32> to vector<8x32xf32>
    %151 = vector.extract_strided_slice %149 {offsets = [0, 32], sizes = [8, 32], strides = [1, 1]} : vector<8x128xf32> to vector<8x32xf32>
    %152 = vector.extract_strided_slice %149 {offsets = [0, 64], sizes = [8, 32], strides = [1, 1]} : vector<8x128xf32> to vector<8x32xf32>
    %153 = vector.extract_strided_slice %149 {offsets = [0, 96], sizes = [8, 32], strides = [1, 1]} : vector<8x128xf32> to vector<8x32xf32>
    %cst_47 = arith.constant 2.000000e+00 : f32
    %154 = vector.broadcast %cst_47 : f32 to vector<8x32xf32>
    %155 = arith.mulf %154, %153 : vector<8x32xf32>
    %cst_48 = arith.constant 1.000000e+00 : f32
    %156 = vector.broadcast %cst_48 : f32 to vector<8x32xf32>
    %157 = arith.subf %155, %156 : vector<8x32xf32>
    %158 = arith.mulf %151, %13 : vector<8x32xf32>
    %159 = arith.mulf %150, %157 : vector<8x32xf32>
    %160 = arith.addf %158, %159 : vector<8x32xf32>
    %161 = math.tanh %160 : vector<8x32xf32>
    %162 = arith.mulf %152, %161 : vector<8x32xf32>
    %163 = vector.extract_strided_slice %12 {offsets = [24, 0], sizes = [8, 128], strides = [1, 1]} : vector<64x128xf32> to vector<8x128xf32>
    %164 = arith.truncf %112 : vector<8x32xf32> to vector<8x32xbf16>
    %cst_49 = arith.constant dense<0.000000e+00> : vector<8x128xf32>
    %165 = tpu.matmul %164, %0, %cst_49 {dimension_numbers = #tpu.dot_dimension_numbers<[1], [0], [0], [1], [0, 0, 1, 1], [], []>} : vector<8x32xbf16>, vector<32x128xbf16>, vector<8x128xf32> -> vector<8x128xf32>
    %166 = arith.addf %163, %165 : vector<8x128xf32>
    %167 = arith.negf %166 : vector<8x128xf32>
    %168 = math.exp %167 : vector<8x128xf32>
    %cst_50 = arith.constant 1.000000e+00 : f32
    %169 = vector.broadcast %cst_50 : f32 to vector<8x128xf32>
    %170 = arith.addf %169, %168 : vector<8x128xf32>
    %171 = arith.divf %169, %170 : vector<8x128xf32>
    %172 = vector.extract_strided_slice %171 {offsets = [0, 0], sizes = [8, 32], strides = [1, 1]} : vector<8x128xf32> to vector<8x32xf32>
    %173 = vector.extract_strided_slice %171 {offsets = [0, 32], sizes = [8, 32], strides = [1, 1]} : vector<8x128xf32> to vector<8x32xf32>
    %174 = vector.extract_strided_slice %171 {offsets = [0, 64], sizes = [8, 32], strides = [1, 1]} : vector<8x128xf32> to vector<8x32xf32>
    %175 = vector.extract_strided_slice %171 {offsets = [0, 96], sizes = [8, 32], strides = [1, 1]} : vector<8x128xf32> to vector<8x32xf32>
    %cst_51 = arith.constant 2.000000e+00 : f32
    %176 = vector.broadcast %cst_51 : f32 to vector<8x32xf32>
    %177 = arith.mulf %176, %175 : vector<8x32xf32>
    %cst_52 = arith.constant 1.000000e+00 : f32
    %178 = vector.broadcast %cst_52 : f32 to vector<8x32xf32>
    %179 = arith.subf %177, %178 : vector<8x32xf32>
    %180 = arith.mulf %173, %110 : vector<8x32xf32>
    %181 = arith.mulf %172, %179 : vector<8x32xf32>
    %182 = arith.addf %180, %181 : vector<8x32xf32>
    %183 = math.tanh %182 : vector<8x32xf32>
    %184 = arith.mulf %174, %183 : vector<8x32xf32>
    %185 = arith.truncf %184 : vector<8x32xf32> to vector<8x32xbf16>
    %cst_53 = arith.constant dense<0.000000e+00> : vector<8x128xf32>
    %186 = tpu.matmul %185, %1, %cst_53 {dimension_numbers = #tpu.dot_dimension_numbers<[1], [0], [0], [1], [0, 0, 1, 1], [], []>} : vector<8x32xbf16>, vector<32x128xbf16>, vector<8x128xf32> -> vector<8x128xf32>
    %187 = vector.broadcast %5 : vector<1x128xf32> to vector<8x128xf32>
    %188 = arith.addf %186, %187 : vector<8x128xf32>
    %189 = arith.truncf %137 : vector<8x32xf32> to vector<8x32xbf16>
    %cst_54 = arith.constant dense<0.000000e+00> : vector<8x128xf32>
    %190 = tpu.matmul %189, %2, %cst_54 {dimension_numbers = #tpu.dot_dimension_numbers<[1], [0], [0], [1], [0, 0, 1, 1], [], []>} : vector<8x32xbf16>, vector<32x128xbf16>, vector<8x128xf32> -> vector<8x128xf32>
    %191 = arith.addf %116, %190 : vector<8x128xf32>
    %192 = arith.negf %191 : vector<8x128xf32>
    %193 = math.exp %192 : vector<8x128xf32>
    %cst_55 = arith.constant 1.000000e+00 : f32
    %194 = vector.broadcast %cst_55 : f32 to vector<8x128xf32>
    %195 = arith.addf %194, %193 : vector<8x128xf32>
    %196 = arith.divf %194, %195 : vector<8x128xf32>
    %197 = vector.extract_strided_slice %196 {offsets = [0, 0], sizes = [8, 32], strides = [1, 1]} : vector<8x128xf32> to vector<8x32xf32>
    %198 = vector.extract_strided_slice %196 {offsets = [0, 32], sizes = [8, 32], strides = [1, 1]} : vector<8x128xf32> to vector<8x32xf32>
    %199 = vector.extract_strided_slice %196 {offsets = [0, 64], sizes = [8, 32], strides = [1, 1]} : vector<8x128xf32> to vector<8x32xf32>
    %200 = vector.extract_strided_slice %196 {offsets = [0, 96], sizes = [8, 32], strides = [1, 1]} : vector<8x128xf32> to vector<8x32xf32>
    %cst_56 = arith.constant 2.000000e+00 : f32
    %201 = vector.broadcast %cst_56 : f32 to vector<8x32xf32>
    %202 = arith.mulf %201, %200 : vector<8x32xf32>
    %cst_57 = arith.constant 1.000000e+00 : f32
    %203 = vector.broadcast %cst_57 : f32 to vector<8x32xf32>
    %204 = arith.subf %202, %203 : vector<8x32xf32>
    %205 = arith.mulf %198, %135 : vector<8x32xf32>
    %206 = arith.mulf %197, %204 : vector<8x32xf32>
    %207 = arith.addf %205, %206 : vector<8x32xf32>
    %208 = math.tanh %207 : vector<8x32xf32>
    %209 = arith.mulf %199, %208 : vector<8x32xf32>
    %210 = arith.truncf %209 : vector<8x32xf32> to vector<8x32xbf16>
    %cst_58 = arith.constant dense<0.000000e+00> : vector<8x128xf32>
    %211 = tpu.matmul %210, %3, %cst_58 {dimension_numbers = #tpu.dot_dimension_numbers<[1], [0], [0], [1], [0, 0, 1, 1], [], []>} : vector<8x32xbf16>, vector<32x128xbf16>, vector<8x128xf32> -> vector<8x128xf32>
    %212 = vector.broadcast %6 : vector<1x128xf32> to vector<8x128xf32>
    %213 = arith.addf %211, %212 : vector<8x128xf32>
    %214 = arith.truncf %162 : vector<8x32xf32> to vector<8x32xbf16>
    %cst_59 = arith.constant dense<0.000000e+00> : vector<8x128xf32>
    %215 = tpu.matmul %214, %4, %cst_59 {dimension_numbers = #tpu.dot_dimension_numbers<[1], [0], [0], [1], [0, 0, 1, 1], [], []>} : vector<8x32xbf16>, vector<32x128xbf16>, vector<8x128xf32> -> vector<8x128xf32>
    %216 = arith.addf %141, %215 : vector<8x128xf32>
    %217 = arith.negf %216 : vector<8x128xf32>
    %218 = math.exp %217 : vector<8x128xf32>
    %cst_60 = arith.constant 1.000000e+00 : f32
    %219 = vector.broadcast %cst_60 : f32 to vector<8x128xf32>
    %220 = arith.addf %219, %218 : vector<8x128xf32>
    %221 = arith.divf %219, %220 : vector<8x128xf32>
    %222 = vector.extract_strided_slice %221 {offsets = [0, 0], sizes = [8, 32], strides = [1, 1]} : vector<8x128xf32> to vector<8x32xf32>
    %223 = vector.extract_strided_slice %221 {offsets = [0, 32], sizes = [8, 32], strides = [1, 1]} : vector<8x128xf32> to vector<8x32xf32>
    %224 = vector.extract_strided_slice %221 {offsets = [0, 64], sizes = [8, 32], strides = [1, 1]} : vector<8x128xf32> to vector<8x32xf32>
    %225 = vector.extract_strided_slice %221 {offsets = [0, 96], sizes = [8, 32], strides = [1, 1]} : vector<8x128xf32> to vector<8x32xf32>
    %cst_61 = arith.constant 2.000000e+00 : f32
    %226 = vector.broadcast %cst_61 : f32 to vector<8x32xf32>
    %227 = arith.mulf %226, %225 : vector<8x32xf32>
    %cst_62 = arith.constant 1.000000e+00 : f32
    %228 = vector.broadcast %cst_62 : f32 to vector<8x32xf32>
    %229 = arith.subf %227, %228 : vector<8x32xf32>
    %230 = arith.mulf %223, %160 : vector<8x32xf32>
    %231 = arith.mulf %222, %229 : vector<8x32xf32>
    %232 = arith.addf %230, %231 : vector<8x32xf32>
    %233 = math.tanh %232 : vector<8x32xf32>
    %234 = arith.mulf %224, %233 : vector<8x32xf32>
    %235 = vector.extract_strided_slice %12 {offsets = [32, 0], sizes = [8, 128], strides = [1, 1]} : vector<64x128xf32> to vector<8x128xf32>
    %236 = arith.truncf %184 : vector<8x32xf32> to vector<8x32xbf16>
    %cst_63 = arith.constant dense<0.000000e+00> : vector<8x128xf32>
    %237 = tpu.matmul %236, %0, %cst_63 {dimension_numbers = #tpu.dot_dimension_numbers<[1], [0], [0], [1], [0, 0, 1, 1], [], []>} : vector<8x32xbf16>, vector<32x128xbf16>, vector<8x128xf32> -> vector<8x128xf32>
    %238 = arith.addf %235, %237 : vector<8x128xf32>
    %239 = arith.negf %238 : vector<8x128xf32>
    %240 = math.exp %239 : vector<8x128xf32>
    %cst_64 = arith.constant 1.000000e+00 : f32
    %241 = vector.broadcast %cst_64 : f32 to vector<8x128xf32>
    %242 = arith.addf %241, %240 : vector<8x128xf32>
    %243 = arith.divf %241, %242 : vector<8x128xf32>
    %244 = vector.extract_strided_slice %243 {offsets = [0, 0], sizes = [8, 32], strides = [1, 1]} : vector<8x128xf32> to vector<8x32xf32>
    %245 = vector.extract_strided_slice %243 {offsets = [0, 32], sizes = [8, 32], strides = [1, 1]} : vector<8x128xf32> to vector<8x32xf32>
    %246 = vector.extract_strided_slice %243 {offsets = [0, 64], sizes = [8, 32], strides = [1, 1]} : vector<8x128xf32> to vector<8x32xf32>
    %247 = vector.extract_strided_slice %243 {offsets = [0, 96], sizes = [8, 32], strides = [1, 1]} : vector<8x128xf32> to vector<8x32xf32>
    %cst_65 = arith.constant 2.000000e+00 : f32
    %248 = vector.broadcast %cst_65 : f32 to vector<8x32xf32>
    %249 = arith.mulf %248, %247 : vector<8x32xf32>
    %cst_66 = arith.constant 1.000000e+00 : f32
    %250 = vector.broadcast %cst_66 : f32 to vector<8x32xf32>
    %251 = arith.subf %249, %250 : vector<8x32xf32>
    %252 = arith.mulf %245, %182 : vector<8x32xf32>
    %253 = arith.mulf %244, %251 : vector<8x32xf32>
    %254 = arith.addf %252, %253 : vector<8x32xf32>
    %255 = math.tanh %254 : vector<8x32xf32>
    %256 = arith.mulf %246, %255 : vector<8x32xf32>
    %257 = arith.truncf %256 : vector<8x32xf32> to vector<8x32xbf16>
    %cst_67 = arith.constant dense<0.000000e+00> : vector<8x128xf32>
    %258 = tpu.matmul %257, %1, %cst_67 {dimension_numbers = #tpu.dot_dimension_numbers<[1], [0], [0], [1], [0, 0, 1, 1], [], []>} : vector<8x32xbf16>, vector<32x128xbf16>, vector<8x128xf32> -> vector<8x128xf32>
    %259 = vector.broadcast %5 : vector<1x128xf32> to vector<8x128xf32>
    %260 = arith.addf %258, %259 : vector<8x128xf32>
    %261 = arith.truncf %209 : vector<8x32xf32> to vector<8x32xbf16>
    %cst_68 = arith.constant dense<0.000000e+00> : vector<8x128xf32>
    %262 = tpu.matmul %261, %2, %cst_68 {dimension_numbers = #tpu.dot_dimension_numbers<[1], [0], [0], [1], [0, 0, 1, 1], [], []>} : vector<8x32xbf16>, vector<32x128xbf16>, vector<8x128xf32> -> vector<8x128xf32>
    %263 = arith.addf %188, %262 : vector<8x128xf32>
    %264 = arith.negf %263 : vector<8x128xf32>
    %265 = math.exp %264 : vector<8x128xf32>
    %cst_69 = arith.constant 1.000000e+00 : f32
    %266 = vector.broadcast %cst_69 : f32 to vector<8x128xf32>
    %267 = arith.addf %266, %265 : vector<8x128xf32>
    %268 = arith.divf %266, %267 : vector<8x128xf32>
    %269 = vector.extract_strided_slice %268 {offsets = [0, 0], sizes = [8, 32], strides = [1, 1]} : vector<8x128xf32> to vector<8x32xf32>
    %270 = vector.extract_strided_slice %268 {offsets = [0, 32], sizes = [8, 32], strides = [1, 1]} : vector<8x128xf32> to vector<8x32xf32>
    %271 = vector.extract_strided_slice %268 {offsets = [0, 64], sizes = [8, 32], strides = [1, 1]} : vector<8x128xf32> to vector<8x32xf32>
    %272 = vector.extract_strided_slice %268 {offsets = [0, 96], sizes = [8, 32], strides = [1, 1]} : vector<8x128xf32> to vector<8x32xf32>
    %cst_70 = arith.constant 2.000000e+00 : f32
    %273 = vector.broadcast %cst_70 : f32 to vector<8x32xf32>
    %274 = arith.mulf %273, %272 : vector<8x32xf32>
    %cst_71 = arith.constant 1.000000e+00 : f32
    %275 = vector.broadcast %cst_71 : f32 to vector<8x32xf32>
    %276 = arith.subf %274, %275 : vector<8x32xf32>
    %277 = arith.mulf %270, %207 : vector<8x32xf32>
    %278 = arith.mulf %269, %276 : vector<8x32xf32>
    %279 = arith.addf %277, %278 : vector<8x32xf32>
    %280 = math.tanh %279 : vector<8x32xf32>
    %281 = arith.mulf %271, %280 : vector<8x32xf32>
    %282 = arith.truncf %281 : vector<8x32xf32> to vector<8x32xbf16>
    %cst_72 = arith.constant dense<0.000000e+00> : vector<8x128xf32>
    %283 = tpu.matmul %282, %3, %cst_72 {dimension_numbers = #tpu.dot_dimension_numbers<[1], [0], [0], [1], [0, 0, 1, 1], [], []>} : vector<8x32xbf16>, vector<32x128xbf16>, vector<8x128xf32> -> vector<8x128xf32>
    %284 = vector.broadcast %6 : vector<1x128xf32> to vector<8x128xf32>
    %285 = arith.addf %283, %284 : vector<8x128xf32>
    %286 = arith.truncf %234 : vector<8x32xf32> to vector<8x32xbf16>
    %cst_73 = arith.constant dense<0.000000e+00> : vector<8x128xf32>
    %287 = tpu.matmul %286, %4, %cst_73 {dimension_numbers = #tpu.dot_dimension_numbers<[1], [0], [0], [1], [0, 0, 1, 1], [], []>} : vector<8x32xbf16>, vector<32x128xbf16>, vector<8x128xf32> -> vector<8x128xf32>
    %288 = arith.addf %213, %287 : vector<8x128xf32>
    %289 = arith.negf %288 : vector<8x128xf32>
    %290 = math.exp %289 : vector<8x128xf32>
    %cst_74 = arith.constant 1.000000e+00 : f32
    %291 = vector.broadcast %cst_74 : f32 to vector<8x128xf32>
    %292 = arith.addf %291, %290 : vector<8x128xf32>
    %293 = arith.divf %291, %292 : vector<8x128xf32>
    %294 = vector.extract_strided_slice %293 {offsets = [0, 0], sizes = [8, 32], strides = [1, 1]} : vector<8x128xf32> to vector<8x32xf32>
    %295 = vector.extract_strided_slice %293 {offsets = [0, 32], sizes = [8, 32], strides = [1, 1]} : vector<8x128xf32> to vector<8x32xf32>
    %296 = vector.extract_strided_slice %293 {offsets = [0, 64], sizes = [8, 32], strides = [1, 1]} : vector<8x128xf32> to vector<8x32xf32>
    %297 = vector.extract_strided_slice %293 {offsets = [0, 96], sizes = [8, 32], strides = [1, 1]} : vector<8x128xf32> to vector<8x32xf32>
    %cst_75 = arith.constant 2.000000e+00 : f32
    %298 = vector.broadcast %cst_75 : f32 to vector<8x32xf32>
    %299 = arith.mulf %298, %297 : vector<8x32xf32>
    %cst_76 = arith.constant 1.000000e+00 : f32
    %300 = vector.broadcast %cst_76 : f32 to vector<8x32xf32>
    %301 = arith.subf %299, %300 : vector<8x32xf32>
    %302 = arith.mulf %295, %232 : vector<8x32xf32>
    %303 = arith.mulf %294, %301 : vector<8x32xf32>
    %304 = arith.addf %302, %303 : vector<8x32xf32>
    %305 = math.tanh %304 : vector<8x32xf32>
    %306 = arith.mulf %296, %305 : vector<8x32xf32>
    %307 = vector.extract_strided_slice %12 {offsets = [40, 0], sizes = [8, 128], strides = [1, 1]} : vector<64x128xf32> to vector<8x128xf32>
    %308 = arith.truncf %256 : vector<8x32xf32> to vector<8x32xbf16>
    %cst_77 = arith.constant dense<0.000000e+00> : vector<8x128xf32>
    %309 = tpu.matmul %308, %0, %cst_77 {dimension_numbers = #tpu.dot_dimension_numbers<[1], [0], [0], [1], [0, 0, 1, 1], [], []>} : vector<8x32xbf16>, vector<32x128xbf16>, vector<8x128xf32> -> vector<8x128xf32>
    %310 = arith.addf %307, %309 : vector<8x128xf32>
    %311 = arith.negf %310 : vector<8x128xf32>
    %312 = math.exp %311 : vector<8x128xf32>
    %cst_78 = arith.constant 1.000000e+00 : f32
    %313 = vector.broadcast %cst_78 : f32 to vector<8x128xf32>
    %314 = arith.addf %313, %312 : vector<8x128xf32>
    %315 = arith.divf %313, %314 : vector<8x128xf32>
    %316 = vector.extract_strided_slice %315 {offsets = [0, 0], sizes = [8, 32], strides = [1, 1]} : vector<8x128xf32> to vector<8x32xf32>
    %317 = vector.extract_strided_slice %315 {offsets = [0, 32], sizes = [8, 32], strides = [1, 1]} : vector<8x128xf32> to vector<8x32xf32>
    %318 = vector.extract_strided_slice %315 {offsets = [0, 64], sizes = [8, 32], strides = [1, 1]} : vector<8x128xf32> to vector<8x32xf32>
    %319 = vector.extract_strided_slice %315 {offsets = [0, 96], sizes = [8, 32], strides = [1, 1]} : vector<8x128xf32> to vector<8x32xf32>
    %cst_79 = arith.constant 2.000000e+00 : f32
    %320 = vector.broadcast %cst_79 : f32 to vector<8x32xf32>
    %321 = arith.mulf %320, %319 : vector<8x32xf32>
    %cst_80 = arith.constant 1.000000e+00 : f32
    %322 = vector.broadcast %cst_80 : f32 to vector<8x32xf32>
    %323 = arith.subf %321, %322 : vector<8x32xf32>
    %324 = arith.mulf %317, %254 : vector<8x32xf32>
    %325 = arith.mulf %316, %323 : vector<8x32xf32>
    %326 = arith.addf %324, %325 : vector<8x32xf32>
    %327 = math.tanh %326 : vector<8x32xf32>
    %328 = arith.mulf %318, %327 : vector<8x32xf32>
    %329 = arith.truncf %328 : vector<8x32xf32> to vector<8x32xbf16>
    %cst_81 = arith.constant dense<0.000000e+00> : vector<8x128xf32>
    %330 = tpu.matmul %329, %1, %cst_81 {dimension_numbers = #tpu.dot_dimension_numbers<[1], [0], [0], [1], [0, 0, 1, 1], [], []>} : vector<8x32xbf16>, vector<32x128xbf16>, vector<8x128xf32> -> vector<8x128xf32>
    %331 = vector.broadcast %5 : vector<1x128xf32> to vector<8x128xf32>
    %332 = arith.addf %330, %331 : vector<8x128xf32>
    %333 = arith.truncf %281 : vector<8x32xf32> to vector<8x32xbf16>
    %cst_82 = arith.constant dense<0.000000e+00> : vector<8x128xf32>
    %334 = tpu.matmul %333, %2, %cst_82 {dimension_numbers = #tpu.dot_dimension_numbers<[1], [0], [0], [1], [0, 0, 1, 1], [], []>} : vector<8x32xbf16>, vector<32x128xbf16>, vector<8x128xf32> -> vector<8x128xf32>
    %335 = arith.addf %260, %334 : vector<8x128xf32>
    %336 = arith.negf %335 : vector<8x128xf32>
    %337 = math.exp %336 : vector<8x128xf32>
    %cst_83 = arith.constant 1.000000e+00 : f32
    %338 = vector.broadcast %cst_83 : f32 to vector<8x128xf32>
    %339 = arith.addf %338, %337 : vector<8x128xf32>
    %340 = arith.divf %338, %339 : vector<8x128xf32>
    %341 = vector.extract_strided_slice %340 {offsets = [0, 0], sizes = [8, 32], strides = [1, 1]} : vector<8x128xf32> to vector<8x32xf32>
    %342 = vector.extract_strided_slice %340 {offsets = [0, 32], sizes = [8, 32], strides = [1, 1]} : vector<8x128xf32> to vector<8x32xf32>
    %343 = vector.extract_strided_slice %340 {offsets = [0, 64], sizes = [8, 32], strides = [1, 1]} : vector<8x128xf32> to vector<8x32xf32>
    %344 = vector.extract_strided_slice %340 {offsets = [0, 96], sizes = [8, 32], strides = [1, 1]} : vector<8x128xf32> to vector<8x32xf32>
    %cst_84 = arith.constant 2.000000e+00 : f32
    %345 = vector.broadcast %cst_84 : f32 to vector<8x32xf32>
    %346 = arith.mulf %345, %344 : vector<8x32xf32>
    %cst_85 = arith.constant 1.000000e+00 : f32
    %347 = vector.broadcast %cst_85 : f32 to vector<8x32xf32>
    %348 = arith.subf %346, %347 : vector<8x32xf32>
    %349 = arith.mulf %342, %279 : vector<8x32xf32>
    %350 = arith.mulf %341, %348 : vector<8x32xf32>
    %351 = arith.addf %349, %350 : vector<8x32xf32>
    %352 = math.tanh %351 : vector<8x32xf32>
    %353 = arith.mulf %343, %352 : vector<8x32xf32>
    %354 = arith.truncf %353 : vector<8x32xf32> to vector<8x32xbf16>
    %cst_86 = arith.constant dense<0.000000e+00> : vector<8x128xf32>
    %355 = tpu.matmul %354, %3, %cst_86 {dimension_numbers = #tpu.dot_dimension_numbers<[1], [0], [0], [1], [0, 0, 1, 1], [], []>} : vector<8x32xbf16>, vector<32x128xbf16>, vector<8x128xf32> -> vector<8x128xf32>
    %356 = vector.broadcast %6 : vector<1x128xf32> to vector<8x128xf32>
    %357 = arith.addf %355, %356 : vector<8x128xf32>
    %358 = arith.truncf %306 : vector<8x32xf32> to vector<8x32xbf16>
    %cst_87 = arith.constant dense<0.000000e+00> : vector<8x128xf32>
    %359 = tpu.matmul %358, %4, %cst_87 {dimension_numbers = #tpu.dot_dimension_numbers<[1], [0], [0], [1], [0, 0, 1, 1], [], []>} : vector<8x32xbf16>, vector<32x128xbf16>, vector<8x128xf32> -> vector<8x128xf32>
    %360 = arith.addf %285, %359 : vector<8x128xf32>
    %361 = arith.negf %360 : vector<8x128xf32>
    %362 = math.exp %361 : vector<8x128xf32>
    %cst_88 = arith.constant 1.000000e+00 : f32
    %363 = vector.broadcast %cst_88 : f32 to vector<8x128xf32>
    %364 = arith.addf %363, %362 : vector<8x128xf32>
    %365 = arith.divf %363, %364 : vector<8x128xf32>
    %366 = vector.extract_strided_slice %365 {offsets = [0, 0], sizes = [8, 32], strides = [1, 1]} : vector<8x128xf32> to vector<8x32xf32>
    %367 = vector.extract_strided_slice %365 {offsets = [0, 32], sizes = [8, 32], strides = [1, 1]} : vector<8x128xf32> to vector<8x32xf32>
    %368 = vector.extract_strided_slice %365 {offsets = [0, 64], sizes = [8, 32], strides = [1, 1]} : vector<8x128xf32> to vector<8x32xf32>
    %369 = vector.extract_strided_slice %365 {offsets = [0, 96], sizes = [8, 32], strides = [1, 1]} : vector<8x128xf32> to vector<8x32xf32>
    %cst_89 = arith.constant 2.000000e+00 : f32
    %370 = vector.broadcast %cst_89 : f32 to vector<8x32xf32>
    %371 = arith.mulf %370, %369 : vector<8x32xf32>
    %cst_90 = arith.constant 1.000000e+00 : f32
    %372 = vector.broadcast %cst_90 : f32 to vector<8x32xf32>
    %373 = arith.subf %371, %372 : vector<8x32xf32>
    %374 = arith.mulf %367, %304 : vector<8x32xf32>
    %375 = arith.mulf %366, %373 : vector<8x32xf32>
    %376 = arith.addf %374, %375 : vector<8x32xf32>
    %377 = math.tanh %376 : vector<8x32xf32>
    %378 = arith.mulf %368, %377 : vector<8x32xf32>
    %379 = vector.extract_strided_slice %12 {offsets = [48, 0], sizes = [8, 128], strides = [1, 1]} : vector<64x128xf32> to vector<8x128xf32>
    %380 = arith.truncf %328 : vector<8x32xf32> to vector<8x32xbf16>
    %cst_91 = arith.constant dense<0.000000e+00> : vector<8x128xf32>
    %381 = tpu.matmul %380, %0, %cst_91 {dimension_numbers = #tpu.dot_dimension_numbers<[1], [0], [0], [1], [0, 0, 1, 1], [], []>} : vector<8x32xbf16>, vector<32x128xbf16>, vector<8x128xf32> -> vector<8x128xf32>
    %382 = arith.addf %379, %381 : vector<8x128xf32>
    %383 = arith.negf %382 : vector<8x128xf32>
    %384 = math.exp %383 : vector<8x128xf32>
    %cst_92 = arith.constant 1.000000e+00 : f32
    %385 = vector.broadcast %cst_92 : f32 to vector<8x128xf32>
    %386 = arith.addf %385, %384 : vector<8x128xf32>
    %387 = arith.divf %385, %386 : vector<8x128xf32>
    %388 = vector.extract_strided_slice %387 {offsets = [0, 0], sizes = [8, 32], strides = [1, 1]} : vector<8x128xf32> to vector<8x32xf32>
    %389 = vector.extract_strided_slice %387 {offsets = [0, 32], sizes = [8, 32], strides = [1, 1]} : vector<8x128xf32> to vector<8x32xf32>
    %390 = vector.extract_strided_slice %387 {offsets = [0, 64], sizes = [8, 32], strides = [1, 1]} : vector<8x128xf32> to vector<8x32xf32>
    %391 = vector.extract_strided_slice %387 {offsets = [0, 96], sizes = [8, 32], strides = [1, 1]} : vector<8x128xf32> to vector<8x32xf32>
    %cst_93 = arith.constant 2.000000e+00 : f32
    %392 = vector.broadcast %cst_93 : f32 to vector<8x32xf32>
    %393 = arith.mulf %392, %391 : vector<8x32xf32>
    %cst_94 = arith.constant 1.000000e+00 : f32
    %394 = vector.broadcast %cst_94 : f32 to vector<8x32xf32>
    %395 = arith.subf %393, %394 : vector<8x32xf32>
    %396 = arith.mulf %389, %326 : vector<8x32xf32>
    %397 = arith.mulf %388, %395 : vector<8x32xf32>
    %398 = arith.addf %396, %397 : vector<8x32xf32>
    %399 = math.tanh %398 : vector<8x32xf32>
    %400 = arith.mulf %390, %399 : vector<8x32xf32>
    %401 = arith.truncf %400 : vector<8x32xf32> to vector<8x32xbf16>
    %cst_95 = arith.constant dense<0.000000e+00> : vector<8x128xf32>
    %402 = tpu.matmul %401, %1, %cst_95 {dimension_numbers = #tpu.dot_dimension_numbers<[1], [0], [0], [1], [0, 0, 1, 1], [], []>} : vector<8x32xbf16>, vector<32x128xbf16>, vector<8x128xf32> -> vector<8x128xf32>
    %403 = vector.broadcast %5 : vector<1x128xf32> to vector<8x128xf32>
    %404 = arith.addf %402, %403 : vector<8x128xf32>
    %405 = arith.truncf %353 : vector<8x32xf32> to vector<8x32xbf16>
    %cst_96 = arith.constant dense<0.000000e+00> : vector<8x128xf32>
    %406 = tpu.matmul %405, %2, %cst_96 {dimension_numbers = #tpu.dot_dimension_numbers<[1], [0], [0], [1], [0, 0, 1, 1], [], []>} : vector<8x32xbf16>, vector<32x128xbf16>, vector<8x128xf32> -> vector<8x128xf32>
    %407 = arith.addf %332, %406 : vector<8x128xf32>
    %408 = arith.negf %407 : vector<8x128xf32>
    %409 = math.exp %408 : vector<8x128xf32>
    %cst_97 = arith.constant 1.000000e+00 : f32
    %410 = vector.broadcast %cst_97 : f32 to vector<8x128xf32>
    %411 = arith.addf %410, %409 : vector<8x128xf32>
    %412 = arith.divf %410, %411 : vector<8x128xf32>
    %413 = vector.extract_strided_slice %412 {offsets = [0, 0], sizes = [8, 32], strides = [1, 1]} : vector<8x128xf32> to vector<8x32xf32>
    %414 = vector.extract_strided_slice %412 {offsets = [0, 32], sizes = [8, 32], strides = [1, 1]} : vector<8x128xf32> to vector<8x32xf32>
    %415 = vector.extract_strided_slice %412 {offsets = [0, 64], sizes = [8, 32], strides = [1, 1]} : vector<8x128xf32> to vector<8x32xf32>
    %416 = vector.extract_strided_slice %412 {offsets = [0, 96], sizes = [8, 32], strides = [1, 1]} : vector<8x128xf32> to vector<8x32xf32>
    %cst_98 = arith.constant 2.000000e+00 : f32
    %417 = vector.broadcast %cst_98 : f32 to vector<8x32xf32>
    %418 = arith.mulf %417, %416 : vector<8x32xf32>
    %cst_99 = arith.constant 1.000000e+00 : f32
    %419 = vector.broadcast %cst_99 : f32 to vector<8x32xf32>
    %420 = arith.subf %418, %419 : vector<8x32xf32>
    %421 = arith.mulf %414, %351 : vector<8x32xf32>
    %422 = arith.mulf %413, %420 : vector<8x32xf32>
    %423 = arith.addf %421, %422 : vector<8x32xf32>
    %424 = math.tanh %423 : vector<8x32xf32>
    %425 = arith.mulf %415, %424 : vector<8x32xf32>
    %426 = arith.truncf %425 : vector<8x32xf32> to vector<8x32xbf16>
    %cst_100 = arith.constant dense<0.000000e+00> : vector<8x128xf32>
    %427 = tpu.matmul %426, %3, %cst_100 {dimension_numbers = #tpu.dot_dimension_numbers<[1], [0], [0], [1], [0, 0, 1, 1], [], []>} : vector<8x32xbf16>, vector<32x128xbf16>, vector<8x128xf32> -> vector<8x128xf32>
    %428 = vector.broadcast %6 : vector<1x128xf32> to vector<8x128xf32>
    %429 = arith.addf %427, %428 : vector<8x128xf32>
    %430 = arith.truncf %378 : vector<8x32xf32> to vector<8x32xbf16>
    %cst_101 = arith.constant dense<0.000000e+00> : vector<8x128xf32>
    %431 = tpu.matmul %430, %4, %cst_101 {dimension_numbers = #tpu.dot_dimension_numbers<[1], [0], [0], [1], [0, 0, 1, 1], [], []>} : vector<8x32xbf16>, vector<32x128xbf16>, vector<8x128xf32> -> vector<8x128xf32>
    %432 = arith.addf %357, %431 : vector<8x128xf32>
    %433 = arith.negf %432 : vector<8x128xf32>
    %434 = math.exp %433 : vector<8x128xf32>
    %cst_102 = arith.constant 1.000000e+00 : f32
    %435 = vector.broadcast %cst_102 : f32 to vector<8x128xf32>
    %436 = arith.addf %435, %434 : vector<8x128xf32>
    %437 = arith.divf %435, %436 : vector<8x128xf32>
    %438 = vector.extract_strided_slice %437 {offsets = [0, 0], sizes = [8, 32], strides = [1, 1]} : vector<8x128xf32> to vector<8x32xf32>
    %439 = vector.extract_strided_slice %437 {offsets = [0, 32], sizes = [8, 32], strides = [1, 1]} : vector<8x128xf32> to vector<8x32xf32>
    %440 = vector.extract_strided_slice %437 {offsets = [0, 64], sizes = [8, 32], strides = [1, 1]} : vector<8x128xf32> to vector<8x32xf32>
    %441 = vector.extract_strided_slice %437 {offsets = [0, 96], sizes = [8, 32], strides = [1, 1]} : vector<8x128xf32> to vector<8x32xf32>
    %cst_103 = arith.constant 2.000000e+00 : f32
    %442 = vector.broadcast %cst_103 : f32 to vector<8x32xf32>
    %443 = arith.mulf %442, %441 : vector<8x32xf32>
    %cst_104 = arith.constant 1.000000e+00 : f32
    %444 = vector.broadcast %cst_104 : f32 to vector<8x32xf32>
    %445 = arith.subf %443, %444 : vector<8x32xf32>
    %446 = arith.mulf %439, %376 : vector<8x32xf32>
    %447 = arith.mulf %438, %445 : vector<8x32xf32>
    %448 = arith.addf %446, %447 : vector<8x32xf32>
    %449 = math.tanh %448 : vector<8x32xf32>
    %450 = arith.mulf %440, %449 : vector<8x32xf32>
    %451 = vector.extract_strided_slice %12 {offsets = [56, 0], sizes = [8, 128], strides = [1, 1]} : vector<64x128xf32> to vector<8x128xf32>
    %452 = arith.truncf %400 : vector<8x32xf32> to vector<8x32xbf16>
    %cst_105 = arith.constant dense<0.000000e+00> : vector<8x128xf32>
    %453 = tpu.matmul %452, %0, %cst_105 {dimension_numbers = #tpu.dot_dimension_numbers<[1], [0], [0], [1], [0, 0, 1, 1], [], []>} : vector<8x32xbf16>, vector<32x128xbf16>, vector<8x128xf32> -> vector<8x128xf32>
    %454 = arith.addf %451, %453 : vector<8x128xf32>
    %455 = arith.negf %454 : vector<8x128xf32>
    %456 = math.exp %455 : vector<8x128xf32>
    %cst_106 = arith.constant 1.000000e+00 : f32
    %457 = vector.broadcast %cst_106 : f32 to vector<8x128xf32>
    %458 = arith.addf %457, %456 : vector<8x128xf32>
    %459 = arith.divf %457, %458 : vector<8x128xf32>
    %460 = vector.extract_strided_slice %459 {offsets = [0, 0], sizes = [8, 32], strides = [1, 1]} : vector<8x128xf32> to vector<8x32xf32>
    %461 = vector.extract_strided_slice %459 {offsets = [0, 32], sizes = [8, 32], strides = [1, 1]} : vector<8x128xf32> to vector<8x32xf32>
    %462 = vector.extract_strided_slice %459 {offsets = [0, 64], sizes = [8, 32], strides = [1, 1]} : vector<8x128xf32> to vector<8x32xf32>
    %463 = vector.extract_strided_slice %459 {offsets = [0, 96], sizes = [8, 32], strides = [1, 1]} : vector<8x128xf32> to vector<8x32xf32>
    %cst_107 = arith.constant 2.000000e+00 : f32
    %464 = vector.broadcast %cst_107 : f32 to vector<8x32xf32>
    %465 = arith.mulf %464, %463 : vector<8x32xf32>
    %cst_108 = arith.constant 1.000000e+00 : f32
    %466 = vector.broadcast %cst_108 : f32 to vector<8x32xf32>
    %467 = arith.subf %465, %466 : vector<8x32xf32>
    %468 = arith.mulf %461, %398 : vector<8x32xf32>
    %469 = arith.mulf %460, %467 : vector<8x32xf32>
    %470 = arith.addf %468, %469 : vector<8x32xf32>
    %471 = math.tanh %470 : vector<8x32xf32>
    %472 = arith.mulf %462, %471 : vector<8x32xf32>
    %473 = arith.truncf %472 : vector<8x32xf32> to vector<8x32xbf16>
    %cst_109 = arith.constant dense<0.000000e+00> : vector<8x128xf32>
    %474 = tpu.matmul %473, %1, %cst_109 {dimension_numbers = #tpu.dot_dimension_numbers<[1], [0], [0], [1], [0, 0, 1, 1], [], []>} : vector<8x32xbf16>, vector<32x128xbf16>, vector<8x128xf32> -> vector<8x128xf32>
    %475 = vector.broadcast %5 : vector<1x128xf32> to vector<8x128xf32>
    %476 = arith.addf %474, %475 : vector<8x128xf32>
    %477 = arith.truncf %425 : vector<8x32xf32> to vector<8x32xbf16>
    %cst_110 = arith.constant dense<0.000000e+00> : vector<8x128xf32>
    %478 = tpu.matmul %477, %2, %cst_110 {dimension_numbers = #tpu.dot_dimension_numbers<[1], [0], [0], [1], [0, 0, 1, 1], [], []>} : vector<8x32xbf16>, vector<32x128xbf16>, vector<8x128xf32> -> vector<8x128xf32>
    %479 = arith.addf %404, %478 : vector<8x128xf32>
    %480 = arith.negf %479 : vector<8x128xf32>
    %481 = math.exp %480 : vector<8x128xf32>
    %cst_111 = arith.constant 1.000000e+00 : f32
    %482 = vector.broadcast %cst_111 : f32 to vector<8x128xf32>
    %483 = arith.addf %482, %481 : vector<8x128xf32>
    %484 = arith.divf %482, %483 : vector<8x128xf32>
    %485 = vector.extract_strided_slice %484 {offsets = [0, 0], sizes = [8, 32], strides = [1, 1]} : vector<8x128xf32> to vector<8x32xf32>
    %486 = vector.extract_strided_slice %484 {offsets = [0, 32], sizes = [8, 32], strides = [1, 1]} : vector<8x128xf32> to vector<8x32xf32>
    %487 = vector.extract_strided_slice %484 {offsets = [0, 64], sizes = [8, 32], strides = [1, 1]} : vector<8x128xf32> to vector<8x32xf32>
    %488 = vector.extract_strided_slice %484 {offsets = [0, 96], sizes = [8, 32], strides = [1, 1]} : vector<8x128xf32> to vector<8x32xf32>
    %cst_112 = arith.constant 2.000000e+00 : f32
    %489 = vector.broadcast %cst_112 : f32 to vector<8x32xf32>
    %490 = arith.mulf %489, %488 : vector<8x32xf32>
    %cst_113 = arith.constant 1.000000e+00 : f32
    %491 = vector.broadcast %cst_113 : f32 to vector<8x32xf32>
    %492 = arith.subf %490, %491 : vector<8x32xf32>
    %493 = arith.mulf %486, %423 : vector<8x32xf32>
    %494 = arith.mulf %485, %492 : vector<8x32xf32>
    %495 = arith.addf %493, %494 : vector<8x32xf32>
    %496 = math.tanh %495 : vector<8x32xf32>
    %497 = arith.mulf %487, %496 : vector<8x32xf32>
    %498 = arith.truncf %497 : vector<8x32xf32> to vector<8x32xbf16>
    %cst_114 = arith.constant dense<0.000000e+00> : vector<8x128xf32>
    %499 = tpu.matmul %498, %3, %cst_114 {dimension_numbers = #tpu.dot_dimension_numbers<[1], [0], [0], [1], [0, 0, 1, 1], [], []>} : vector<8x32xbf16>, vector<32x128xbf16>, vector<8x128xf32> -> vector<8x128xf32>
    %500 = vector.broadcast %6 : vector<1x128xf32> to vector<8x128xf32>
    %501 = arith.addf %499, %500 : vector<8x128xf32>
    %502 = arith.truncf %450 : vector<8x32xf32> to vector<8x32xbf16>
    %cst_115 = arith.constant dense<0.000000e+00> : vector<8x128xf32>
    %503 = tpu.matmul %502, %4, %cst_115 {dimension_numbers = #tpu.dot_dimension_numbers<[1], [0], [0], [1], [0, 0, 1, 1], [], []>} : vector<8x32xbf16>, vector<32x128xbf16>, vector<8x128xf32> -> vector<8x128xf32>
    %504 = arith.addf %429, %503 : vector<8x128xf32>
    %505 = arith.negf %504 : vector<8x128xf32>
    %506 = math.exp %505 : vector<8x128xf32>
    %cst_116 = arith.constant 1.000000e+00 : f32
    %507 = vector.broadcast %cst_116 : f32 to vector<8x128xf32>
    %508 = arith.addf %507, %506 : vector<8x128xf32>
    %509 = arith.divf %507, %508 : vector<8x128xf32>
    %510 = vector.extract_strided_slice %509 {offsets = [0, 0], sizes = [8, 32], strides = [1, 1]} : vector<8x128xf32> to vector<8x32xf32>
    %511 = vector.extract_strided_slice %509 {offsets = [0, 32], sizes = [8, 32], strides = [1, 1]} : vector<8x128xf32> to vector<8x32xf32>
    %512 = vector.extract_strided_slice %509 {offsets = [0, 64], sizes = [8, 32], strides = [1, 1]} : vector<8x128xf32> to vector<8x32xf32>
    %513 = vector.extract_strided_slice %509 {offsets = [0, 96], sizes = [8, 32], strides = [1, 1]} : vector<8x128xf32> to vector<8x32xf32>
    %cst_117 = arith.constant 2.000000e+00 : f32
    %514 = vector.broadcast %cst_117 : f32 to vector<8x32xf32>
    %515 = arith.mulf %514, %513 : vector<8x32xf32>
    %cst_118 = arith.constant 1.000000e+00 : f32
    %516 = vector.broadcast %cst_118 : f32 to vector<8x32xf32>
    %517 = arith.subf %515, %516 : vector<8x32xf32>
    %518 = arith.mulf %511, %448 : vector<8x32xf32>
    %519 = arith.mulf %510, %517 : vector<8x32xf32>
    %520 = arith.addf %518, %519 : vector<8x32xf32>
    %521 = math.tanh %520 : vector<8x32xf32>
    %522 = arith.mulf %512, %521 : vector<8x32xf32>
    %523 = arith.truncf %497 : vector<8x32xf32> to vector<8x32xbf16>
    %cst_119 = arith.constant dense<0.000000e+00> : vector<8x128xf32>
    %524 = tpu.matmul %523, %2, %cst_119 {dimension_numbers = #tpu.dot_dimension_numbers<[1], [0], [0], [1], [0, 0, 1, 1], [], []>} : vector<8x32xbf16>, vector<32x128xbf16>, vector<8x128xf32> -> vector<8x128xf32>
    %525 = arith.addf %476, %524 : vector<8x128xf32>
    %526 = arith.negf %525 : vector<8x128xf32>
    %527 = math.exp %526 : vector<8x128xf32>
    %cst_120 = arith.constant 1.000000e+00 : f32
    %528 = vector.broadcast %cst_120 : f32 to vector<8x128xf32>
    %529 = arith.addf %528, %527 : vector<8x128xf32>
    %530 = arith.divf %528, %529 : vector<8x128xf32>
    %531 = vector.extract_strided_slice %530 {offsets = [0, 0], sizes = [8, 32], strides = [1, 1]} : vector<8x128xf32> to vector<8x32xf32>
    %532 = vector.extract_strided_slice %530 {offsets = [0, 32], sizes = [8, 32], strides = [1, 1]} : vector<8x128xf32> to vector<8x32xf32>
    %533 = vector.extract_strided_slice %530 {offsets = [0, 64], sizes = [8, 32], strides = [1, 1]} : vector<8x128xf32> to vector<8x32xf32>
    %534 = vector.extract_strided_slice %530 {offsets = [0, 96], sizes = [8, 32], strides = [1, 1]} : vector<8x128xf32> to vector<8x32xf32>
    %cst_121 = arith.constant 2.000000e+00 : f32
    %535 = vector.broadcast %cst_121 : f32 to vector<8x32xf32>
    %536 = arith.mulf %535, %534 : vector<8x32xf32>
    %cst_122 = arith.constant 1.000000e+00 : f32
    %537 = vector.broadcast %cst_122 : f32 to vector<8x32xf32>
    %538 = arith.subf %536, %537 : vector<8x32xf32>
    %539 = arith.mulf %532, %495 : vector<8x32xf32>
    %540 = arith.mulf %531, %538 : vector<8x32xf32>
    %541 = arith.addf %539, %540 : vector<8x32xf32>
    %542 = math.tanh %541 : vector<8x32xf32>
    %543 = arith.mulf %533, %542 : vector<8x32xf32>
    %544 = arith.truncf %543 : vector<8x32xf32> to vector<8x32xbf16>
    %cst_123 = arith.constant dense<0.000000e+00> : vector<8x128xf32>
    %545 = tpu.matmul %544, %3, %cst_123 {dimension_numbers = #tpu.dot_dimension_numbers<[1], [0], [0], [1], [0, 0, 1, 1], [], []>} : vector<8x32xbf16>, vector<32x128xbf16>, vector<8x128xf32> -> vector<8x128xf32>
    %546 = vector.broadcast %6 : vector<1x128xf32> to vector<8x128xf32>
    %547 = arith.addf %545, %546 : vector<8x128xf32>
    %548 = arith.truncf %522 : vector<8x32xf32> to vector<8x32xbf16>
    %cst_124 = arith.constant dense<0.000000e+00> : vector<8x128xf32>
    %549 = tpu.matmul %548, %4, %cst_124 {dimension_numbers = #tpu.dot_dimension_numbers<[1], [0], [0], [1], [0, 0, 1, 1], [], []>} : vector<8x32xbf16>, vector<32x128xbf16>, vector<8x128xf32> -> vector<8x128xf32>
    %550 = arith.addf %501, %549 : vector<8x128xf32>
    %551 = arith.negf %550 : vector<8x128xf32>
    %552 = math.exp %551 : vector<8x128xf32>
    %cst_125 = arith.constant 1.000000e+00 : f32
    %553 = vector.broadcast %cst_125 : f32 to vector<8x128xf32>
    %554 = arith.addf %553, %552 : vector<8x128xf32>
    %555 = arith.divf %553, %554 : vector<8x128xf32>
    %556 = vector.extract_strided_slice %555 {offsets = [0, 0], sizes = [8, 32], strides = [1, 1]} : vector<8x128xf32> to vector<8x32xf32>
    %557 = vector.extract_strided_slice %555 {offsets = [0, 32], sizes = [8, 32], strides = [1, 1]} : vector<8x128xf32> to vector<8x32xf32>
    %558 = vector.extract_strided_slice %555 {offsets = [0, 64], sizes = [8, 32], strides = [1, 1]} : vector<8x128xf32> to vector<8x32xf32>
    %559 = vector.extract_strided_slice %555 {offsets = [0, 96], sizes = [8, 32], strides = [1, 1]} : vector<8x128xf32> to vector<8x32xf32>
    %cst_126 = arith.constant 2.000000e+00 : f32
    %560 = vector.broadcast %cst_126 : f32 to vector<8x32xf32>
    %561 = arith.mulf %560, %559 : vector<8x32xf32>
    %cst_127 = arith.constant 1.000000e+00 : f32
    %562 = vector.broadcast %cst_127 : f32 to vector<8x32xf32>
    %563 = arith.subf %561, %562 : vector<8x32xf32>
    %564 = arith.mulf %557, %520 : vector<8x32xf32>
    %565 = arith.mulf %556, %563 : vector<8x32xf32>
    %566 = arith.addf %564, %565 : vector<8x32xf32>
    %567 = math.tanh %566 : vector<8x32xf32>
    %568 = arith.mulf %558, %567 : vector<8x32xf32>
    %569 = arith.truncf %568 : vector<8x32xf32> to vector<8x32xbf16>
    %cst_128 = arith.constant dense<0.000000e+00> : vector<8x128xf32>
    %570 = tpu.matmul %569, %4, %cst_128 {dimension_numbers = #tpu.dot_dimension_numbers<[1], [0], [0], [1], [0, 0, 1, 1], [], []>} : vector<8x32xbf16>, vector<32x128xbf16>, vector<8x128xf32> -> vector<8x128xf32>
    %571 = arith.addf %547, %570 : vector<8x128xf32>
    %572 = arith.negf %571 : vector<8x128xf32>
    %573 = math.exp %572 : vector<8x128xf32>
    %cst_129 = arith.constant 1.000000e+00 : f32
    %574 = vector.broadcast %cst_129 : f32 to vector<8x128xf32>
    %575 = arith.addf %574, %573 : vector<8x128xf32>
    %576 = arith.divf %574, %575 : vector<8x128xf32>
    %577 = vector.extract_strided_slice %576 {offsets = [0, 0], sizes = [8, 32], strides = [1, 1]} : vector<8x128xf32> to vector<8x32xf32>
    %578 = vector.extract_strided_slice %576 {offsets = [0, 32], sizes = [8, 32], strides = [1, 1]} : vector<8x128xf32> to vector<8x32xf32>
    %579 = vector.extract_strided_slice %576 {offsets = [0, 64], sizes = [8, 32], strides = [1, 1]} : vector<8x128xf32> to vector<8x32xf32>
    %580 = vector.extract_strided_slice %576 {offsets = [0, 96], sizes = [8, 32], strides = [1, 1]} : vector<8x128xf32> to vector<8x32xf32>
    %cst_130 = arith.constant 2.000000e+00 : f32
    %581 = vector.broadcast %cst_130 : f32 to vector<8x32xf32>
    %582 = arith.mulf %581, %580 : vector<8x32xf32>
    %cst_131 = arith.constant 1.000000e+00 : f32
    %583 = vector.broadcast %cst_131 : f32 to vector<8x32xf32>
    %584 = arith.subf %582, %583 : vector<8x32xf32>
    %585 = arith.mulf %578, %566 : vector<8x32xf32>
    %586 = arith.mulf %577, %584 : vector<8x32xf32>
    %587 = arith.addf %585, %586 : vector<8x32xf32>
    %588 = math.tanh %587 : vector<8x32xf32>
    %589 = arith.mulf %579, %588 : vector<8x32xf32>
    %c0_132 = arith.constant 0 : index
    %c0_133 = arith.constant 0 : index
    %590 = vector.load %arg10[%c0_132, %c0_133] : memref<1x32xf32, #tpu.memory_space<vmem>>, vector<1x32xf32>
    %591 = vector.broadcast %590 : vector<1x32xf32> to vector<8x32xf32>
    %592 = arith.mulf %589, %591 : vector<8x32xf32>
    %cst_134 = arith.constant dense<0.000000e+00> : vector<8xf32>
    %593 = vector.multi_reduction <add>, %592, %cst_134 [1] : vector<8x32xf32> to vector<8xf32>
    %594 = vector.shape_cast %593 : vector<8xf32> to vector<8x1xf32>
    %c0_135 = arith.constant 0 : index
    %c0_136 = arith.constant 0 : index
    %595 = vector.load %arg11[%c0_135, %c0_136] : memref<1x1xf32, #tpu.memory_space<vmem>>, vector<1x1xf32>
    %596 = vector.broadcast %595 : vector<1x1xf32> to vector<8x1xf32>
    %597 = arith.addf %594, %596 : vector<8x1xf32>
    %c0_137 = arith.constant 0 : index
    %c0_138 = arith.constant 0 : index
    %598 = vector.load %arg12[%c0_137, %c0_138] : memref<8x1xf32, #tpu.memory_space<vmem>>, vector<8x1xf32>
    tpu.vector_store %arg12[%c0_137, %c0_138], %597 {strides = array<i32>} : memref<8x1xf32, #tpu.memory_space<vmem>>, vector<8x1xf32>,
    return
  }
}

</mosaic_0001>

<llo_original>
// kernel: tpu_custom_call.1
$region0: #{tpu_custom_call.1}
  #allocation0 [shape = 'u32[]', space=smem, size = 0x4, offset = 0x4, fixed_abs, tag = 'smem constant byte address 0x4 - core index']
  #allocation1 [shape = 'u32[144,128]{1,0:T(1,128)}', space=vmem, size = 0x12000, scoped, tag = 'internal scratch']
  #allocation2 [shape = 'f32[1,1]{1,0:T(1,128)S(1)}', space=vmem, size = 0x200, scoped, tag = 'scoped memory for tpu_custom_call.1']
  %s0 = inlined_call_operand.vmem [shape: bf16[64,4], index: 0, kind: input, shape index: {}]
  %s1 = inlined_call_operand.hbm [shape: bf16[4,128], index: 1, kind: input, shape index: {}]
  %s2 = inlined_call_operand.vmem [shape: bf16[32,128], index: 2, kind: input, shape index: {}]
  %s3 = inlined_call_operand.hbm [shape: f32[1,128], index: 3, kind: input, shape index: {}]
  %s4 = inlined_call_operand.vmem [shape: bf16[32,128], index: 4, kind: input, shape index: {}]
  %s5 = inlined_call_operand.vmem [shape: bf16[32,128], index: 5, kind: input, shape index: {}]
  %s6 = inlined_call_operand.hbm [shape: f32[1,128], index: 6, kind: input, shape index: {}]
  %s7 = inlined_call_operand.vmem [shape: bf16[32,128], index: 7, kind: input, shape index: {}]
  %s8 = inlined_call_operand.hbm [shape: bf16[32,128], index: 8, kind: input, shape index: {}]
  %s9 = inlined_call_operand.vmem [shape: f32[1,128], index: 9, kind: input, shape index: {}]
  %s10 = inlined_call_operand.vmem [shape: f32[1,32], index: 10, kind: input, shape index: {}]
  %s11 = inlined_call_operand.<no memory space> [shape: f32[1,1], index: 11, kind: input, shape index: {}]
  %s12 = inlined_call_operand.vmem [shape: f32[8,1], index: 12, kind: output, shape index: {}]
  %s13 = sld [smem:[#allocation0]]
  $region74: #{tpu_custom_call.1} parent=0
    _
  %s15 = ssub.s32 1, %s13
  %s16 = scalar_select 0, %s15, %s13
  %v17 = vstv %s11
  %18 = vst [vmem:[#allocation2] sm:$0x1] %v17
  $region1: #{tpu_custom_call.1} parent=0
    #allocation3 [shape = 'u8[1024]{0}', space=vmem, size = 0x400, scoped, tag = 'input window, operand 1, single buffered']
    #allocation4 [shape = 's32[1]{0}', space=sflag, size = 0x4, scoped, tag = 'scoped memory for tpu_custom_call.1']
    #allocation5 [shape = 'u8[512]{0}', space=vmem, size = 0x400, scoped, tag = 'input window, operand 3, single buffered']
    #allocation6 [shape = 's32[1]{0}', space=sflag, size = 0x4, scoped, tag = 'scoped memory for tpu_custom_call.1']
    #allocation7 [shape = 'u8[512]{0}', space=vmem, size = 0x400, scoped, tag = 'input window, operand 6, single buffered']
    #allocation8 [shape = 'u8[8192]{0}', space=vmem, size = 0x2000, scoped, tag = 'input window, operand 8, single buffered']
    #allocation9 [shape = 's32[1]{0}', space=sflag, size = 0x4, scoped, tag = 'scoped memory for tpu_custom_call.1']
    %19 = vsyncpa [#allocation4], 0
    %20 = vsyncpa [#allocation6], 0
    %21 = vsyncpa [#allocation9], 0
    // Predicated region
    $region2: #{tpu_custom_call.1} parent=1 // pred_check
      _
    $region3: #{tpu_custom_call.1} parent=1 // pred_check_branch
      %23 = sbr.rel (0) target = $region5
    $region4: #{tpu_custom_call.1} parent=1 // pred_region
      _
    $region5: #{tpu_custom_call.1} parent=1 // pred_fallthru
      _
    // Predicated region
    $region6: #{tpu_custom_call.1} parent=1 // pred_check
      _
    $region7: #{tpu_custom_call.1} parent=1 // pred_check_branch
      %25 = sbr.rel (0) target = $region9
    $region8: #{tpu_custom_call.1} parent=1 // pred_region
      %s27 = ssub.s32 32, 32
      %28 = vsyncadd [#allocation4], %s27
      %s30 = sshll.u32 [#allocation3], 4
      %s31 = int_to_ptr.vmem [resolvable:$true] %s30
      %33 = dma.hbm_to_vmem [thread:$0]  %s1, 32, %s31, [#allocation4]
    $region9: #{tpu_custom_call.1} parent=1 // pred_fallthru
      _
    // Predicated region
    $region10: #{tpu_custom_call.1} parent=1 // pred_check
      _
    $region11: #{tpu_custom_call.1} parent=1 // pred_check_branch
      %35 = sbr.rel (0) target = $region13
    $region12: #{tpu_custom_call.1} parent=1 // pred_region
      _
    $region13: #{tpu_custom_call.1} parent=1 // pred_fallthru
      _
    // Predicated region
    $region14: #{tpu_custom_call.1} parent=1 // pred_check
      _
    $region15: #{tpu_custom_call.1} parent=1 // pred_check_branch
      %37 = sbr.rel (0) target = $region17
    $region16: #{tpu_custom_call.1} parent=1 // pred_region
      %s39 = ssub.s32 16, 16
      %40 = vsyncadd [#allocation6], %s39
      %s42 = sshll.u32 [#allocation5], 4
      %s43 = int_to_ptr.vmem [resolvable:$true] %s42
      %45 = dma.hbm_to_vmem [thread:$0]  %s3, 16, %s43, [#allocation6]
    $region17: #{tpu_custom_call.1} parent=1 // pred_fallthru
      _
    // Predicated region
    $region18: #{tpu_custom_call.1} parent=1 // pred_check
      _
    $region19: #{tpu_custom_call.1} parent=1 // pred_check_branch
      %47 = sbr.rel (0) target = $region21
    $region20: #{tpu_custom_call.1} parent=1 // pred_region
      _
    $region21: #{tpu_custom_call.1} parent=1 // pred_fallthru
      _
    // Predicated region
    $region22: #{tpu_custom_call.1} parent=1 // pred_check
      _
    $region23: #{tpu_custom_call.1} parent=1 // pred_check_branch
      %49 = sbr.rel (0) target = $region25
    $region24: #{tpu_custom_call.1} parent=1 // pred_region
      _
    $region25: #{tpu_custom_call.1} parent=1 // pred_fallthru
      _
    // Predicated region
    $region26: #{tpu_custom_call.1} parent=1 // pred_check
      _
    $region27: #{tpu_custom_call.1} parent=1 // pred_check_branch
      %51 = sbr.rel (0) target = $region29
    $region28: #{tpu_custom_call.1} parent=1 // pred_region
      %s53 = ssub.s32 16, 16
      %54 = vsyncadd [#allocation6], %s53
      %s56 = sshll.u32 [#allocation7], 4
      %s57 = int_to_ptr.vmem [resolvable:$true] %s56
      %59 = dma.hbm_to_vmem [thread:$0]  %s6, 16, %s57, [#allocation6]
    $region29: #{tpu_custom_call.1} parent=1 // pred_fallthru
      _
    // Predicated region
    $region30: #{tpu_custom_call.1} parent=1 // pred_check
      _
    $region31: #{tpu_custom_call.1} parent=1 // pred_check_branch
      %61 = sbr.rel (0) target = $region33
    $region32: #{tpu_custom_call.1} parent=1 // pred_region
      _
    $region33: #{tpu_custom_call.1} parent=1 // pred_fallthru
      _
    // Predicated region
    $region34: #{tpu_custom_call.1} parent=1 // pred_check
      _
    $region35: #{tpu_custom_call.1} parent=1 // pred_check_branch
      %63 = sbr.rel (0) target = $region37
    $region36: #{tpu_custom_call.1} parent=1 // pred_region
      %s65 = ssub.s32 256, 256
      %66 = vsyncadd [#allocation9], %s65
      %s67 = sshll.u32 [#allocation8], 4
      %s68 = int_to_ptr.vmem [resolvable:$true] %s67
      %73 = dma.hbm_to_vmem [thread:$0]  %s8, 256, %s68, [#allocation9], 64, 64, 4
    $region37: #{tpu_custom_call.1} parent=1 // pred_fallthru
      _
    // Predicated region
    $region38: #{tpu_custom_call.1} parent=1 // pred_check
      _
    $region39: #{tpu_custom_call.1} parent=1 // pred_check_branch
      %75 = sbr.rel (0) target = $region41
    $region40: #{tpu_custom_call.1} parent=1 // pred_region
      _
    $region41: #{tpu_custom_call.1} parent=1 // pred_fallthru
      _
    // Predicated region
    $region42: #{tpu_custom_call.1} parent=1 // pred_check
      _
    $region43: #{tpu_custom_call.1} parent=1 // pred_check_branch
      %77 = sbr.rel (0) target = $region45
    $region44: #{tpu_custom_call.1} parent=1 // pred_region
      _
    $region45: #{tpu_custom_call.1} parent=1 // pred_fallthru
      _
    // Predicated region
    $region46: #{tpu_custom_call.1} parent=1 // pred_check
      _
    $region47: #{tpu_custom_call.1} parent=1 // pred_check_branch
      %79 = sbr.rel (0) target = $region49
    $region48: #{tpu_custom_call.1} parent=1 // pred_region
      _
    $region49: #{tpu_custom_call.1} parent=1 // pred_fallthru
      _
    // Predicated region
    $region50: #{tpu_custom_call.1} parent=1 // pred_check
      _
    $region51: #{tpu_custom_call.1} parent=1 // pred_check_branch
      %81 = sbr.rel (0) target = $region53
    $region52: #{tpu_custom_call.1} parent=1 // pred_region
      %82 = dma.done [#allocation4], 32
    $region53: #{tpu_custom_call.1} parent=1 // pred_fallthru
      _
    // Predicated region
    $region54: #{tpu_custom_call.1} parent=1 // pred_check
      _
    $region55: #{tpu_custom_call.1} parent=1 // pred_check_branch
      %84 = sbr.rel (0) target = $region57
    $region56: #{tpu_custom_call.1} parent=1 // pred_region
      %85 = dma.done [#allocation6], 16
    $region57: #{tpu_custom_call.1} parent=1 // pred_fallthru
      _
    // Predicated region
    $region58: #{tpu_custom_call.1} parent=1 // pred_check
      _
    $region59: #{tpu_custom_call.1} parent=1 // pred_check_branch
      %87 = sbr.rel (0) target = $region61
    $region60: #{tpu_custom_call.1} parent=1 // pred_region
      %88 = dma.done [#allocation6], 16
    $region61: #{tpu_custom_call.1} parent=1 // pred_fallthru
      _
    // Predicated region
    $region62: #{tpu_custom_call.1} parent=1 // pred_check
      _
    $region63: #{tpu_custom_call.1} parent=1 // pred_check_branch
      %90 = sbr.rel (0) target = $region65
    $region64: #{tpu_custom_call.1} parent=1 // pred_region
      %91 = dma.done [#allocation9], 256
    $region65: #{tpu_custom_call.1} parent=1 // pred_fallthru
      _
    %v93 = vld [vmem:[%s2] sm:$0xf]
    %v94 = vld [vmem:[%s2 + $0x4] sm:$0xf]
    %v95 = vld [vmem:[%s2 + $0x8] sm:$0xf]
    %v96 = vld [vmem:[%s2 + $0xc] sm:$0xf]
    %v97 = vld [vmem:[%s4] sm:$0xf]
    %v98 = vld [vmem:[%s4 + $0x4] sm:$0xf]
    %v99 = vld [vmem:[%s4 + $0x8] sm:$0xf]
    %v100 = vld [vmem:[%s4 + $0xc] sm:$0xf]
    %v101 = vld [vmem:[%s5] sm:$0xf]
    %v102 = vld [vmem:[%s5 + $0x4] sm:$0xf]
    %v103 = vld [vmem:[%s5 + $0x8] sm:$0xf]
    %v104 = vld [vmem:[%s5 + $0xc] sm:$0xf]
    %v105 = vld [vmem:[%s7] sm:$0xf]
    %v106 = vld [vmem:[%s7 + $0x4] sm:$0xf]
    %v107 = vld [vmem:[%s7 + $0x8] sm:$0xf]
    %v108 = vld [vmem:[%s7 + $0xc] sm:$0xf]
    %v109 = vld [vmem:[#allocation8] sm:$0xf]
    %v110 = vld [vmem:[#allocation8 + $0x4] sm:$0xf]
    %v111 = vld [vmem:[#allocation8 + $0x8] sm:$0xf]
    %v112 = vld [vmem:[#allocation8 + $0xc] sm:$0xf]
    %v113 = vld [vmem:[#allocation7] sm:$0x1]
    %v114 = vld [vmem:[%s9] sm:$0x1]
    %v115 = vld [vmem:[%s0] sm:$0xf]
    %v116 = vld [vmem:[%s0 + $0x4] sm:$0xf]
    %v117 = vld [vmem:[%s0 + $0x8] sm:$0xf]
    %v118 = vld [vmem:[%s0 + $0xc] sm:$0xf]
    %v119 = vld [vmem:[%s0 + $0x10] sm:$0xf]
    %v120 = vld [vmem:[%s0 + $0x14] sm:$0xf]
    %v121 = vld [vmem:[%s0 + $0x18] sm:$0xf]
    %v122 = vld [vmem:[%s0 + $0x1c] sm:$0xf]
    %v123 = vld [vmem:[#allocation3] sm:$0x3]
    %v124 = vld [vmem:[#allocation5] sm:$0x1]
    %v126 = vlaneseq
    %v127 = vshrl.u32 %v126, 7
    %v128 = vsub.s32 0, %v127
    %v129 = vrot.slane %v124, %v128
    %v139 = vunpack.c.l.b16 %v115
    %v140 = vunpack.c.l.b16 %v116
    %v141 = vunpack.c.l.b16 %v117
    %v142 = vunpack.c.l.b16 %v118
    %v143 = vunpack.c.l.b16 %v119
    %v144 = vunpack.c.l.b16 %v120
    %v145 = vunpack.c.l.b16 %v121
    %v146 = vunpack.c.l.b16 %v122
    %v147 = vpack.c.b16 %v140, %v139
    %v148 = vpack.c.b16 %v142, %v141
    %v149 = vpack.c.b16 %v144, %v143
    %v150 = vpack.c.b16 %v146, %v145
    %vm151 = vcmask 31744
    %v153 = vsel %vm151, %v147, 0
    %v156 = vsel %vm151, %v148, 0
    %v159 = vsel %vm151, %v149, 0
    %v162 = vsel %vm151, %v150, 0
    %vm164 = vcmask 1041408
    %v166 = vsel %vm164, %v123, 0
    %168 = vmatprep.subr.bf16.mxu0 0
    %169 = vmatpush1.bf16.msra.mxu0 %v166
    %170 = vmatprep.subr.bf16.mxu0 0
    %171 = vmatpush1.bf16.msra.mxu0 0
    %172 = vmatprep.subr.bf16.mxu0 0
    %173 = vmatpush1.bf16.msra.mxu0 0
    %174 = vmatprep.subr.bf16.mxu0 0
    %175 = vmatpush1.bf16.msra.mxu0 0
    %176 = vmatprep.subr.bf16.mxu0 0
    %177 = vmatpush1.bf16.msra.mxu0 0
    %178 = vmatprep.subr.bf16.mxu0 0
    %179 = vmatpush1.bf16.msra.mxu0 0
    %180 = vmatprep.subr.bf16.mxu0 0
    %181 = vmatpush1.bf16.msra.mxu0 0
    %182 = vmatprep.subr.bf16.mxu0 0
    %183 = vmatpush1.bf16.msra.mxu0 0
    %184 = vmatprep.subr.bf16.mxu0 0
    %185 = vmatpush1.bf16.msra.mxu0 0
    %186 = vmatprep.subr.bf16.mxu0 0
    %187 = vmatpush1.bf16.msra.mxu0 0
    %188 = vmatprep.subr.bf16.mxu0 0
    %189 = vmatpush1.bf16.msra.mxu0 0
    %190 = vmatprep.subr.bf16.mxu0 0
    %191 = vmatpush1.bf16.msra.mxu0 0
    %192 = vmatprep.subr.bf16.mxu0 0
    %193 = vmatpush1.bf16.msra.mxu0 0
    %194 = vmatprep.subr.bf16.mxu0 0
    %195 = vmatpush1.bf16.msra.mxu0 0
    %196 = vmatprep.subr.bf16.mxu0 0
    %197 = vmatpush1.bf16.msra.mxu0 0
    %198 = vmatprep.subr.bf16.mxu0 0
    %199 = vmatpush1.bf16.msra.mxu0 0
    %200 = vmatprep.mubr.bf16.mxu0 0
    %201 = vmatmul.mubr.bf16.gmra.mrb[0].mxu0 %v153
    %v202 = vpop.f32.mrb[0].mxu0
    %v203 = vadd.f32 %v129, %v202
    %v204 = vpop.f32.mrb[0].mxu0
    %v205 = vpop.f32.mrb[0].mxu0
    %v206 = vadd.f32 %v129, %v205
    %v207 = vpop.f32.mrb[0].mxu0
    %208 = vmatprep.mubr.bf16.mxu0 0
    %209 = vmatmul.mubr.bf16.gmra.mrb[0].mxu0 %v156
    %v210 = vpop.f32.mrb[0].mxu0
    %v211 = vadd.f32 %v129, %v210
    %v212 = vpop.f32.mrb[0].mxu0
    %v213 = vpop.f32.mrb[0].mxu0
    %v214 = vadd.f32 %v129, %v213
    %v215 = vpop.f32.mrb[0].mxu0
    %216 = vmatprep.mubr.bf16.mxu0 0
    %217 = vmatmul.mubr.bf16.gmra.mrb[0].mxu0 %v159
    %v218 = vpop.f32.mrb[0].mxu0
    %v219 = vadd.f32 %v129, %v218
    %v220 = vpop.f32.mrb[0].mxu0
    %v221 = vpop.f32.mrb[0].mxu0
    %v222 = vadd.f32 %v129, %v221
    %v223 = vpop.f32.mrb[0].mxu0
    %224 = vmatprep.mubr.bf16.mxu0 0
    %225 = vmatmul.mubr.bf16.gmra.mrb[0].mxu0 %v162
    %v226 = vpop.f32.mrb[0].mxu0
    %v227 = vadd.f32 %v129, %v226
    %v228 = vpop.f32.mrb[0].mxu0
    %v229 = vpop.f32.mrb[0].mxu0
    %v230 = vadd.f32 %v129, %v229
    %v231 = vpop.f32.mrb[0].mxu0
    %232 = vdwg.mxu0
    %v237 = vunpack.c.l.b16 %v93
    %v238 = vunpack.c.l.b16 %v94
    %v239 = vunpack.c.l.b16 %v95
    %v240 = vunpack.c.l.b16 %v96
    %v241 = vpack.c.b16 %v238, %v237
    %v242 = vpack.c.b16 %v240, %v239
    %vm245 = vcmask 261120
    %v247 = vsel %vm245, 0, 0
    %249 = vmatprep.subr.bf16.mxu0 0
    %250 = vmatpush1.bf16.msra.mxu0 %v241
    %251 = vmatprep.subr.bf16.mxu0 0
    %252 = vmatpush1.bf16.msra.mxu0 %v242
    %253 = vmatprep.subr.bf16.mxu0 0
    %254 = vmatpush1.bf16.msra.mxu0 0
    %255 = vmatprep.subr.bf16.mxu0 0
    %256 = vmatpush1.bf16.msra.mxu0 0
    %257 = vmatprep.subr.bf16.mxu0 0
    %258 = vmatpush1.bf16.msra.mxu0 0
    %259 = vmatprep.subr.bf16.mxu0 0
    %260 = vmatpush1.bf16.msra.mxu0 0
    %261 = vmatprep.subr.bf16.mxu0 0
    %262 = vmatpush1.bf16.msra.mxu0 0
    %263 = vmatprep.subr.bf16.mxu0 0
    %264 = vmatpush1.bf16.msra.mxu0 0
    %265 = vmatprep.subr.bf16.mxu0 0
    %266 = vmatpush1.bf16.msra.mxu0 0
    %267 = vmatprep.subr.bf16.mxu0 0
    %268 = vmatpush1.bf16.msra.mxu0 0
    %269 = vmatprep.subr.bf16.mxu0 0
    %270 = vmatpush1.bf16.msra.mxu0 0
    %271 = vmatprep.subr.bf16.mxu0 0
    %272 = vmatpush1.bf16.msra.mxu0 0
    %273 = vmatprep.subr.bf16.mxu0 0
    %274 = vmatpush1.bf16.msra.mxu0 0
    %275 = vmatprep.subr.bf16.mxu0 0
    %276 = vmatpush1.bf16.msra.mxu0 0
    %277 = vmatprep.subr.bf16.mxu0 0
    %278 = vmatpush1.bf16.msra.mxu0 0
    %279 = vmatprep.subr.bf16.mxu0 0
    %280 = vmatpush1.bf16.msra.mxu0 0
    %281 = vmatprep.mubr.bf16.mxu0 0
    %282 = vmatmul.mubr.bf16.gmra.mrb[0].mxu0 %v247
    %v283 = vpop.f32.mrb[0].mxu0
    %v284 = vadd.f32 0.0, %v283
    %v285 = vpop.f32.mrb[0].mxu0
    %v286 = vpop.f32.mrb[0].mxu0
    %v287 = vpop.f32.mrb[0].mxu0
    %288 = vdwg.mxu0
    %v289 = vadd.f32 %v203, %v284
    %v290 = vxor.u32 %v289, 2147483648
    %v291 = vmul.f32 %v290, 1.442695
    %v292 = vpow.pop %v291
    %v293 = vadd.f32 %v292, 1.0
    %v294 = vrcp.pop %v293
    %v295 = vmul.f32 1.0, %v294
    %v296 = vmul.f32 %v295, 2.0
    %v297 = vsub.f32 %v296, 1.0
    %v298 = vmul.f32 %v295, 0.0
    %300 = vrot.lane.b32.xlu0 %v297, 32
    %v301 = vpop.permute.xlu0 %300
    %v303 = vmul.f32 %v295, %v301
    %305 = vrot.lane.b32.xlu0 %v303, 32
    %v306 = vpop.permute.xlu0 %305
    %v308 = vadd.f32 %v298, %v306
    %v309 = vtanh.pop %v308
    %311 = vrot.lane.b32.xlu0 %v309, 32
    %v312 = vpop.permute.xlu0 %311
    %v314 = vmul.f32 %v295, %v312
    %v315 = vpack.c.bf16 %v314, %v314
    %v317 = vlaneseq
    %v318 = vshrl.u32 %v317, 7
    %v319 = vsub.s32 0, %v318
    %v320 = vrot.slane %v113, %v319
    %323 = vrot.lane.b32.xlu0 %v315, 64
    %v324 = vpop.permute.xlu0 %323
    %v329 = vunpack.c.l.b16 %v97
    %v330 = vunpack.c.l.b16 %v98
    %v331 = vunpack.c.l.b16 %v99
    %v332 = vunpack.c.l.b16 %v100
    %v333 = vpack.c.b16 %v330, %v329
    %v334 = vpack.c.b16 %v332, %v331
    %v338 = vsel %vm245, %v324, 0
    %340 = vmatprep.subr.bf16.mxu0 0
    %341 = vmatpush1.bf16.msra.mxu0 %v333
    %342 = vmatprep.subr.bf16.mxu0 0
    %343 = vmatpush1.bf16.msra.mxu0 %v334
    %344 = vmatprep.subr.bf16.mxu0 0
    %345 = vmatpush1.bf16.msra.mxu0 0
    %346 = vmatprep.subr.bf16.mxu0 0
    %347 = vmatpush1.bf16.msra.mxu0 0
    %348 = vmatprep.subr.bf16.mxu0 0
    %349 = vmatpush1.bf16.msra.mxu0 0
    %350 = vmatprep.subr.bf16.mxu0 0
    %351 = vmatpush1.bf16.msra.mxu0 0
    %352 = vmatprep.subr.bf16.mxu0 0
    %353 = vmatpush1.bf16.msra.mxu0 0
    %354 = vmatprep.subr.bf16.mxu0 0
    %355 = vmatpush1.bf16.msra.mxu0 0
    %356 = vmatprep.subr.bf16.mxu0 0
    %357 = vmatpush1.bf16.msra.mxu0 0
    %358 = vmatprep.subr.bf16.mxu0 0
    %359 = vmatpush1.bf16.msra.mxu0 0
    %360 = vmatprep.subr.bf16.mxu0 0
    %361 = vmatpush1.bf16.msra.mxu0 0
    %362 = vmatprep.subr.bf16.mxu0 0
    %363 = vmatpush1.bf16.msra.mxu0 0
    %364 = vmatprep.subr.bf16.mxu0 0
    %365 = vmatpush1.bf16.msra.mxu0 0
    %366 = vmatprep.subr.bf16.mxu0 0
    %367 = vmatpush1.bf16.msra.mxu0 0
    %368 = vmatprep.subr.bf16.mxu0 0
    %369 = vmatpush1.bf16.msra.mxu0 0
    %370 = vmatprep.subr.bf16.mxu0 0
    %371 = vmatpush1.bf16.msra.mxu0 0
    %372 = vmatprep.mubr.bf16.mxu0 0
    %373 = vmatmul.mubr.bf16.gmra.mrb[0].mxu0 %v338
    %v374 = vpop.f32.mrb[0].mxu0
    %v375 = vadd.f32 %v320, %v374
    %v376 = vpop.f32.mrb[0].mxu0
    %v377 = vpop.f32.mrb[0].mxu0
    %v378 = vpop.f32.mrb[0].mxu0
    %379 = vdwg.mxu0
    %380 = vmatprep.subr.bf16.mxu0 0
    %381 = vmatpush1.bf16.msra.mxu0 %v241
    %382 = vmatprep.subr.bf16.mxu0 0
    %383 = vmatpush1.bf16.msra.mxu0 %v242
    %384 = vmatprep.subr.bf16.mxu0 0
    %385 = vmatpush1.bf16.msra.mxu0 0
    %386 = vmatprep.subr.bf16.mxu0 0
    %387 = vmatpush1.bf16.msra.mxu0 0
    %388 = vmatprep.subr.bf16.mxu0 0
    %389 = vmatpush1.bf16.msra.mxu0 0
    %390 = vmatprep.subr.bf16.mxu0 0
    %391 = vmatpush1.bf16.msra.mxu0 0
    %392 = vmatprep.subr.bf16.mxu0 0
    %393 = vmatpush1.bf16.msra.mxu0 0
    %394 = vmatprep.subr.bf16.mxu0 0
    %395 = vmatpush1.bf16.msra.mxu0 0
    %396 = vmatprep.subr.bf16.mxu0 0
    %397 = vmatpush1.bf16.msra.mxu0 0
    %398 = vmatprep.subr.bf16.mxu0 0
    %399 = vmatpush1.bf16.msra.mxu0 0
    %400 = vmatprep.subr.bf16.mxu0 0
    %401 = vmatpush1.bf16.msra.mxu0 0
    %402 = vmatprep.subr.bf16.mxu0 0
    %403 = vmatpush1.bf16.msra.mxu0 0
    %404 = vmatprep.subr.bf16.mxu0 0
    %405 = vmatpush1.bf16.msra.mxu0 0
    %406 = vmatprep.subr.bf16.mxu0 0
    %407 = vmatpush1.bf16.msra.mxu0 0
    %408 = vmatprep.subr.bf16.mxu0 0
    %409 = vmatpush1.bf16.msra.mxu0 0
    %410 = vmatprep.subr.bf16.mxu0 0
    %411 = vmatpush1.bf16.msra.mxu0 0
    %412 = vmatprep.mubr.bf16.mxu0 0
    %413 = vmatmul.mubr.bf16.gmra.mrb[0].mxu0 %v338
    %v414 = vpop.f32.mrb[0].mxu0
    %v415 = vadd.f32 0.0, %v414
    %v416 = vpop.f32.mrb[0].mxu0
    %v417 = vpop.f32.mrb[0].mxu0
    %v418 = vpop.f32.mrb[0].mxu0
    %419 = vdwg.mxu0
    %v420 = vadd.f32 %v206, %v415
    %v421 = vxor.u32 %v420, 2147483648
    %v422 = vmul.f32 %v421, 1.442695
    %v423 = vpow.pop %v422
    %v424 = vadd.f32 %v423, 1.0
    %v425 = vrcp.pop %v424
    %v426 = vmul.f32 1.0, %v425
    %v427 = vmul.f32 %v426, 2.0
    %v428 = vsub.f32 %v427, 1.0
    %v429 = vmul.f32 %v426, %v308
    %431 = vrot.lane.b32.xlu0 %v428, 32
    %v432 = vpop.permute.xlu0 %431
    %v434 = vmul.f32 %v426, %v432
    %436 = vrot.lane.b32.xlu0 %v434, 32
    %v437 = vpop.permute.xlu0 %436
    %v439 = vadd.f32 %v429, %v437
    %v440 = vtanh.pop %v439
    %442 = vrot.lane.b32.xlu0 %v440, 32
    %v443 = vpop.permute.xlu0 %442
    %v445 = vmul.f32 %v426, %v443
    %v446 = vpack.c.bf16 %v445, %v445
    %448 = vrot.lane.b32.xlu0 %v446, 64
    %v449 = vpop.permute.xlu0 %448
    %v451 = vsel %vm245, %v449, 0
    %453 = vmatprep.subr.bf16.mxu0 0
    %454 = vmatpush1.bf16.msra.mxu0 %v333
    %455 = vmatprep.subr.bf16.mxu0 0
    %456 = vmatpush1.bf16.msra.mxu0 %v334
    %457 = vmatprep.subr.bf16.mxu0 0
    %458 = vmatpush1.bf16.msra.mxu0 0
    %459 = vmatprep.subr.bf16.mxu0 0
    %460 = vmatpush1.bf16.msra.mxu0 0
    %461 = vmatprep.subr.bf16.mxu0 0
    %462 = vmatpush1.bf16.msra.mxu0 0
    %463 = vmatprep.subr.bf16.mxu0 0
    %464 = vmatpush1.bf16.msra.mxu0 0
    %465 = vmatprep.subr.bf16.mxu0 0
    %466 = vmatpush1.bf16.msra.mxu0 0
    %467 = vmatprep.subr.bf16.mxu0 0
    %468 = vmatpush1.bf16.msra.mxu0 0
    %469 = vmatprep.subr.bf16.mxu0 0
    %470 = vmatpush1.bf16.msra.mxu0 0
    %471 = vmatprep.subr.bf16.mxu0 0
    %472 = vmatpush1.bf16.msra.mxu0 0
    %473 = vmatprep.subr.bf16.mxu0 0
    %474 = vmatpush1.bf16.msra.mxu0 0
    %475 = vmatprep.subr.bf16.mxu0 0
    %476 = vmatpush1.bf16.msra.mxu0 0
    %477 = vmatprep.subr.bf16.mxu0 0
    %478 = vmatpush1.bf16.msra.mxu0 0
    %479 = vmatprep.subr.bf16.mxu0 0
    %480 = vmatpush1.bf16.msra.mxu0 0
    %481 = vmatprep.subr.bf16.mxu0 0
    %482 = vmatpush1.bf16.msra.mxu0 0
    %483 = vmatprep.subr.bf16.mxu0 0
    %484 = vmatpush1.bf16.msra.mxu0 0
    %485 = vmatprep.mubr.bf16.mxu0 0
    %486 = vmatmul.mubr.bf16.gmra.mrb[0].mxu0 %v451
    %v487 = vpop.f32.mrb[0].mxu0
    %v488 = vadd.f32 %v320, %v487
    %v489 = vpop.f32.mrb[0].mxu0
    %v490 = vpop.f32.mrb[0].mxu0
    %v491 = vpop.f32.mrb[0].mxu0
    %492 = vdwg.mxu0
    %v497 = vunpack.c.l.b16 %v101
    %v498 = vunpack.c.l.b16 %v102
    %v499 = vunpack.c.l.b16 %v103
    %v500 = vunpack.c.l.b16 %v104
    %v501 = vpack.c.b16 %v498, %v497
    %v502 = vpack.c.b16 %v500, %v499
    %505 = vmatprep.subr.bf16.mxu0 0
    %506 = vmatpush1.bf16.msra.mxu0 %v501
    %507 = vmatprep.subr.bf16.mxu0 0
    %508 = vmatpush1.bf16.msra.mxu0 %v502
    %509 = vmatprep.subr.bf16.mxu0 0
    %510 = vmatpush1.bf16.msra.mxu0 0
    %511 = vmatprep.subr.bf16.mxu0 0
    %512 = vmatpush1.bf16.msra.mxu0 0
    %513 = vmatprep.subr.bf16.mxu0 0
    %514 = vmatpush1.bf16.msra.mxu0 0
    %515 = vmatprep.subr.bf16.mxu0 0
    %516 = vmatpush1.bf16.msra.mxu0 0
    %517 = vmatprep.subr.bf16.mxu0 0
    %518 = vmatpush1.bf16.msra.mxu0 0
    %519 = vmatprep.subr.bf16.mxu0 0
    %520 = vmatpush1.bf16.msra.mxu0 0
    %521 = vmatprep.subr.bf16.mxu0 0
    %522 = vmatpush1.bf16.msra.mxu0 0
    %523 = vmatprep.subr.bf16.mxu0 0
    %524 = vmatpush1.bf16.msra.mxu0 0
    %525 = vmatprep.subr.bf16.mxu0 0
    %526 = vmatpush1.bf16.msra.mxu0 0
    %527 = vmatprep.subr.bf16.mxu0 0
    %528 = vmatpush1.bf16.msra.mxu0 0
    %529 = vmatprep.subr.bf16.mxu0 0
    %530 = vmatpush1.bf16.msra.mxu0 0
    %531 = vmatprep.subr.bf16.mxu0 0
    %532 = vmatpush1.bf16.msra.mxu0 0
    %533 = vmatprep.subr.bf16.mxu0 0
    %534 = vmatpush1.bf16.msra.mxu0 0
    %535 = vmatprep.subr.bf16.mxu0 0
    %536 = vmatpush1.bf16.msra.mxu0 0
    %537 = vmatprep.mubr.bf16.mxu0 0
    %538 = vmatmul.mubr.bf16.gmra.mrb[0].mxu0 %v247
    %v539 = vpop.f32.mrb[0].mxu0
    %v540 = vadd.f32 0.0, %v539
    %v541 = vpop.f32.mrb[0].mxu0
    %v542 = vpop.f32.mrb[0].mxu0
    %v543 = vpop.f32.mrb[0].mxu0
    %544 = vdwg.mxu0
    %v545 = vadd.f32 %v375, %v540
    %v546 = vxor.u32 %v545, 2147483648
    %v547 = vmul.f32 %v546, 1.442695
    %v548 = vpow.pop %v547
    %v549 = vadd.f32 %v548, 1.0
    %v550 = vrcp.pop %v549
    %v551 = vmul.f32 1.0, %v550
    %v552 = vmul.f32 %v551, 2.0
    %v553 = vsub.f32 %v552, 1.0
    %v554 = vmul.f32 %v551, 0.0
    %556 = vrot.lane.b32.xlu0 %v553, 32
    %v557 = vpop.permute.xlu0 %556
    %v559 = vmul.f32 %v551, %v557
    %561 = vrot.lane.b32.xlu0 %v559, 32
    %v562 = vpop.permute.xlu0 %561
    %v564 = vadd.f32 %v554, %v562
    %v565 = vtanh.pop %v564
    %567 = vrot.lane.b32.xlu0 %v565, 32
    %v568 = vpop.permute.xlu0 %567
    %v570 = vmul.f32 %v551, %v568
    %v571 = vpack.c.bf16 %v570, %v570
    %v573 = vlaneseq
    %v574 = vshrl.u32 %v573, 7
    %v575 = vsub.s32 0, %v574
    %v576 = vrot.slane %v114, %v575
    %579 = vrot.lane.b32.xlu0 %v571, 64
    %v580 = vpop.permute.xlu0 %579
    %v585 = vunpack.c.l.b16 %v105
    %v586 = vunpack.c.l.b16 %v106
    %v587 = vunpack.c.l.b16 %v107
    %v588 = vunpack.c.l.b16 %v108
    %v589 = vpack.c.b16 %v586, %v585
    %v590 = vpack.c.b16 %v588, %v587
    %v594 = vsel %vm245, %v580, 0
    %596 = vmatprep.subr.bf16.mxu0 0
    %597 = vmatpush1.bf16.msra.mxu0 %v589
    %598 = vmatprep.subr.bf16.mxu0 0
    %599 = vmatpush1.bf16.msra.mxu0 %v590
    %600 = vmatprep.subr.bf16.mxu0 0
    %601 = vmatpush1.bf16.msra.mxu0 0
    %602 = vmatprep.subr.bf16.mxu0 0
    %603 = vmatpush1.bf16.msra.mxu0 0
    %604 = vmatprep.subr.bf16.mxu0 0
    %605 = vmatpush1.bf16.msra.mxu0 0
    %606 = vmatprep.subr.bf16.mxu0 0
    %607 = vmatpush1.bf16.msra.mxu0 0
    %608 = vmatprep.subr.bf16.mxu0 0
    %609 = vmatpush1.bf16.msra.mxu0 0
    %610 = vmatprep.subr.bf16.mxu0 0
    %611 = vmatpush1.bf16.msra.mxu0 0
    %612 = vmatprep.subr.bf16.mxu0 0
    %613 = vmatpush1.bf16.msra.mxu0 0
    %614 = vmatprep.subr.bf16.mxu0 0
    %615 = vmatpush1.bf16.msra.mxu0 0
    %616 = vmatprep.subr.bf16.mxu0 0
    %617 = vmatpush1.bf16.msra.mxu0 0
    %618 = vmatprep.subr.bf16.mxu0 0
    %619 = vmatpush1.bf16.msra.mxu0 0
    %620 = vmatprep.subr.bf16.mxu0 0
    %621 = vmatpush1.bf16.msra.mxu0 0
    %622 = vmatprep.subr.bf16.mxu0 0
    %623 = vmatpush1.bf16.msra.mxu0 0
    %624 = vmatprep.subr.bf16.mxu0 0
    %625 = vmatpush1.bf16.msra.mxu0 0
    %626 = vmatprep.subr.bf16.mxu0 0
    %627 = vmatpush1.bf16.msra.mxu0 0
    %628 = vmatprep.mubr.bf16.mxu0 0
    %629 = vmatmul.mubr.bf16.gmra.mrb[0].mxu0 %v594
    %v630 = vpop.f32.mrb[0].mxu0
    %v631 = vadd.f32 %v576, %v630
    %v632 = vpop.f32.mrb[0].mxu0
    %v633 = vpop.f32.mrb[0].mxu0
    %v634 = vpop.f32.mrb[0].mxu0
    %635 = vdwg.mxu0
    %636 = vmatprep.subr.bf16.mxu0 0
    %637 = vmatpush1.bf16.msra.mxu0 %v241
    %638 = vmatprep.subr.bf16.mxu0 0
    %639 = vmatpush1.bf16.msra.mxu0 %v242
    %640 = vmatprep.subr.bf16.mxu0 0
    %641 = vmatpush1.bf16.msra.mxu0 0
    %642 = vmatprep.subr.bf16.mxu0 0
    %643 = vmatpush1.bf16.msra.mxu0 0
    %644 = vmatprep.subr.bf16.mxu0 0
    %645 = vmatpush1.bf16.msra.mxu0 0
    %646 = vmatprep.subr.bf16.mxu0 0
    %647 = vmatpush1.bf16.msra.mxu0 0
    %648 = vmatprep.subr.bf16.mxu0 0
    %649 = vmatpush1.bf16.msra.mxu0 0
    %650 = vmatprep.subr.bf16.mxu0 0
    %651 = vmatpush1.bf16.msra.mxu0 0
    %652 = vmatprep.subr.bf16.mxu0 0
    %653 = vmatpush1.bf16.msra.mxu0 0
    %654 = vmatprep.subr.bf16.mxu0 0
    %655 = vmatpush1.bf16.msra.mxu0 0
    %656 = vmatprep.subr.bf16.mxu0 0
    %657 = vmatpush1.bf16.msra.mxu0 0
    %658 = vmatprep.subr.bf16.mxu0 0
    %659 = vmatpush1.bf16.msra.mxu0 0
    %660 = vmatprep.subr.bf16.mxu0 0
    %661 = vmatpush1.bf16.msra.mxu0 0
    %662 = vmatprep.subr.bf16.mxu0 0
    %663 = vmatpush1.bf16.msra.mxu0 0
    %664 = vmatprep.subr.bf16.mxu0 0
    %665 = vmatpush1.bf16.msra.mxu0 0
    %666 = vmatprep.subr.bf16.mxu0 0
    %667 = vmatpush1.bf16.msra.mxu0 0
    %668 = vmatprep.mubr.bf16.mxu0 0
    %669 = vmatmul.mubr.bf16.gmra.mrb[0].mxu0 %v451
    %v670 = vpop.f32.mrb[0].mxu0
    %v671 = vadd.f32 0.0, %v670
    %v672 = vpop.f32.mrb[0].mxu0
    %v673 = vpop.f32.mrb[0].mxu0
    %v674 = vpop.f32.mrb[0].mxu0
    %675 = vdwg.mxu0
    %v676 = vadd.f32 %v211, %v671
    %v677 = vxor.u32 %v676, 2147483648
    %v678 = vmul.f32 %v677, 1.442695
    %v679 = vpow.pop %v678
    %v680 = vadd.f32 %v679, 1.0
    %v681 = vrcp.pop %v680
    %v682 = vmul.f32 1.0, %v681
    %v683 = vmul.f32 %v682, 2.0
    %v684 = vsub.f32 %v683, 1.0
    %v685 = vmul.f32 %v682, %v439
    %687 = vrot.lane.b32.xlu0 %v684, 32
    %v688 = vpop.permute.xlu0 %687
    %v690 = vmul.f32 %v682, %v688
    %692 = vrot.lane.b32.xlu0 %v690, 32
    %v693 = vpop.permute.xlu0 %692
    %v695 = vadd.f32 %v685, %v693
    %v696 = vtanh.pop %v695
    %698 = vrot.lane.b32.xlu0 %v696, 32
    %v699 = vpop.permute.xlu0 %698
    %v701 = vmul.f32 %v682, %v699
    %v702 = vpack.c.bf16 %v701, %v701
    %704 = vrot.lane.b32.xlu0 %v702, 64
    %v705 = vpop.permute.xlu0 %704
    %v707 = vsel %vm245, %v705, 0
    %709 = vmatprep.subr.bf16.mxu0 0
    %710 = vmatpush1.bf16.msra.mxu0 %v333
    %711 = vmatprep.subr.bf16.mxu0 0
    %712 = vmatpush1.bf16.msra.mxu0 %v334
    %713 = vmatprep.subr.bf16.mxu0 0
    %714 = vmatpush1.bf16.msra.mxu0 0
    %715 = vmatprep.subr.bf16.mxu0 0
    %716 = vmatpush1.bf16.msra.mxu0 0
    %717 = vmatprep.subr.bf16.mxu0 0
    %718 = vmatpush1.bf16.msra.mxu0 0
    %719 = vmatprep.subr.bf16.mxu0 0
    %720 = vmatpush1.bf16.msra.mxu0 0
    %721 = vmatprep.subr.bf16.mxu0 0
    %722 = vmatpush1.bf16.msra.mxu0 0
    %723 = vmatprep.subr.bf16.mxu0 0
    %724 = vmatpush1.bf16.msra.mxu0 0
    %725 = vmatprep.subr.bf16.mxu0 0
    %726 = vmatpush1.bf16.msra.mxu0 0
    %727 = vmatprep.subr.bf16.mxu0 0
    %728 = vmatpush1.bf16.msra.mxu0 0
    %729 = vmatprep.subr.bf16.mxu0 0
    %730 = vmatpush1.bf16.msra.mxu0 0
    %731 = vmatprep.subr.bf16.mxu0 0
    %732 = vmatpush1.bf16.msra.mxu0 0
    %733 = vmatprep.subr.bf16.mxu0 0
    %734 = vmatpush1.bf16.msra.mxu0 0
    %735 = vmatprep.subr.bf16.mxu0 0
    %736 = vmatpush1.bf16.msra.mxu0 0
    %737 = vmatprep.subr.bf16.mxu0 0
    %738 = vmatpush1.bf16.msra.mxu0 0
    %739 = vmatprep.subr.bf16.mxu0 0
    %740 = vmatpush1.bf16.msra.mxu0 0
    %741 = vmatprep.mubr.bf16.mxu0 0
    %742 = vmatmul.mubr.bf16.gmra.mrb[0].mxu0 %v707
    %v743 = vpop.f32.mrb[0].mxu0
    %v744 = vadd.f32 %v320, %v743
    %v745 = vpop.f32.mrb[0].mxu0
    %v746 = vpop.f32.mrb[0].mxu0
    %v747 = vpop.f32.mrb[0].mxu0
    %748 = vdwg.mxu0
    %749 = vmatprep.subr.bf16.mxu0 0
    %750 = vmatpush1.bf16.msra.mxu0 %v501
    %751 = vmatprep.subr.bf16.mxu0 0
    %752 = vmatpush1.bf16.msra.mxu0 %v502
    %753 = vmatprep.subr.bf16.mxu0 0
    %754 = vmatpush1.bf16.msra.mxu0 0
    %755 = vmatprep.subr.bf16.mxu0 0
    %756 = vmatpush1.bf16.msra.mxu0 0
    %757 = vmatprep.subr.bf16.mxu0 0
    %758 = vmatpush1.bf16.msra.mxu0 0
    %759 = vmatprep.subr.bf16.mxu0 0
    %760 = vmatpush1.bf16.msra.mxu0 0
    %761 = vmatprep.subr.bf16.mxu0 0
    %762 = vmatpush1.bf16.msra.mxu0 0
    %763 = vmatprep.subr.bf16.mxu0 0
    %764 = vmatpush1.bf16.msra.mxu0 0
    %765 = vmatprep.subr.bf16.mxu0 0
    %766 = vmatpush1.bf16.msra.mxu0 0
    %767 = vmatprep.subr.bf16.mxu0 0
    %768 = vmatpush1.bf16.msra.mxu0 0
    %769 = vmatprep.subr.bf16.mxu0 0
    %770 = vmatpush1.bf16.msra.mxu0 0
    %771 = vmatprep.subr.bf16.mxu0 0
    %772 = vmatpush1.bf16.msra.mxu0 0
    %773 = vmatprep.subr.bf16.mxu0 0
    %774 = vmatpush1.bf16.msra.mxu0 0
    %775 = vmatprep.subr.bf16.mxu0 0
    %776 = vmatpush1.bf16.msra.mxu0 0
    %777 = vmatprep.subr.bf16.mxu0 0
    %778 = vmatpush1.bf16.msra.mxu0 0
    %779 = vmatprep.subr.bf16.mxu0 0
    %780 = vmatpush1.bf16.msra.mxu0 0
    %781 = vmatprep.mubr.bf16.mxu0 0
    %782 = vmatmul.mubr.bf16.gmra.mrb[0].mxu0 %v594
    %v783 = vpop.f32.mrb[0].mxu0
    %v784 = vadd.f32 0.0, %v783
    %v785 = vpop.f32.mrb[0].mxu0
    %v786 = vpop.f32.mrb[0].mxu0
    %v787 = vpop.f32.mrb[0].mxu0
    %788 = vdwg.mxu0
    %v789 = vadd.f32 %v488, %v784
    %v790 = vxor.u32 %v789, 2147483648
    %v791 = vmul.f32 %v790, 1.442695
    %v792 = vpow.pop %v791
    %v793 = vadd.f32 %v792, 1.0
    %v794 = vrcp.pop %v793
    %v795 = vmul.f32 1.0, %v794
    %v796 = vmul.f32 %v795, 2.0
    %v797 = vsub.f32 %v796, 1.0
    %v798 = vmul.f32 %v795, %v564
    %800 = vrot.lane.b32.xlu0 %v797, 32
    %v801 = vpop.permute.xlu0 %800
    %v803 = vmul.f32 %v795, %v801
    %805 = vrot.lane.b32.xlu0 %v803, 32
    %v806 = vpop.permute.xlu0 %805
    %v808 = vadd.f32 %v798, %v806
    %v809 = vtanh.pop %v808
    %811 = vrot.lane.b32.xlu0 %v809, 32
    %v812 = vpop.permute.xlu0 %811
    %v814 = vmul.f32 %v795, %v812
    %v815 = vpack.c.bf16 %v814, %v814
    %817 = vrot.lane.b32.xlu0 %v815, 64
    %v818 = vpop.permute.xlu0 %817
    %v820 = vsel %vm245, %v818, 0
    %822 = vmatprep.subr.bf16.mxu0 0
    %823 = vmatpush1.bf16.msra.mxu0 %v589
    %824 = vmatprep.subr.bf16.mxu0 0
    %825 = vmatpush1.bf16.msra.mxu0 %v590
    %826 = vmatprep.subr.bf16.mxu0 0
    %827 = vmatpush1.bf16.msra.mxu0 0
    %828 = vmatprep.subr.bf16.mxu0 0
    %829 = vmatpush1.bf16.msra.mxu0 0
    %830 = vmatprep.subr.bf16.mxu0 0
    %831 = vmatpush1.bf16.msra.mxu0 0
    %832 = vmatprep.subr.bf16.mxu0 0
    %833 = vmatpush1.bf16.msra.mxu0 0
    %834 = vmatprep.subr.bf16.mxu0 0
    %835 = vmatpush1.bf16.msra.mxu0 0
    %836 = vmatprep.subr.bf16.mxu0 0
    %837 = vmatpush1.bf16.msra.mxu0 0
    %838 = vmatprep.subr.bf16.mxu0 0
    %839 = vmatpush1.bf16.msra.mxu0 0
    %840 = vmatprep.subr.bf16.mxu0 0
    %841 = vmatpush1.bf16.msra.mxu0 0
    %842 = vmatprep.subr.bf16.mxu0 0
    %843 = vmatpush1.bf16.msra.mxu0 0
    %844 = vmatprep.subr.bf16.mxu0 0
    %845 = vmatpush1.bf16.msra.mxu0 0
    %846 = vmatprep.subr.bf16.mxu0 0
    %847 = vmatpush1.bf16.msra.mxu0 0
    %848 = vmatprep.subr.bf16.mxu0 0
    %849 = vmatpush1.bf16.msra.mxu0 0
    %850 = vmatprep.subr.bf16.mxu0 0
    %851 = vmatpush1.bf16.msra.mxu0 0
    %852 = vmatprep.subr.bf16.mxu0 0
    %853 = vmatpush1.bf16.msra.mxu0 0
    %854 = vmatprep.mubr.bf16.mxu0 0
    %855 = vmatmul.mubr.bf16.gmra.mrb[0].mxu0 %v820
    %v856 = vpop.f32.mrb[0].mxu0
    %v857 = vadd.f32 %v576, %v856
    %v858 = vpop.f32.mrb[0].mxu0
    %v859 = vpop.f32.mrb[0].mxu0
    %v860 = vpop.f32.mrb[0].mxu0
    %861 = vdwg.mxu0
    %v866 = vunpack.c.l.b16 %v109
    %v867 = vunpack.c.l.b16 %v110
    %v868 = vunpack.c.l.b16 %v111
    %v869 = vunpack.c.l.b16 %v112
    %v870 = vpack.c.b16 %v867, %v866
    %v871 = vpack.c.b16 %v869, %v868
    %874 = vmatprep.subr.bf16.mxu0 0
    %875 = vmatpush1.bf16.msra.mxu0 %v870
    %876 = vmatprep.subr.bf16.mxu0 0
    %877 = vmatpush1.bf16.msra.mxu0 %v871
    %878 = vmatprep.subr.bf16.mxu0 0
    %879 = vmatpush1.bf16.msra.mxu0 0
    %880 = vmatprep.subr.bf16.mxu0 0
    %881 = vmatpush1.bf16.msra.mxu0 0
    %882 = vmatprep.subr.bf16.mxu0 0
    %883 = vmatpush1.bf16.msra.mxu0 0
    %884 = vmatprep.subr.bf16.mxu0 0
    %885 = vmatpush1.bf16.msra.mxu0 0
    %886 = vmatprep.subr.bf16.mxu0 0
    %887 = vmatpush1.bf16.msra.mxu0 0
    %888 = vmatprep.subr.bf16.mxu0 0
    %889 = vmatpush1.bf16.msra.mxu0 0
    %890 = vmatprep.subr.bf16.mxu0 0
    %891 = vmatpush1.bf16.msra.mxu0 0
    %892 = vmatprep.subr.bf16.mxu0 0
    %893 = vmatpush1.bf16.msra.mxu0 0
    %894 = vmatprep.subr.bf16.mxu0 0
    %895 = vmatpush1.bf16.msra.mxu0 0
    %896 = vmatprep.subr.bf16.mxu0 0
    %897 = vmatpush1.bf16.msra.mxu0 0
    %898 = vmatprep.subr.bf16.mxu0 0
    %899 = vmatpush1.bf16.msra.mxu0 0
    %900 = vmatprep.subr.bf16.mxu0 0
    %901 = vmatpush1.bf16.msra.mxu0 0
    %902 = vmatprep.subr.bf16.mxu0 0
    %903 = vmatpush1.bf16.msra.mxu0 0
    %904 = vmatprep.subr.bf16.mxu0 0
    %905 = vmatpush1.bf16.msra.mxu0 0
    %906 = vmatprep.mubr.bf16.mxu0 0
    %907 = vmatmul.mubr.bf16.gmra.mrb[0].mxu0 %v247
    %v908 = vpop.f32.mrb[0].mxu0
    %v909 = vadd.f32 0.0, %v908
    %v910 = vpop.f32.mrb[0].mxu0
    %v911 = vpop.f32.mrb[0].mxu0
    %v912 = vpop.f32.mrb[0].mxu0
    %913 = vdwg.mxu0
    %v914 = vadd.f32 %v631, %v909
    %v915 = vxor.u32 %v914, 2147483648
    %v916 = vmul.f32 %v915, 1.442695
    %v917 = vpow.pop %v916
    %v918 = vadd.f32 %v917, 1.0
    %v919 = vrcp.pop %v918
    %v920 = vmul.f32 1.0, %v919
    %v921 = vmul.f32 %v920, 2.0
    %v922 = vsub.f32 %v921, 1.0
    %v923 = vmul.f32 %v920, 0.0
    %925 = vrot.lane.b32.xlu0 %v922, 32
    %v926 = vpop.permute.xlu0 %925
    %v928 = vmul.f32 %v920, %v926
    %930 = vrot.lane.b32.xlu0 %v928, 32
    %v931 = vpop.permute.xlu0 %930
    %v933 = vadd.f32 %v923, %v931
    %v934 = vtanh.pop %v933
    %936 = vrot.lane.b32.xlu0 %v934, 32
    %v937 = vpop.permute.xlu0 %936
    %v939 = vmul.f32 %v920, %v937
    %940 = vmatprep.subr.bf16.mxu0 0
    %941 = vmatpush1.bf16.msra.mxu0 %v241
    %942 = vmatprep.subr.bf16.mxu0 0
    %943 = vmatpush1.bf16.msra.mxu0 %v242
    %944 = vmatprep.subr.bf16.mxu0 0
    %945 = vmatpush1.bf16.msra.mxu0 0
    %946 = vmatprep.subr.bf16.mxu0 0
    %947 = vmatpush1.bf16.msra.mxu0 0
    %948 = vmatprep.subr.bf16.mxu0 0
    %949 = vmatpush1.bf16.msra.mxu0 0
    %950 = vmatprep.subr.bf16.mxu0 0
    %951 = vmatpush1.bf16.msra.mxu0 0
    %952 = vmatprep.subr.bf16.mxu0 0
    %953 = vmatpush1.bf16.msra.mxu0 0
    %954 = vmatprep.subr.bf16.mxu0 0
    %955 = vmatpush1.bf16.msra.mxu0 0
    %956 = vmatprep.subr.bf16.mxu0 0
    %957 = vmatpush1.bf16.msra.mxu0 0
    %958 = vmatprep.subr.bf16.mxu0 0
    %959 = vmatpush1.bf16.msra.mxu0 0
    %960 = vmatprep.subr.bf16.mxu0 0
    %961 = vmatpush1.bf16.msra.mxu0 0
    %962 = vmatprep.subr.bf16.mxu0 0
    %963 = vmatpush1.bf16.msra.mxu0 0
    %964 = vmatprep.subr.bf16.mxu0 0
    %965 = vmatpush1.bf16.msra.mxu0 0
    %966 = vmatprep.subr.bf16.mxu0 0
    %967 = vmatpush1.bf16.msra.mxu0 0
    %968 = vmatprep.subr.bf16.mxu0 0
    %969 = vmatpush1.bf16.msra.mxu0 0
    %970 = vmatprep.subr.bf16.mxu0 0
    %971 = vmatpush1.bf16.msra.mxu0 0
    %972 = vmatprep.mubr.bf16.mxu0 0
    %973 = vmatmul.mubr.bf16.gmra.mrb[0].mxu0 %v707
    %v974 = vpop.f32.mrb[0].mxu0
    %v975 = vadd.f32 0.0, %v974
    %v976 = vpop.f32.mrb[0].mxu0
    %v977 = vpop.f32.mrb[0].mxu0
    %v978 = vpop.f32.mrb[0].mxu0
    %979 = vdwg.mxu0
    %v980 = vadd.f32 %v214, %v975
    %v981 = vxor.u32 %v980, 2147483648
    %v982 = vmul.f32 %v981, 1.442695
    %v983 = vpow.pop %v982
    %v984 = vadd.f32 %v983, 1.0
    %v985 = vrcp.pop %v984
    %v986 = vmul.f32 1.0, %v985
    %v987 = vmul.f32 %v986, 2.0
    %v988 = vsub.f32 %v987, 1.0
    %v989 = vmul.f32 %v986, %v695
    %991 = vrot.lane.b32.xlu0 %v988, 32
    %v992 = vpop.permute.xlu0 %991
    %v994 = vmul.f32 %v986, %v992
    %996 = vrot.lane.b32.xlu0 %v994, 32
    %v997 = vpop.permute.xlu0 %996
    %v999 = vadd.f32 %v989, %v997
    %v1000 = vtanh.pop %v999
    %1002 = vrot.lane.b32.xlu0 %v1000, 32
    %v1003 = vpop.permute.xlu0 %1002
    %v1005 = vmul.f32 %v986, %v1003
    %v1006 = vpack.c.bf16 %v1005, %v1005
    %1008 = vrot.lane.b32.xlu0 %v1006, 64
    %v1009 = vpop.permute.xlu0 %1008
    %v1011 = vsel %vm245, %v1009, 0
    %1013 = vmatprep.subr.bf16.mxu0 0
    %1014 = vmatpush1.bf16.msra.mxu0 %v333
    %1015 = vmatprep.subr.bf16.mxu0 0
    %1016 = vmatpush1.bf16.msra.mxu0 %v334
    %1017 = vmatprep.subr.bf16.mxu0 0
    %1018 = vmatpush1.bf16.msra.mxu0 0
    %1019 = vmatprep.subr.bf16.mxu0 0
    %1020 = vmatpush1.bf16.msra.mxu0 0
    %1021 = vmatprep.subr.bf16.mxu0 0
    %1022 = vmatpush1.bf16.msra.mxu0 0
    %1023 = vmatprep.subr.bf16.mxu0 0
    %1024 = vmatpush1.bf16.msra.mxu0 0
    %1025 = vmatprep.subr.bf16.mxu0 0
    %1026 = vmatpush1.bf16.msra.mxu0 0
    %1027 = vmatprep.subr.bf16.mxu0 0
    %1028 = vmatpush1.bf16.msra.mxu0 0
    %1029 = vmatprep.subr.bf16.mxu0 0
    %1030 = vmatpush1.bf16.msra.mxu0 0
    %1031 = vmatprep.subr.bf16.mxu0 0
    %1032 = vmatpush1.bf16.msra.mxu0 0
    %1033 = vmatprep.subr.bf16.mxu0 0
    %1034 = vmatpush1.bf16.msra.mxu0 0
    %1035 = vmatprep.subr.bf16.mxu0 0
    %1036 = vmatpush1.bf16.msra.mxu0 0
    %1037 = vmatprep.subr.bf16.mxu0 0
    %1038 = vmatpush1.bf16.msra.mxu0 0
    %1039 = vmatprep.subr.bf16.mxu0 0
    %1040 = vmatpush1.bf16.msra.mxu0 0
    %1041 = vmatprep.subr.bf16.mxu0 0
    %1042 = vmatpush1.bf16.msra.mxu0 0
    %1043 = vmatprep.subr.bf16.mxu0 0
    %1044 = vmatpush1.bf16.msra.mxu0 0
    %1045 = vmatprep.mubr.bf16.mxu0 0
    %1046 = vmatmul.mubr.bf16.gmra.mrb[0].mxu0 %v1011
    %v1047 = vpop.f32.mrb[0].mxu0
    %v1048 = vadd.f32 %v320, %v1047
    %v1049 = vpop.f32.mrb[0].mxu0
    %v1050 = vpop.f32.mrb[0].mxu0
    %v1051 = vpop.f32.mrb[0].mxu0
    %1052 = vdwg.mxu0
    %1053 = vmatprep.subr.bf16.mxu0 0
    %1054 = vmatpush1.bf16.msra.mxu0 %v501
    %1055 = vmatprep.subr.bf16.mxu0 0
    %1056 = vmatpush1.bf16.msra.mxu0 %v502
    %1057 = vmatprep.subr.bf16.mxu0 0
    %1058 = vmatpush1.bf16.msra.mxu0 0
    %1059 = vmatprep.subr.bf16.mxu0 0
    %1060 = vmatpush1.bf16.msra.mxu0 0
    %1061 = vmatprep.subr.bf16.mxu0 0
    %1062 = vmatpush1.bf16.msra.mxu0 0
    %1063 = vmatprep.subr.bf16.mxu0 0
    %1064 = vmatpush1.bf16.msra.mxu0 0
    %1065 = vmatprep.subr.bf16.mxu0 0
    %1066 = vmatpush1.bf16.msra.mxu0 0
    %1067 = vmatprep.subr.bf16.mxu0 0
    %1068 = vmatpush1.bf16.msra.mxu0 0
    %1069 = vmatprep.subr.bf16.mxu0 0
    %1070 = vmatpush1.bf16.msra.mxu0 0
    %1071 = vmatprep.subr.bf16.mxu0 0
    %1072 = vmatpush1.bf16.msra.mxu0 0
    %1073 = vmatprep.subr.bf16.mxu0 0
    %1074 = vmatpush1.bf16.msra.mxu0 0
    %1075 = vmatprep.subr.bf16.mxu0 0
    %1076 = vmatpush1.bf16.msra.mxu0 0
    %1077 = vmatprep.subr.bf16.mxu0 0
    %1078 = vmatpush1.bf16.msra.mxu0 0
    %1079 = vmatprep.subr.bf16.mxu0 0
    %1080 = vmatpush1.bf16.msra.mxu0 0
    %1081 = vmatprep.subr.bf16.mxu0 0
    %1082 = vmatpush1.bf16.msra.mxu0 0
    %1083 = vmatprep.subr.bf16.mxu0 0
    %1084 = vmatpush1.bf16.msra.mxu0 0
    %1085 = vmatprep.mubr.bf16.mxu0 0
    %1086 = vmatmul.mubr.bf16.gmra.mrb[0].mxu0 %v820
    %v1087 = vpop.f32.mrb[0].mxu0
    %v1088 = vadd.f32 0.0, %v1087
    %v1089 = vpop.f32.mrb[0].mxu0
    %v1090 = vpop.f32.mrb[0].mxu0
    %v1091 = vpop.f32.mrb[0].mxu0
    %1092 = vdwg.mxu0
    %v1093 = vadd.f32 %v744, %v1088
    %v1094 = vxor.u32 %v1093, 2147483648
    %v1095 = vmul.f32 %v1094, 1.442695
    %v1096 = vpow.pop %v1095
    %v1097 = vadd.f32 %v1096, 1.0
    %v1098 = vrcp.pop %v1097
    %v1099 = vmul.f32 1.0, %v1098
    %v1100 = vmul.f32 %v1099, 2.0
    %v1101 = vsub.f32 %v1100, 1.0
    %v1102 = vmul.f32 %v1099, %v808
    %1104 = vrot.lane.b32.xlu0 %v1101, 32
    %v1105 = vpop.permute.xlu0 %1104
    %v1107 = vmul.f32 %v1099, %v1105
    %1109 = vrot.lane.b32.xlu0 %v1107, 32
    %v1110 = vpop.permute.xlu0 %1109
    %v1112 = vadd.f32 %v1102, %v1110
    %v1113 = vtanh.pop %v1112
    %1115 = vrot.lane.b32.xlu0 %v1113, 32
    %v1116 = vpop.permute.xlu0 %1115
    %v1118 = vmul.f32 %v1099, %v1116
    %v1119 = vpack.c.bf16 %v1118, %v1118
    %1121 = vrot.lane.b32.xlu0 %v1119, 64
    %v1122 = vpop.permute.xlu0 %1121
    %v1124 = vsel %vm245, %v1122, 0
    %1126 = vmatprep.subr.bf16.mxu0 0
    %1127 = vmatpush1.bf16.msra.mxu0 %v589
    %1128 = vmatprep.subr.bf16.mxu0 0
    %1129 = vmatpush1.bf16.msra.mxu0 %v590
    %1130 = vmatprep.subr.bf16.mxu0 0
    %1131 = vmatpush1.bf16.msra.mxu0 0
    %1132 = vmatprep.subr.bf16.mxu0 0
    %1133 = vmatpush1.bf16.msra.mxu0 0
    %1134 = vmatprep.subr.bf16.mxu0 0
    %1135 = vmatpush1.bf16.msra.mxu0 0
    %1136 = vmatprep.subr.bf16.mxu0 0
    %1137 = vmatpush1.bf16.msra.mxu0 0
    %1138 = vmatprep.subr.bf16.mxu0 0
    %1139 = vmatpush1.bf16.msra.mxu0 0
    %1140 = vmatprep.subr.bf16.mxu0 0
    %1141 = vmatpush1.bf16.msra.mxu0 0
    %1142 = vmatprep.subr.bf16.mxu0 0
    %1143 = vmatpush1.bf16.msra.mxu0 0
    %1144 = vmatprep.subr.bf16.mxu0 0
    %1145 = vmatpush1.bf16.msra.mxu0 0
    %1146 = vmatprep.subr.bf16.mxu0 0
    %1147 = vmatpush1.bf16.msra.mxu0 0
    %1148 = vmatprep.subr.bf16.mxu0 0
    %1149 = vmatpush1.bf16.msra.mxu0 0
    %1150 = vmatprep.subr.bf16.mxu0 0
    %1151 = vmatpush1.bf16.msra.mxu0 0
    %1152 = vmatprep.subr.bf16.mxu0 0
    %1153 = vmatpush1.bf16.msra.mxu0 0
    %1154 = vmatprep.subr.bf16.mxu0 0
    %1155 = vmatpush1.bf16.msra.mxu0 0
    %1156 = vmatprep.subr.bf16.mxu0 0
    %1157 = vmatpush1.bf16.msra.mxu0 0
    %1158 = vmatprep.mubr.bf16.mxu0 0
    %1159 = vmatmul.mubr.bf16.gmra.mrb[0].mxu0 %v1124
    %v1160 = vpop.f32.mrb[0].mxu0
    %v1161 = vadd.f32 %v576, %v1160
    %v1162 = vpop.f32.mrb[0].mxu0
    %v1163 = vpop.f32.mrb[0].mxu0
    %v1164 = vpop.f32.mrb[0].mxu0
    %1165 = vdwg.mxu0
    %v1166 = vpack.c.bf16 %v939, %v939
    %1168 = vrot.lane.b32.xlu0 %v1166, 64
    %v1169 = vpop.permute.xlu0 %1168
    %v1171 = vsel %vm245, %v1169, 0
    %1173 = vmatprep.subr.bf16.mxu0 0
    %1174 = vmatpush1.bf16.msra.mxu0 %v870
    %1175 = vmatprep.subr.bf16.mxu0 0
    %1176 = vmatpush1.bf16.msra.mxu0 %v871
    %1177 = vmatprep.subr.bf16.mxu0 0
    %1178 = vmatpush1.bf16.msra.mxu0 0
    %1179 = vmatprep.subr.bf16.mxu0 0
    %1180 = vmatpush1.bf16.msra.mxu0 0
    %1181 = vmatprep.subr.bf16.mxu0 0
    %1182 = vmatpush1.bf16.msra.mxu0 0
    %1183 = vmatprep.subr.bf16.mxu0 0
    %1184 = vmatpush1.bf16.msra.mxu0 0
    %1185 = vmatprep.subr.bf16.mxu0 0
    %1186 = vmatpush1.bf16.msra.mxu0 0
    %1187 = vmatprep.subr.bf16.mxu0 0
    %1188 = vmatpush1.bf16.msra.mxu0 0
    %1189 = vmatprep.subr.bf16.mxu0 0
    %1190 = vmatpush1.bf16.msra.mxu0 0
    %1191 = vmatprep.subr.bf16.mxu0 0
    %1192 = vmatpush1.bf16.msra.mxu0 0
    %1193 = vmatprep.subr.bf16.mxu0 0
    %1194 = vmatpush1.bf16.msra.mxu0 0
    %1195 = vmatprep.subr.bf16.mxu0 0
    %1196 = vmatpush1.bf16.msra.mxu0 0
    %1197 = vmatprep.subr.bf16.mxu0 0
    %1198 = vmatpush1.bf16.msra.mxu0 0
    %1199 = vmatprep.subr.bf16.mxu0 0
    %1200 = vmatpush1.bf16.msra.mxu0 0
    %1201 = vmatprep.subr.bf16.mxu0 0
    %1202 = vmatpush1.bf16.msra.mxu0 0
    %1203 = vmatprep.subr.bf16.mxu0 0
    %1204 = vmatpush1.bf16.msra.mxu0 0
    %1205 = vmatprep.mubr.bf16.mxu0 0
    %1206 = vmatmul.mubr.bf16.gmra.mrb[0].mxu0 %v1171
    %v1207 = vpop.f32.mrb[0].mxu0
    %v1208 = vadd.f32 0.0, %v1207
    %v1209 = vpop.f32.mrb[0].mxu0
    %v1210 = vpop.f32.mrb[0].mxu0
    %v1211 = vpop.f32.mrb[0].mxu0
    %1212 = vdwg.mxu0
    %v1213 = vadd.f32 %v857, %v1208
    %v1214 = vxor.u32 %v1213, 2147483648
    %v1215 = vmul.f32 %v1214, 1.442695
    %v1216 = vpow.pop %v1215
    %v1217 = vadd.f32 %v1216, 1.0
    %v1218 = vrcp.pop %v1217
    %v1219 = vmul.f32 1.0, %v1218
    %v1220 = vmul.f32 %v1219, 2.0
    %v1221 = vsub.f32 %v1220, 1.0
    %v1222 = vmul.f32 %v1219, %v933
    %1224 = vrot.lane.b32.xlu0 %v1221, 32
    %v1225 = vpop.permute.xlu0 %1224
    %v1227 = vmul.f32 %v1219, %v1225
    %1229 = vrot.lane.b32.xlu0 %v1227, 32
    %v1230 = vpop.permute.xlu0 %1229
    %v1232 = vadd.f32 %v1222, %v1230
    %v1233 = vtanh.pop %v1232
    %1235 = vrot.lane.b32.xlu0 %v1233, 32
    %v1236 = vpop.permute.xlu0 %1235
    %v1238 = vmul.f32 %v1219, %v1236
    %1239 = vmatprep.subr.bf16.mxu0 0
    %1240 = vmatpush1.bf16.msra.mxu0 %v241
    %1241 = vmatprep.subr.bf16.mxu0 0
    %1242 = vmatpush1.bf16.msra.mxu0 %v242
    %1243 = vmatprep.subr.bf16.mxu0 0
    %1244 = vmatpush1.bf16.msra.mxu0 0
    %1245 = vmatprep.subr.bf16.mxu0 0
    %1246 = vmatpush1.bf16.msra.mxu0 0
    %1247 = vmatprep.subr.bf16.mxu0 0
    %1248 = vmatpush1.bf16.msra.mxu0 0
    %1249 = vmatprep.subr.bf16.mxu0 0
    %1250 = vmatpush1.bf16.msra.mxu0 0
    %1251 = vmatprep.subr.bf16.mxu0 0
    %1252 = vmatpush1.bf16.msra.mxu0 0
    %1253 = vmatprep.subr.bf16.mxu0 0
    %1254 = vmatpush1.bf16.msra.mxu0 0
    %1255 = vmatprep.subr.bf16.mxu0 0
    %1256 = vmatpush1.bf16.msra.mxu0 0
    %1257 = vmatprep.subr.bf16.mxu0 0
    %1258 = vmatpush1.bf16.msra.mxu0 0
    %1259 = vmatprep.subr.bf16.mxu0 0
    %1260 = vmatpush1.bf16.msra.mxu0 0
    %1261 = vmatprep.subr.bf16.mxu0 0
    %1262 = vmatpush1.bf16.msra.mxu0 0
    %1263 = vmatprep.subr.bf16.mxu0 0
    %1264 = vmatpush1.bf16.msra.mxu0 0
    %1265 = vmatprep.subr.bf16.mxu0 0
    %1266 = vmatpush1.bf16.msra.mxu0 0
    %1267 = vmatprep.subr.bf16.mxu0 0
    %1268 = vmatpush1.bf16.msra.mxu0 0
    %1269 = vmatprep.subr.bf16.mxu0 0
    %1270 = vmatpush1.bf16.msra.mxu0 0
    %1271 = vmatprep.mubr.bf16.mxu0 0
    %1272 = vmatmul.mubr.bf16.gmra.mrb[0].mxu0 %v1011
    %v1273 = vpop.f32.mrb[0].mxu0
    %v1274 = vadd.f32 0.0, %v1273
    %v1275 = vpop.f32.mrb[0].mxu0
    %v1276 = vpop.f32.mrb[0].mxu0
    %v1277 = vpop.f32.mrb[0].mxu0
    %1278 = vdwg.mxu0
    %v1279 = vadd.f32 %v219, %v1274
    %v1280 = vxor.u32 %v1279, 2147483648
    %v1281 = vmul.f32 %v1280, 1.442695
    %v1282 = vpow.pop %v1281
    %v1283 = vadd.f32 %v1282, 1.0
    %v1284 = vrcp.pop %v1283
    %v1285 = vmul.f32 1.0, %v1284
    %v1286 = vmul.f32 %v1285, 2.0
    %v1287 = vsub.f32 %v1286, 1.0
    %v1288 = vmul.f32 %v1285, %v999
    %1290 = vrot.lane.b32.xlu0 %v1287, 32
    %v1291 = vpop.permute.xlu0 %1290
    %v1293 = vmul.f32 %v1285, %v1291
    %1295 = vrot.lane.b32.xlu0 %v1293, 32
    %v1296 = vpop.permute.xlu0 %1295
    %v1298 = vadd.f32 %v1288, %v1296
    %v1299 = vtanh.pop %v1298
    %1301 = vrot.lane.b32.xlu0 %v1299, 32
    %v1302 = vpop.permute.xlu0 %1301
    %v1304 = vmul.f32 %v1285, %v1302
    %v1305 = vpack.c.bf16 %v1304, %v1304
    %1307 = vrot.lane.b32.xlu0 %v1305, 64
    %v1308 = vpop.permute.xlu0 %1307
    %v1310 = vsel %vm245, %v1308, 0
    %1312 = vmatprep.subr.bf16.mxu0 0
    %1313 = vmatpush1.bf16.msra.mxu0 %v333
    %1314 = vmatprep.subr.bf16.mxu0 0
    %1315 = vmatpush1.bf16.msra.mxu0 %v334
    %1316 = vmatprep.subr.bf16.mxu0 0
    %1317 = vmatpush1.bf16.msra.mxu0 0
    %1318 = vmatprep.subr.bf16.mxu0 0
    %1319 = vmatpush1.bf16.msra.mxu0 0
    %1320 = vmatprep.subr.bf16.mxu0 0
    %1321 = vmatpush1.bf16.msra.mxu0 0
    %1322 = vmatprep.subr.bf16.mxu0 0
    %1323 = vmatpush1.bf16.msra.mxu0 0
    %1324 = vmatprep.subr.bf16.mxu0 0
    %1325 = vmatpush1.bf16.msra.mxu0 0
    %1326 = vmatprep.subr.bf16.mxu0 0
    %1327 = vmatpush1.bf16.msra.mxu0 0
    %1328 = vmatprep.subr.bf16.mxu0 0
    %1329 = vmatpush1.bf16.msra.mxu0 0
    %1330 = vmatprep.subr.bf16.mxu0 0
    %1331 = vmatpush1.bf16.msra.mxu0 0
    %1332 = vmatprep.subr.bf16.mxu0 0
    %1333 = vmatpush1.bf16.msra.mxu0 0
    %1334 = vmatprep.subr.bf16.mxu0 0
    %1335 = vmatpush1.bf16.msra.mxu0 0
    %1336 = vmatprep.subr.bf16.mxu0 0
    %1337 = vmatpush1.bf16.msra.mxu0 0
    %1338 = vmatprep.subr.bf16.mxu0 0
    %1339 = vmatpush1.bf16.msra.mxu0 0
    %1340 = vmatprep.subr.bf16.mxu0 0
    %1341 = vmatpush1.bf16.msra.mxu0 0
    %1342 = vmatprep.subr.bf16.mxu0 0
    %1343 = vmatpush1.bf16.msra.mxu0 0
    %1344 = vmatprep.mubr.bf16.mxu0 0
    %1345 = vmatmul.mubr.bf16.gmra.mrb[0].mxu0 %v1310
    %v1346 = vpop.f32.mrb[0].mxu0
    %v1347 = vadd.f32 %v320, %v1346
    %v1348 = vpop.f32.mrb[0].mxu0
    %v1349 = vpop.f32.mrb[0].mxu0
    %v1350 = vpop.f32.mrb[0].mxu0
    %1351 = vdwg.mxu0
    %1352 = vmatprep.subr.bf16.mxu0 0
    %1353 = vmatpush1.bf16.msra.mxu0 %v501
    %1354 = vmatprep.subr.bf16.mxu0 0
    %1355 = vmatpush1.bf16.msra.mxu0 %v502
    %1356 = vmatprep.subr.bf16.mxu0 0
    %1357 = vmatpush1.bf16.msra.mxu0 0
    %1358 = vmatprep.subr.bf16.mxu0 0
    %1359 = vmatpush1.bf16.msra.mxu0 0
    %1360 = vmatprep.subr.bf16.mxu0 0
    %1361 = vmatpush1.bf16.msra.mxu0 0
    %1362 = vmatprep.subr.bf16.mxu0 0
    %1363 = vmatpush1.bf16.msra.mxu0 0
    %1364 = vmatprep.subr.bf16.mxu0 0
    %1365 = vmatpush1.bf16.msra.mxu0 0
    %1366 = vmatprep.subr.bf16.mxu0 0
    %1367 = vmatpush1.bf16.msra.mxu0 0
    %1368 = vmatprep.subr.bf16.mxu0 0
    %1369 = vmatpush1.bf16.msra.mxu0 0
    %1370 = vmatprep.subr.bf16.mxu0 0
    %1371 = vmatpush1.bf16.msra.mxu0 0
    %1372 = vmatprep.subr.bf16.mxu0 0
    %1373 = vmatpush1.bf16.msra.mxu0 0
    %1374 = vmatprep.subr.bf16.mxu0 0
    %1375 = vmatpush1.bf16.msra.mxu0 0
    %1376 = vmatprep.subr.bf16.mxu0 0
    %1377 = vmatpush1.bf16.msra.mxu0 0
    %1378 = vmatprep.subr.bf16.mxu0 0
    %1379 = vmatpush1.bf16.msra.mxu0 0
    %1380 = vmatprep.subr.bf16.mxu0 0
    %1381 = vmatpush1.bf16.msra.mxu0 0
    %1382 = vmatprep.subr.bf16.mxu0 0
    %1383 = vmatpush1.bf16.msra.mxu0 0
    %1384 = vmatprep.mubr.bf16.mxu0 0
    %1385 = vmatmul.mubr.bf16.gmra.mrb[0].mxu0 %v1124
    %v1386 = vpop.f32.mrb[0].mxu0
    %v1387 = vadd.f32 0.0, %v1386
    %v1388 = vpop.f32.mrb[0].mxu0
    %v1389 = vpop.f32.mrb[0].mxu0
    %v1390 = vpop.f32.mrb[0].mxu0
    %1391 = vdwg.mxu0
    %v1392 = vadd.f32 %v1048, %v1387
    %v1393 = vxor.u32 %v1392, 2147483648
    %v1394 = vmul.f32 %v1393, 1.442695
    %v1395 = vpow.pop %v1394
    %v1396 = vadd.f32 %v1395, 1.0
    %v1397 = vrcp.pop %v1396
    %v1398 = vmul.f32 1.0, %v1397
    %v1399 = vmul.f32 %v1398, 2.0
    %v1400 = vsub.f32 %v1399, 1.0
    %v1401 = vmul.f32 %v1398, %v1112
    %1403 = vrot.lane.b32.xlu0 %v1400, 32
    %v1404 = vpop.permute.xlu0 %1403
    %v1406 = vmul.f32 %v1398, %v1404
    %1408 = vrot.lane.b32.xlu0 %v1406, 32
    %v1409 = vpop.permute.xlu0 %1408
    %v1411 = vadd.f32 %v1401, %v1409
    %v1412 = vtanh.pop %v1411
    %1414 = vrot.lane.b32.xlu0 %v1412, 32
    %v1415 = vpop.permute.xlu0 %1414
    %v1417 = vmul.f32 %v1398, %v1415
    %v1418 = vpack.c.bf16 %v1417, %v1417
    %1420 = vrot.lane.b32.xlu0 %v1418, 64
    %v1421 = vpop.permute.xlu0 %1420
    %v1423 = vsel %vm245, %v1421, 0
    %1425 = vmatprep.subr.bf16.mxu0 0
    %1426 = vmatpush1.bf16.msra.mxu0 %v589
    %1427 = vmatprep.subr.bf16.mxu0 0
    %1428 = vmatpush1.bf16.msra.mxu0 %v590
    %1429 = vmatprep.subr.bf16.mxu0 0
    %1430 = vmatpush1.bf16.msra.mxu0 0
    %1431 = vmatprep.subr.bf16.mxu0 0
    %1432 = vmatpush1.bf16.msra.mxu0 0
    %1433 = vmatprep.subr.bf16.mxu0 0
    %1434 = vmatpush1.bf16.msra.mxu0 0
    %1435 = vmatprep.subr.bf16.mxu0 0
    %1436 = vmatpush1.bf16.msra.mxu0 0
    %1437 = vmatprep.subr.bf16.mxu0 0
    %1438 = vmatpush1.bf16.msra.mxu0 0
    %1439 = vmatprep.subr.bf16.mxu0 0
    %1440 = vmatpush1.bf16.msra.mxu0 0
    %1441 = vmatprep.subr.bf16.mxu0 0
    %1442 = vmatpush1.bf16.msra.mxu0 0
    %1443 = vmatprep.subr.bf16.mxu0 0
    %1444 = vmatpush1.bf16.msra.mxu0 0
    %1445 = vmatprep.subr.bf16.mxu0 0
    %1446 = vmatpush1.bf16.msra.mxu0 0
    %1447 = vmatprep.subr.bf16.mxu0 0
    %1448 = vmatpush1.bf16.msra.mxu0 0
    %1449 = vmatprep.subr.bf16.mxu0 0
    %1450 = vmatpush1.bf16.msra.mxu0 0
    %1451 = vmatprep.subr.bf16.mxu0 0
    %1452 = vmatpush1.bf16.msra.mxu0 0
    %1453 = vmatprep.subr.bf16.mxu0 0
    %1454 = vmatpush1.bf16.msra.mxu0 0
    %1455 = vmatprep.subr.bf16.mxu0 0
    %1456 = vmatpush1.bf16.msra.mxu0 0
    %1457 = vmatprep.mubr.bf16.mxu0 0
    %1458 = vmatmul.mubr.bf16.gmra.mrb[0].mxu0 %v1423
    %v1459 = vpop.f32.mrb[0].mxu0
    %v1460 = vadd.f32 %v576, %v1459
    %v1461 = vpop.f32.mrb[0].mxu0
    %v1462 = vpop.f32.mrb[0].mxu0
    %v1463 = vpop.f32.mrb[0].mxu0
    %1464 = vdwg.mxu0
    %v1465 = vpack.c.bf16 %v1238, %v1238
    %1467 = vrot.lane.b32.xlu0 %v1465, 64
    %v1468 = vpop.permute.xlu0 %1467
    %v1470 = vsel %vm245, %v1468, 0
    %1472 = vmatprep.subr.bf16.mxu0 0
    %1473 = vmatpush1.bf16.msra.mxu0 %v870
    %1474 = vmatprep.subr.bf16.mxu0 0
    %1475 = vmatpush1.bf16.msra.mxu0 %v871
    %1476 = vmatprep.subr.bf16.mxu0 0
    %1477 = vmatpush1.bf16.msra.mxu0 0
    %1478 = vmatprep.subr.bf16.mxu0 0
    %1479 = vmatpush1.bf16.msra.mxu0 0
    %1480 = vmatprep.subr.bf16.mxu0 0
    %1481 = vmatpush1.bf16.msra.mxu0 0
    %1482 = vmatprep.subr.bf16.mxu0 0
    %1483 = vmatpush1.bf16.msra.mxu0 0
    %1484 = vmatprep.subr.bf16.mxu0 0
    %1485 = vmatpush1.bf16.msra.mxu0 0
    %1486 = vmatprep.subr.bf16.mxu0 0
    %1487 = vmatpush1.bf16.msra.mxu0 0
    %1488 = vmatprep.subr.bf16.mxu0 0
    %1489 = vmatpush1.bf16.msra.mxu0 0
    %1490 = vmatprep.subr.bf16.mxu0 0
    %1491 = vmatpush1.bf16.msra.mxu0 0
    %1492 = vmatprep.subr.bf16.mxu0 0
    %1493 = vmatpush1.bf16.msra.mxu0 0
    %1494 = vmatprep.subr.bf16.mxu0 0
    %1495 = vmatpush1.bf16.msra.mxu0 0
    %1496 = vmatprep.subr.bf16.mxu0 0
    %1497 = vmatpush1.bf16.msra.mxu0 0
    %1498 = vmatprep.subr.bf16.mxu0 0
    %1499 = vmatpush1.bf16.msra.mxu0 0
    %1500 = vmatprep.subr.bf16.mxu0 0
    %1501 = vmatpush1.bf16.msra.mxu0 0
    %1502 = vmatprep.subr.bf16.mxu0 0
    %1503 = vmatpush1.bf16.msra.mxu0 0
    %1504 = vmatprep.mubr.bf16.mxu0 0
    %1505 = vmatmul.mubr.bf16.gmra.mrb[0].mxu0 %v1470
    %v1506 = vpop.f32.mrb[0].mxu0
    %v1507 = vadd.f32 0.0, %v1506
    %v1508 = vpop.f32.mrb[0].mxu0
    %v1509 = vpop.f32.mrb[0].mxu0
    %v1510 = vpop.f32.mrb[0].mxu0
    %1511 = vdwg.mxu0
    %v1512 = vadd.f32 %v1161, %v1507
    %v1513 = vxor.u32 %v1512, 2147483648
    %v1514 = vmul.f32 %v1513, 1.442695
    %v1515 = vpow.pop %v1514
    %v1516 = vadd.f32 %v1515, 1.0
    %v1517 = vrcp.pop %v1516
    %v1518 = vmul.f32 1.0, %v1517
    %v1519 = vmul.f32 %v1518, 2.0
    %v1520 = vsub.f32 %v1519, 1.0
    %v1521 = vmul.f32 %v1518, %v1232
    %1523 = vrot.lane.b32.xlu0 %v1520, 32
    %v1524 = vpop.permute.xlu0 %1523
    %v1526 = vmul.f32 %v1518, %v1524
    %1528 = vrot.lane.b32.xlu0 %v1526, 32
    %v1529 = vpop.permute.xlu0 %1528
    %v1531 = vadd.f32 %v1521, %v1529
    %v1532 = vtanh.pop %v1531
    %1534 = vrot.lane.b32.xlu0 %v1532, 32
    %v1535 = vpop.permute.xlu0 %1534
    %v1537 = vmul.f32 %v1518, %v1535
    %1538 = vmatprep.subr.bf16.mxu0 0
    %1539 = vmatpush1.bf16.msra.mxu0 %v241
    %1540 = vmatprep.subr.bf16.mxu0 0
    %1541 = vmatpush1.bf16.msra.mxu0 %v242
    %1542 = vmatprep.subr.bf16.mxu0 0
    %1543 = vmatpush1.bf16.msra.mxu0 0
    %1544 = vmatprep.subr.bf16.mxu0 0
    %1545 = vmatpush1.bf16.msra.mxu0 0
    %1546 = vmatprep.subr.bf16.mxu0 0
    %1547 = vmatpush1.bf16.msra.mxu0 0
    %1548 = vmatprep.subr.bf16.mxu0 0
    %1549 = vmatpush1.bf16.msra.mxu0 0
    %1550 = vmatprep.subr.bf16.mxu0 0
    %1551 = vmatpush1.bf16.msra.mxu0 0
    %1552 = vmatprep.subr.bf16.mxu0 0
    %1553 = vmatpush1.bf16.msra.mxu0 0
    %1554 = vmatprep.subr.bf16.mxu0 0
    %1555 = vmatpush1.bf16.msra.mxu0 0
    %1556 = vmatprep.subr.bf16.mxu0 0
    %1557 = vmatpush1.bf16.msra.mxu0 0
    %1558 = vmatprep.subr.bf16.mxu0 0
    %1559 = vmatpush1.bf16.msra.mxu0 0
    %1560 = vmatprep.subr.bf16.mxu0 0
    %1561 = vmatpush1.bf16.msra.mxu0 0
    %1562 = vmatprep.subr.bf16.mxu0 0
    %1563 = vmatpush1.bf16.msra.mxu0 0
    %1564 = vmatprep.subr.bf16.mxu0 0
    %1565 = vmatpush1.bf16.msra.mxu0 0
    %1566 = vmatprep.subr.bf16.mxu0 0
    %1567 = vmatpush1.bf16.msra.mxu0 0
    %1568 = vmatprep.subr.bf16.mxu0 0
    %1569 = vmatpush1.bf16.msra.mxu0 0
    %1570 = vmatprep.mubr.bf16.mxu0 0
    %1571 = vmatmul.mubr.bf16.gmra.mrb[0].mxu0 %v1310
    %v1572 = vpop.f32.mrb[0].mxu0
    %v1573 = vadd.f32 0.0, %v1572
    %v1574 = vpop.f32.mrb[0].mxu0
    %v1575 = vpop.f32.mrb[0].mxu0
    %v1576 = vpop.f32.mrb[0].mxu0
    %1577 = vdwg.mxu0
    %v1578 = vadd.f32 %v222, %v1573
    %v1579 = vxor.u32 %v1578, 2147483648
    %v1580 = vmul.f32 %v1579, 1.442695
    %v1581 = vpow.pop %v1580
    %v1582 = vadd.f32 %v1581, 1.0
    %v1583 = vrcp.pop %v1582
    %v1584 = vmul.f32 1.0, %v1583
    %v1585 = vmul.f32 %v1584, 2.0
    %v1586 = vsub.f32 %v1585, 1.0
    %v1587 = vmul.f32 %v1584, %v1298
    %1589 = vrot.lane.b32.xlu0 %v1586, 32
    %v1590 = vpop.permute.xlu0 %1589
    %v1592 = vmul.f32 %v1584, %v1590
    %1594 = vrot.lane.b32.xlu0 %v1592, 32
    %v1595 = vpop.permute.xlu0 %1594
    %v1597 = vadd.f32 %v1587, %v1595
    %v1598 = vtanh.pop %v1597
    %1600 = vrot.lane.b32.xlu0 %v1598, 32
    %v1601 = vpop.permute.xlu0 %1600
    %v1603 = vmul.f32 %v1584, %v1601
    %v1604 = vpack.c.bf16 %v1603, %v1603
    %1606 = vrot.lane.b32.xlu0 %v1604, 64
    %v1607 = vpop.permute.xlu0 %1606
    %v1609 = vsel %vm245, %v1607, 0
    %1611 = vmatprep.subr.bf16.mxu0 0
    %1612 = vmatpush1.bf16.msra.mxu0 %v333
    %1613 = vmatprep.subr.bf16.mxu0 0
    %1614 = vmatpush1.bf16.msra.mxu0 %v334
    %1615 = vmatprep.subr.bf16.mxu0 0
    %1616 = vmatpush1.bf16.msra.mxu0 0
    %1617 = vmatprep.subr.bf16.mxu0 0
    %1618 = vmatpush1.bf16.msra.mxu0 0
    %1619 = vmatprep.subr.bf16.mxu0 0
    %1620 = vmatpush1.bf16.msra.mxu0 0
    %1621 = vmatprep.subr.bf16.mxu0 0
    %1622 = vmatpush1.bf16.msra.mxu0 0
    %1623 = vmatprep.subr.bf16.mxu0 0
    %1624 = vmatpush1.bf16.msra.mxu0 0
    %1625 = vmatprep.subr.bf16.mxu0 0
    %1626 = vmatpush1.bf16.msra.mxu0 0
    %1627 = vmatprep.subr.bf16.mxu0 0
    %1628 = vmatpush1.bf16.msra.mxu0 0
    %1629 = vmatprep.subr.bf16.mxu0 0
    %1630 = vmatpush1.bf16.msra.mxu0 0
    %1631 = vmatprep.subr.bf16.mxu0 0
    %1632 = vmatpush1.bf16.msra.mxu0 0
    %1633 = vmatprep.subr.bf16.mxu0 0
    %1634 = vmatpush1.bf16.msra.mxu0 0
    %1635 = vmatprep.subr.bf16.mxu0 0
    %1636 = vmatpush1.bf16.msra.mxu0 0
    %1637 = vmatprep.subr.bf16.mxu0 0
    %1638 = vmatpush1.bf16.msra.mxu0 0
    %1639 = vmatprep.subr.bf16.mxu0 0
    %1640 = vmatpush1.bf16.msra.mxu0 0
    %1641 = vmatprep.subr.bf16.mxu0 0
    %1642 = vmatpush1.bf16.msra.mxu0 0
    %1643 = vmatprep.mubr.bf16.mxu0 0
    %1644 = vmatmul.mubr.bf16.gmra.mrb[0].mxu0 %v1609
    %v1645 = vpop.f32.mrb[0].mxu0
    %v1646 = vadd.f32 %v320, %v1645
    %v1647 = vpop.f32.mrb[0].mxu0
    %v1648 = vpop.f32.mrb[0].mxu0
    %v1649 = vpop.f32.mrb[0].mxu0
    %1650 = vdwg.mxu0
    %1651 = vmatprep.subr.bf16.mxu0 0
    %1652 = vmatpush1.bf16.msra.mxu0 %v501
    %1653 = vmatprep.subr.bf16.mxu0 0
    %1654 = vmatpush1.bf16.msra.mxu0 %v502
    %1655 = vmatprep.subr.bf16.mxu0 0
    %1656 = vmatpush1.bf16.msra.mxu0 0
    %1657 = vmatprep.subr.bf16.mxu0 0
    %1658 = vmatpush1.bf16.msra.mxu0 0
    %1659 = vmatprep.subr.bf16.mxu0 0
    %1660 = vmatpush1.bf16.msra.mxu0 0
    %1661 = vmatprep.subr.bf16.mxu0 0
    %1662 = vmatpush1.bf16.msra.mxu0 0
    %1663 = vmatprep.subr.bf16.mxu0 0
    %1664 = vmatpush1.bf16.msra.mxu0 0
    %1665 = vmatprep.subr.bf16.mxu0 0
    %1666 = vmatpush1.bf16.msra.mxu0 0
    %1667 = vmatprep.subr.bf16.mxu0 0
    %1668 = vmatpush1.bf16.msra.mxu0 0
    %1669 = vmatprep.subr.bf16.mxu0 0
    %1670 = vmatpush1.bf16.msra.mxu0 0
    %1671 = vmatprep.subr.bf16.mxu0 0
    %1672 = vmatpush1.bf16.msra.mxu0 0
    %1673 = vmatprep.subr.bf16.mxu0 0
    %1674 = vmatpush1.bf16.msra.mxu0 0
    %1675 = vmatprep.subr.bf16.mxu0 0
    %1676 = vmatpush1.bf16.msra.mxu0 0
    %1677 = vmatprep.subr.bf16.mxu0 0
    %1678 = vmatpush1.bf16.msra.mxu0 0
    %1679 = vmatprep.subr.bf16.mxu0 0
    %1680 = vmatpush1.bf16.msra.mxu0 0
    %1681 = vmatprep.subr.bf16.mxu0 0
    %1682 = vmatpush1.bf16.msra.mxu0 0
    %1683 = vmatprep.mubr.bf16.mxu0 0
    %1684 = vmatmul.mubr.bf16.gmra.mrb[0].mxu0 %v1423
    %v1685 = vpop.f32.mrb[0].mxu0
    %v1686 = vadd.f32 0.0, %v1685
    %v1687 = vpop.f32.mrb[0].mxu0
    %v1688 = vpop.f32.mrb[0].mxu0
    %v1689 = vpop.f32.mrb[0].mxu0
    %1690 = vdwg.mxu0
    %v1691 = vadd.f32 %v1347, %v1686
    %v1692 = vxor.u32 %v1691, 2147483648
    %v1693 = vmul.f32 %v1692, 1.442695
    %v1694 = vpow.pop %v1693
    %v1695 = vadd.f32 %v1694, 1.0
    %v1696 = vrcp.pop %v1695
    %v1697 = vmul.f32 1.0, %v1696
    %v1698 = vmul.f32 %v1697, 2.0
    %v1699 = vsub.f32 %v1698, 1.0
    %v1700 = vmul.f32 %v1697, %v1411
    %1702 = vrot.lane.b32.xlu0 %v1699, 32
    %v1703 = vpop.permute.xlu0 %1702
    %v1705 = vmul.f32 %v1697, %v1703
    %1707 = vrot.lane.b32.xlu0 %v1705, 32
    %v1708 = vpop.permute.xlu0 %1707
    %v1710 = vadd.f32 %v1700, %v1708
    %v1711 = vtanh.pop %v1710
    %1713 = vrot.lane.b32.xlu0 %v1711, 32
    %v1714 = vpop.permute.xlu0 %1713
    %v1716 = vmul.f32 %v1697, %v1714
    %v1717 = vpack.c.bf16 %v1716, %v1716
    %1719 = vrot.lane.b32.xlu0 %v1717, 64
    %v1720 = vpop.permute.xlu0 %1719
    %v1722 = vsel %vm245, %v1720, 0
    %1724 = vmatprep.subr.bf16.mxu0 0
    %1725 = vmatpush1.bf16.msra.mxu0 %v589
    %1726 = vmatprep.subr.bf16.mxu0 0
    %1727 = vmatpush1.bf16.msra.mxu0 %v590
    %1728 = vmatprep.subr.bf16.mxu0 0
    %1729 = vmatpush1.bf16.msra.mxu0 0
    %1730 = vmatprep.subr.bf16.mxu0 0
    %1731 = vmatpush1.bf16.msra.mxu0 0
    %1732 = vmatprep.subr.bf16.mxu0 0
    %1733 = vmatpush1.bf16.msra.mxu0 0
    %1734 = vmatprep.subr.bf16.mxu0 0
    %1735 = vmatpush1.bf16.msra.mxu0 0
    %1736 = vmatprep.subr.bf16.mxu0 0
    %1737 = vmatpush1.bf16.msra.mxu0 0
    %1738 = vmatprep.subr.bf16.mxu0 0
    %1739 = vmatpush1.bf16.msra.mxu0 0
    %1740 = vmatprep.subr.bf16.mxu0 0
    %1741 = vmatpush1.bf16.msra.mxu0 0
    %1742 = vmatprep.subr.bf16.mxu0 0
    %1743 = vmatpush1.bf16.msra.mxu0 0
    %1744 = vmatprep.subr.bf16.mxu0 0
    %1745 = vmatpush1.bf16.msra.mxu0 0
    %1746 = vmatprep.subr.bf16.mxu0 0
    %1747 = vmatpush1.bf16.msra.mxu0 0
    %1748 = vmatprep.subr.bf16.mxu0 0
    %1749 = vmatpush1.bf16.msra.mxu0 0
    %1750 = vmatprep.subr.bf16.mxu0 0
    %1751 = vmatpush1.bf16.msra.mxu0 0
    %1752 = vmatprep.subr.bf16.mxu0 0
    %1753 = vmatpush1.bf16.msra.mxu0 0
    %1754 = vmatprep.subr.bf16.mxu0 0
    %1755 = vmatpush1.bf16.msra.mxu0 0
    %1756 = vmatprep.mubr.bf16.mxu0 0
    %1757 = vmatmul.mubr.bf16.gmra.mrb[0].mxu0 %v1722
    %v1758 = vpop.f32.mrb[0].mxu0
    %v1759 = vadd.f32 %v576, %v1758
    %v1760 = vpop.f32.mrb[0].mxu0
    %v1761 = vpop.f32.mrb[0].mxu0
    %v1762 = vpop.f32.mrb[0].mxu0
    %1763 = vdwg.mxu0
    %v1764 = vpack.c.bf16 %v1537, %v1537
    %1766 = vrot.lane.b32.xlu0 %v1764, 64
    %v1767 = vpop.permute.xlu0 %1766
    %v1769 = vsel %vm245, %v1767, 0
    %1771 = vmatprep.subr.bf16.mxu0 0
    %1772 = vmatpush1.bf16.msra.mxu0 %v870
    %1773 = vmatprep.subr.bf16.mxu0 0
    %1774 = vmatpush1.bf16.msra.mxu0 %v871
    %1775 = vmatprep.subr.bf16.mxu0 0
    %1776 = vmatpush1.bf16.msra.mxu0 0
    %1777 = vmatprep.subr.bf16.mxu0 0
    %1778 = vmatpush1.bf16.msra.mxu0 0
    %1779 = vmatprep.subr.bf16.mxu0 0
    %1780 = vmatpush1.bf16.msra.mxu0 0
    %1781 = vmatprep.subr.bf16.mxu0 0
    %1782 = vmatpush1.bf16.msra.mxu0 0
    %1783 = vmatprep.subr.bf16.mxu0 0
    %1784 = vmatpush1.bf16.msra.mxu0 0
    %1785 = vmatprep.subr.bf16.mxu0 0
    %1786 = vmatpush1.bf16.msra.mxu0 0
    %1787 = vmatprep.subr.bf16.mxu0 0
    %1788 = vmatpush1.bf16.msra.mxu0 0
    %1789 = vmatprep.subr.bf16.mxu0 0
    %1790 = vmatpush1.bf16.msra.mxu0 0
    %1791 = vmatprep.subr.bf16.mxu0 0
    %1792 = vmatpush1.bf16.msra.mxu0 0
    %1793 = vmatprep.subr.bf16.mxu0 0
    %1794 = vmatpush1.bf16.msra.mxu0 0
    %1795 = vmatprep.subr.bf16.mxu0 0
    %1796 = vmatpush1.bf16.msra.mxu0 0
    %1797 = vmatprep.subr.bf16.mxu0 0
    %1798 = vmatpush1.bf16.msra.mxu0 0
    %1799 = vmatprep.subr.bf16.mxu0 0
    %1800 = vmatpush1.bf16.msra.mxu0 0
    %1801 = vmatprep.subr.bf16.mxu0 0
    %1802 = vmatpush1.bf16.msra.mxu0 0
    %1803 = vmatprep.mubr.bf16.mxu0 0
    %1804 = vmatmul.mubr.bf16.gmra.mrb[0].mxu0 %v1769
    %v1805 = vpop.f32.mrb[0].mxu0
    %v1806 = vadd.f32 0.0, %v1805
    %v1807 = vpop.f32.mrb[0].mxu0
    %v1808 = vpop.f32.mrb[0].mxu0
    %v1809 = vpop.f32.mrb[0].mxu0
    %1810 = vdwg.mxu0
    %v1811 = vadd.f32 %v1460, %v1806
    %v1812 = vxor.u32 %v1811, 2147483648
    %v1813 = vmul.f32 %v1812, 1.442695
    %v1814 = vpow.pop %v1813
    %v1815 = vadd.f32 %v1814, 1.0
    %v1816 = vrcp.pop %v1815
    %v1817 = vmul.f32 1.0, %v1816
    %v1818 = vmul.f32 %v1817, 2.0
    %v1819 = vsub.f32 %v1818, 1.0
    %v1820 = vmul.f32 %v1817, %v1531
    %1822 = vrot.lane.b32.xlu0 %v1819, 32
    %v1823 = vpop.permute.xlu0 %1822
    %v1825 = vmul.f32 %v1817, %v1823
    %1827 = vrot.lane.b32.xlu0 %v1825, 32
    %v1828 = vpop.permute.xlu0 %1827
    %v1830 = vadd.f32 %v1820, %v1828
    %v1831 = vtanh.pop %v1830
    %1833 = vrot.lane.b32.xlu0 %v1831, 32
    %v1834 = vpop.permute.xlu0 %1833
    %v1836 = vmul.f32 %v1817, %v1834
    %1837 = vmatprep.subr.bf16.mxu0 0
    %1838 = vmatpush1.bf16.msra.mxu0 %v241
    %1839 = vmatprep.subr.bf16.mxu0 0
    %1840 = vmatpush1.bf16.msra.mxu0 %v242
    %1841 = vmatprep.subr.bf16.mxu0 0
    %1842 = vmatpush1.bf16.msra.mxu0 0
    %1843 = vmatprep.subr.bf16.mxu0 0
    %1844 = vmatpush1.bf16.msra.mxu0 0
    %1845 = vmatprep.subr.bf16.mxu0 0
    %1846 = vmatpush1.bf16.msra.mxu0 0
    %1847 = vmatprep.subr.bf16.mxu0 0
    %1848 = vmatpush1.bf16.msra.mxu0 0
    %1849 = vmatprep.subr.bf16.mxu0 0
    %1850 = vmatpush1.bf16.msra.mxu0 0
    %1851 = vmatprep.subr.bf16.mxu0 0
    %1852 = vmatpush1.bf16.msra.mxu0 0
    %1853 = vmatprep.subr.bf16.mxu0 0
    %1854 = vmatpush1.bf16.msra.mxu0 0
    %1855 = vmatprep.subr.bf16.mxu0 0
    %1856 = vmatpush1.bf16.msra.mxu0 0
    %1857 = vmatprep.subr.bf16.mxu0 0
    %1858 = vmatpush1.bf16.msra.mxu0 0
    %1859 = vmatprep.subr.bf16.mxu0 0
    %1860 = vmatpush1.bf16.msra.mxu0 0
    %1861 = vmatprep.subr.bf16.mxu0 0
    %1862 = vmatpush1.bf16.msra.mxu0 0
    %1863 = vmatprep.subr.bf16.mxu0 0
    %1864 = vmatpush1.bf16.msra.mxu0 0
    %1865 = vmatprep.subr.bf16.mxu0 0
    %1866 = vmatpush1.bf16.msra.mxu0 0
    %1867 = vmatprep.subr.bf16.mxu0 0
    %1868 = vmatpush1.bf16.msra.mxu0 0
    %1869 = vmatprep.mubr.bf16.mxu0 0
    %1870 = vmatmul.mubr.bf16.gmra.mrb[0].mxu0 %v1609
    %v1871 = vpop.f32.mrb[0].mxu0
    %v1872 = vadd.f32 0.0, %v1871
    %v1873 = vpop.f32.mrb[0].mxu0
    %v1874 = vpop.f32.mrb[0].mxu0
    %v1875 = vpop.f32.mrb[0].mxu0
    %1876 = vdwg.mxu0
    %v1877 = vadd.f32 %v227, %v1872
    %v1878 = vxor.u32 %v1877, 2147483648
    %v1879 = vmul.f32 %v1878, 1.442695
    %v1880 = vpow.pop %v1879
    %v1881 = vadd.f32 %v1880, 1.0
    %v1882 = vrcp.pop %v1881
    %v1883 = vmul.f32 1.0, %v1882
    %v1884 = vmul.f32 %v1883, 2.0
    %v1885 = vsub.f32 %v1884, 1.0
    %v1886 = vmul.f32 %v1883, %v1597
    %1888 = vrot.lane.b32.xlu0 %v1885, 32
    %v1889 = vpop.permute.xlu0 %1888
    %v1891 = vmul.f32 %v1883, %v1889
    %1893 = vrot.lane.b32.xlu0 %v1891, 32
    %v1894 = vpop.permute.xlu0 %1893
    %v1896 = vadd.f32 %v1886, %v1894
    %v1897 = vtanh.pop %v1896
    %1899 = vrot.lane.b32.xlu0 %v1897, 32
    %v1900 = vpop.permute.xlu0 %1899
    %v1902 = vmul.f32 %v1883, %v1900
    %v1903 = vpack.c.bf16 %v1902, %v1902
    %1905 = vrot.lane.b32.xlu0 %v1903, 64
    %v1906 = vpop.permute.xlu0 %1905
    %v1908 = vsel %vm245, %v1906, 0
    %1910 = vmatprep.subr.bf16.mxu0 0
    %1911 = vmatpush1.bf16.msra.mxu0 %v333
    %1912 = vmatprep.subr.bf16.mxu0 0
    %1913 = vmatpush1.bf16.msra.mxu0 %v334
    %1914 = vmatprep.subr.bf16.mxu0 0
    %1915 = vmatpush1.bf16.msra.mxu0 0
    %1916 = vmatprep.subr.bf16.mxu0 0
    %1917 = vmatpush1.bf16.msra.mxu0 0
    %1918 = vmatprep.subr.bf16.mxu0 0
    %1919 = vmatpush1.bf16.msra.mxu0 0
    %1920 = vmatprep.subr.bf16.mxu0 0
    %1921 = vmatpush1.bf16.msra.mxu0 0
    %1922 = vmatprep.subr.bf16.mxu0 0
    %1923 = vmatpush1.bf16.msra.mxu0 0
    %1924 = vmatprep.subr.bf16.mxu0 0
    %1925 = vmatpush1.bf16.msra.mxu0 0
    %1926 = vmatprep.subr.bf16.mxu0 0
    %1927 = vmatpush1.bf16.msra.mxu0 0
    %1928 = vmatprep.subr.bf16.mxu0 0
    %1929 = vmatpush1.bf16.msra.mxu0 0
    %1930 = vmatprep.subr.bf16.mxu0 0
    %1931 = vmatpush1.bf16.msra.mxu0 0
    %1932 = vmatprep.subr.bf16.mxu0 0
    %1933 = vmatpush1.bf16.msra.mxu0 0
    %1934 = vmatprep.subr.bf16.mxu0 0
    %1935 = vmatpush1.bf16.msra.mxu0 0
    %1936 = vmatprep.subr.bf16.mxu0 0
    %1937 = vmatpush1.bf16.msra.mxu0 0
    %1938 = vmatprep.subr.bf16.mxu0 0
    %1939 = vmatpush1.bf16.msra.mxu0 0
    %1940 = vmatprep.subr.bf16.mxu0 0
    %1941 = vmatpush1.bf16.msra.mxu0 0
    %1942 = vmatprep.mubr.bf16.mxu0 0
    %1943 = vmatmul.mubr.bf16.gmra.mrb[0].mxu0 %v1908
    %v1944 = vpop.f32.mrb[0].mxu0
    %v1945 = vadd.f32 %v320, %v1944
    %v1946 = vpop.f32.mrb[0].mxu0
    %v1947 = vpop.f32.mrb[0].mxu0
    %v1948 = vpop.f32.mrb[0].mxu0
    %1949 = vdwg.mxu0
    %1950 = vmatprep.subr.bf16.mxu0 0
    %1951 = vmatpush1.bf16.msra.mxu0 %v501
    %1952 = vmatprep.subr.bf16.mxu0 0
    %1953 = vmatpush1.bf16.msra.mxu0 %v502
    %1954 = vmatprep.subr.bf16.mxu0 0
    %1955 = vmatpush1.bf16.msra.mxu0 0
    %1956 = vmatprep.subr.bf16.mxu0 0
    %1957 = vmatpush1.bf16.msra.mxu0 0
    %1958 = vmatprep.subr.bf16.mxu0 0
    %1959 = vmatpush1.bf16.msra.mxu0 0
    %1960 = vmatprep.subr.bf16.mxu0 0
    %1961 = vmatpush1.bf16.msra.mxu0 0
    %1962 = vmatprep.subr.bf16.mxu0 0
    %1963 = vmatpush1.bf16.msra.mxu0 0
    %1964 = vmatprep.subr.bf16.mxu0 0
    %1965 = vmatpush1.bf16.msra.mxu0 0
    %1966 = vmatprep.subr.bf16.mxu0 0
    %1967 = vmatpush1.bf16.msra.mxu0 0
    %1968 = vmatprep.subr.bf16.mxu0 0
    %1969 = vmatpush1.bf16.msra.mxu0 0
    %1970 = vmatprep.subr.bf16.mxu0 0
    %1971 = vmatpush1.bf16.msra.mxu0 0
    %1972 = vmatprep.subr.bf16.mxu0 0
    %1973 = vmatpush1.bf16.msra.mxu0 0
    %1974 = vmatprep.subr.bf16.mxu0 0
    %1975 = vmatpush1.bf16.msra.mxu0 0
    %1976 = vmatprep.subr.bf16.mxu0 0
    %1977 = vmatpush1.bf16.msra.mxu0 0
    %1978 = vmatprep.subr.bf16.mxu0 0
    %1979 = vmatpush1.bf16.msra.mxu0 0
    %1980 = vmatprep.subr.bf16.mxu0 0
    %1981 = vmatpush1.bf16.msra.mxu0 0
    %1982 = vmatprep.mubr.bf16.mxu0 0
    %1983 = vmatmul.mubr.bf16.gmra.mrb[0].mxu0 %v1722
    %v1984 = vpop.f32.mrb[0].mxu0
    %v1985 = vadd.f32 0.0, %v1984
    %v1986 = vpop.f32.mrb[0].mxu0
    %v1987 = vpop.f32.mrb[0].mxu0
    %v1988 = vpop.f32.mrb[0].mxu0
    %1989 = vdwg.mxu0
    %v1990 = vadd.f32 %v1646, %v1985
    %v1991 = vxor.u32 %v1990, 2147483648
    %v1992 = vmul.f32 %v1991, 1.442695
    %v1993 = vpow.pop %v1992
    %v1994 = vadd.f32 %v1993, 1.0
    %v1995 = vrcp.pop %v1994
    %v1996 = vmul.f32 1.0, %v1995
    %v1997 = vmul.f32 %v1996, 2.0
    %v1998 = vsub.f32 %v1997, 1.0
    %v1999 = vmul.f32 %v1996, %v1710
    %2001 = vrot.lane.b32.xlu0 %v1998, 32
    %v2002 = vpop.permute.xlu0 %2001
    %v2004 = vmul.f32 %v1996, %v2002
    %2006 = vrot.lane.b32.xlu0 %v2004, 32
    %v2007 = vpop.permute.xlu0 %2006
    %v2009 = vadd.f32 %v1999, %v2007
    %v2010 = vtanh.pop %v2009
    %2012 = vrot.lane.b32.xlu0 %v2010, 32
    %v2013 = vpop.permute.xlu0 %2012
    %v2015 = vmul.f32 %v1996, %v2013
    %v2016 = vpack.c.bf16 %v2015, %v2015
    %2018 = vrot.lane.b32.xlu0 %v2016, 64
    %v2019 = vpop.permute.xlu0 %2018
    %v2021 = vsel %vm245, %v2019, 0
    %2023 = vmatprep.subr.bf16.mxu0 0
    %2024 = vmatpush1.bf16.msra.mxu0 %v589
    %2025 = vmatprep.subr.bf16.mxu0 0
    %2026 = vmatpush1.bf16.msra.mxu0 %v590
    %2027 = vmatprep.subr.bf16.mxu0 0
    %2028 = vmatpush1.bf16.msra.mxu0 0
    %2029 = vmatprep.subr.bf16.mxu0 0
    %2030 = vmatpush1.bf16.msra.mxu0 0
    %2031 = vmatprep.subr.bf16.mxu0 0
    %2032 = vmatpush1.bf16.msra.mxu0 0
    %2033 = vmatprep.subr.bf16.mxu0 0
    %2034 = vmatpush1.bf16.msra.mxu0 0
    %2035 = vmatprep.subr.bf16.mxu0 0
    %2036 = vmatpush1.bf16.msra.mxu0 0
    %2037 = vmatprep.subr.bf16.mxu0 0
    %2038 = vmatpush1.bf16.msra.mxu0 0
    %2039 = vmatprep.subr.bf16.mxu0 0
    %2040 = vmatpush1.bf16.msra.mxu0 0
    %2041 = vmatprep.subr.bf16.mxu0 0
    %2042 = vmatpush1.bf16.msra.mxu0 0
    %2043 = vmatprep.subr.bf16.mxu0 0
    %2044 = vmatpush1.bf16.msra.mxu0 0
    %2045 = vmatprep.subr.bf16.mxu0 0
    %2046 = vmatpush1.bf16.msra.mxu0 0
    %2047 = vmatprep.subr.bf16.mxu0 0
    %2048 = vmatpush1.bf16.msra.mxu0 0
    %2049 = vmatprep.subr.bf16.mxu0 0
    %2050 = vmatpush1.bf16.msra.mxu0 0
    %2051 = vmatprep.subr.bf16.mxu0 0
    %2052 = vmatpush1.bf16.msra.mxu0 0
    %2053 = vmatprep.subr.bf16.mxu0 0
    %2054 = vmatpush1.bf16.msra.mxu0 0
    %2055 = vmatprep.mubr.bf16.mxu0 0
    %2056 = vmatmul.mubr.bf16.gmra.mrb[0].mxu0 %v2021
    %v2057 = vpop.f32.mrb[0].mxu0
    %v2058 = vadd.f32 %v576, %v2057
    %v2059 = vpop.f32.mrb[0].mxu0
    %v2060 = vpop.f32.mrb[0].mxu0
    %v2061 = vpop.f32.mrb[0].mxu0
    %2062 = vdwg.mxu0
    %v2063 = vpack.c.bf16 %v1836, %v1836
    %2065 = vrot.lane.b32.xlu0 %v2063, 64
    %v2066 = vpop.permute.xlu0 %2065
    %v2068 = vsel %vm245, %v2066, 0
    %2070 = vmatprep.subr.bf16.mxu0 0
    %2071 = vmatpush1.bf16.msra.mxu0 %v870
    %2072 = vmatprep.subr.bf16.mxu0 0
    %2073 = vmatpush1.bf16.msra.mxu0 %v871
    %2074 = vmatprep.subr.bf16.mxu0 0
    %2075 = vmatpush1.bf16.msra.mxu0 0
    %2076 = vmatprep.subr.bf16.mxu0 0
    %2077 = vmatpush1.bf16.msra.mxu0 0
    %2078 = vmatprep.subr.bf16.mxu0 0
    %2079 = vmatpush1.bf16.msra.mxu0 0
    %2080 = vmatprep.subr.bf16.mxu0 0
    %2081 = vmatpush1.bf16.msra.mxu0 0
    %2082 = vmatprep.subr.bf16.mxu0 0
    %2083 = vmatpush1.bf16.msra.mxu0 0
    %2084 = vmatprep.subr.bf16.mxu0 0
    %2085 = vmatpush1.bf16.msra.mxu0 0
    %2086 = vmatprep.subr.bf16.mxu0 0
    %2087 = vmatpush1.bf16.msra.mxu0 0
    %2088 = vmatprep.subr.bf16.mxu0 0
    %2089 = vmatpush1.bf16.msra.mxu0 0
    %2090 = vmatprep.subr.bf16.mxu0 0
    %2091 = vmatpush1.bf16.msra.mxu0 0
    %2092 = vmatprep.subr.bf16.mxu0 0
    %2093 = vmatpush1.bf16.msra.mxu0 0
    %2094 = vmatprep.subr.bf16.mxu0 0
    %2095 = vmatpush1.bf16.msra.mxu0 0
    %2096 = vmatprep.subr.bf16.mxu0 0
    %2097 = vmatpush1.bf16.msra.mxu0 0
    %2098 = vmatprep.subr.bf16.mxu0 0
    %2099 = vmatpush1.bf16.msra.mxu0 0
    %2100 = vmatprep.subr.bf16.mxu0 0
    %2101 = vmatpush1.bf16.msra.mxu0 0
    %2102 = vmatprep.mubr.bf16.mxu0 0
    %2103 = vmatmul.mubr.bf16.gmra.mrb[0].mxu0 %v2068
    %v2104 = vpop.f32.mrb[0].mxu0
    %v2105 = vadd.f32 0.0, %v2104
    %v2106 = vpop.f32.mrb[0].mxu0
    %v2107 = vpop.f32.mrb[0].mxu0
    %v2108 = vpop.f32.mrb[0].mxu0
    %2109 = vdwg.mxu0
    %v2110 = vadd.f32 %v1759, %v2105
    %v2111 = vxor.u32 %v2110, 2147483648
    %v2112 = vmul.f32 %v2111, 1.442695
    %v2113 = vpow.pop %v2112
    %v2114 = vadd.f32 %v2113, 1.0
    %v2115 = vrcp.pop %v2114
    %v2116 = vmul.f32 1.0, %v2115
    %v2117 = vmul.f32 %v2116, 2.0
    %v2118 = vsub.f32 %v2117, 1.0
    %v2119 = vmul.f32 %v2116, %v1830
    %2121 = vrot.lane.b32.xlu0 %v2118, 32
    %v2122 = vpop.permute.xlu0 %2121
    %v2124 = vmul.f32 %v2116, %v2122
    %2126 = vrot.lane.b32.xlu0 %v2124, 32
    %v2127 = vpop.permute.xlu0 %2126
    %v2129 = vadd.f32 %v2119, %v2127
    %v2130 = vtanh.pop %v2129
    %2132 = vrot.lane.b32.xlu0 %v2130, 32
    %v2133 = vpop.permute.xlu0 %2132
    %v2135 = vmul.f32 %v2116, %v2133
    %2136 = vmatprep.subr.bf16.mxu0 0
    %2137 = vmatpush1.bf16.msra.mxu0 %v241
    %2138 = vmatprep.subr.bf16.mxu0 0
    %2139 = vmatpush1.bf16.msra.mxu0 %v242
    %2140 = vmatprep.subr.bf16.mxu0 0
    %2141 = vmatpush1.bf16.msra.mxu0 0
    %2142 = vmatprep.subr.bf16.mxu0 0
    %2143 = vmatpush1.bf16.msra.mxu0 0
    %2144 = vmatprep.subr.bf16.mxu0 0
    %2145 = vmatpush1.bf16.msra.mxu0 0
    %2146 = vmatprep.subr.bf16.mxu0 0
    %2147 = vmatpush1.bf16.msra.mxu0 0
    %2148 = vmatprep.subr.bf16.mxu0 0
    %2149 = vmatpush1.bf16.msra.mxu0 0
    %2150 = vmatprep.subr.bf16.mxu0 0
    %2151 = vmatpush1.bf16.msra.mxu0 0
    %2152 = vmatprep.subr.bf16.mxu0 0
    %2153 = vmatpush1.bf16.msra.mxu0 0
    %2154 = vmatprep.subr.bf16.mxu0 0
    %2155 = vmatpush1.bf16.msra.mxu0 0
    %2156 = vmatprep.subr.bf16.mxu0 0
    %2157 = vmatpush1.bf16.msra.mxu0 0
    %2158 = vmatprep.subr.bf16.mxu0 0
    %2159 = vmatpush1.bf16.msra.mxu0 0
    %2160 = vmatprep.subr.bf16.mxu0 0
    %2161 = vmatpush1.bf16.msra.mxu0 0
    %2162 = vmatprep.subr.bf16.mxu0 0
    %2163 = vmatpush1.bf16.msra.mxu0 0
    %2164 = vmatprep.subr.bf16.mxu0 0
    %2165 = vmatpush1.bf16.msra.mxu0 0
    %2166 = vmatprep.subr.bf16.mxu0 0
    %2167 = vmatpush1.bf16.msra.mxu0 0
    %2168 = vmatprep.mubr.bf16.mxu0 0
    %2169 = vmatmul.mubr.bf16.gmra.mrb[0].mxu0 %v1908
    %v2170 = vpop.f32.mrb[0].mxu0
    %v2171 = vadd.f32 0.0, %v2170
    %v2172 = vpop.f32.mrb[0].mxu0
    %v2173 = vpop.f32.mrb[0].mxu0
    %v2174 = vpop.f32.mrb[0].mxu0
    %2175 = vdwg.mxu0
    %v2176 = vadd.f32 %v230, %v2171
    %v2177 = vxor.u32 %v2176, 2147483648
    %v2178 = vmul.f32 %v2177, 1.442695
    %v2179 = vpow.pop %v2178
    %v2180 = vadd.f32 %v2179, 1.0
    %v2181 = vrcp.pop %v2180
    %v2182 = vmul.f32 1.0, %v2181
    %v2183 = vmul.f32 %v2182, 2.0
    %v2184 = vsub.f32 %v2183, 1.0
    %v2185 = vmul.f32 %v2182, %v1896
    %2187 = vrot.lane.b32.xlu0 %v2184, 32
    %v2188 = vpop.permute.xlu0 %2187
    %v2190 = vmul.f32 %v2182, %v2188
    %2192 = vrot.lane.b32.xlu0 %v2190, 32
    %v2193 = vpop.permute.xlu0 %2192
    %v2195 = vadd.f32 %v2185, %v2193
    %v2196 = vtanh.pop %v2195
    %2198 = vrot.lane.b32.xlu0 %v2196, 32
    %v2199 = vpop.permute.xlu0 %2198
    %v2201 = vmul.f32 %v2182, %v2199
    %v2202 = vpack.c.bf16 %v2201, %v2201
    %2204 = vrot.lane.b32.xlu0 %v2202, 64
    %v2205 = vpop.permute.xlu0 %2204
    %v2207 = vsel %vm245, %v2205, 0
    %2209 = vmatprep.subr.bf16.mxu0 0
    %2210 = vmatpush1.bf16.msra.mxu0 %v333
    %2211 = vmatprep.subr.bf16.mxu0 0
    %2212 = vmatpush1.bf16.msra.mxu0 %v334
    %2213 = vmatprep.subr.bf16.mxu0 0
    %2214 = vmatpush1.bf16.msra.mxu0 0
    %2215 = vmatprep.subr.bf16.mxu0 0
    %2216 = vmatpush1.bf16.msra.mxu0 0
    %2217 = vmatprep.subr.bf16.mxu0 0
    %2218 = vmatpush1.bf16.msra.mxu0 0
    %2219 = vmatprep.subr.bf16.mxu0 0
    %2220 = vmatpush1.bf16.msra.mxu0 0
    %2221 = vmatprep.subr.bf16.mxu0 0
    %2222 = vmatpush1.bf16.msra.mxu0 0
    %2223 = vmatprep.subr.bf16.mxu0 0
    %2224 = vmatpush1.bf16.msra.mxu0 0
    %2225 = vmatprep.subr.bf16.mxu0 0
    %2226 = vmatpush1.bf16.msra.mxu0 0
    %2227 = vmatprep.subr.bf16.mxu0 0
    %2228 = vmatpush1.bf16.msra.mxu0 0
    %2229 = vmatprep.subr.bf16.mxu0 0
    %2230 = vmatpush1.bf16.msra.mxu0 0
    %2231 = vmatprep.subr.bf16.mxu0 0
    %2232 = vmatpush1.bf16.msra.mxu0 0
    %2233 = vmatprep.subr.bf16.mxu0 0
    %2234 = vmatpush1.bf16.msra.mxu0 0
    %2235 = vmatprep.subr.bf16.mxu0 0
    %2236 = vmatpush1.bf16.msra.mxu0 0
    %2237 = vmatprep.subr.bf16.mxu0 0
    %2238 = vmatpush1.bf16.msra.mxu0 0
    %2239 = vmatprep.subr.bf16.mxu0 0
    %2240 = vmatpush1.bf16.msra.mxu0 0
    %2241 = vmatprep.mubr.bf16.mxu0 0
    %2242 = vmatmul.mubr.bf16.gmra.mrb[0].mxu0 %v2207
    %v2243 = vpop.f32.mrb[0].mxu0
    %v2244 = vadd.f32 %v320, %v2243
    %v2245 = vpop.f32.mrb[0].mxu0
    %v2246 = vpop.f32.mrb[0].mxu0
    %v2247 = vpop.f32.mrb[0].mxu0
    %2248 = vdwg.mxu0
    %2249 = vmatprep.subr.bf16.mxu0 0
    %2250 = vmatpush1.bf16.msra.mxu0 %v501
    %2251 = vmatprep.subr.bf16.mxu0 0
    %2252 = vmatpush1.bf16.msra.mxu0 %v502
    %2253 = vmatprep.subr.bf16.mxu0 0
    %2254 = vmatpush1.bf16.msra.mxu0 0
    %2255 = vmatprep.subr.bf16.mxu0 0
    %2256 = vmatpush1.bf16.msra.mxu0 0
    %2257 = vmatprep.subr.bf16.mxu0 0
    %2258 = vmatpush1.bf16.msra.mxu0 0
    %2259 = vmatprep.subr.bf16.mxu0 0
    %2260 = vmatpush1.bf16.msra.mxu0 0
    %2261 = vmatprep.subr.bf16.mxu0 0
    %2262 = vmatpush1.bf16.msra.mxu0 0
    %2263 = vmatprep.subr.bf16.mxu0 0
    %2264 = vmatpush1.bf16.msra.mxu0 0
    %2265 = vmatprep.subr.bf16.mxu0 0
    %2266 = vmatpush1.bf16.msra.mxu0 0
    %2267 = vmatprep.subr.bf16.mxu0 0
    %2268 = vmatpush1.bf16.msra.mxu0 0
    %2269 = vmatprep.subr.bf16.mxu0 0
    %2270 = vmatpush1.bf16.msra.mxu0 0
    %2271 = vmatprep.subr.bf16.mxu0 0
    %2272 = vmatpush1.bf16.msra.mxu0 0
    %2273 = vmatprep.subr.bf16.mxu0 0
    %2274 = vmatpush1.bf16.msra.mxu0 0
    %2275 = vmatprep.subr.bf16.mxu0 0
    %2276 = vmatpush1.bf16.msra.mxu0 0
    %2277 = vmatprep.subr.bf16.mxu0 0
    %2278 = vmatpush1.bf16.msra.mxu0 0
    %2279 = vmatprep.subr.bf16.mxu0 0
    %2280 = vmatpush1.bf16.msra.mxu0 0
    %2281 = vmatprep.mubr.bf16.mxu0 0
    %2282 = vmatmul.mubr.bf16.gmra.mrb[0].mxu0 %v2021
    %v2283 = vpop.f32.mrb[0].mxu0
    %v2284 = vadd.f32 0.0, %v2283
    %v2285 = vpop.f32.mrb[0].mxu0
    %v2286 = vpop.f32.mrb[0].mxu0
    %v2287 = vpop.f32.mrb[0].mxu0
    %2288 = vdwg.mxu0
    %v2289 = vadd.f32 %v1945, %v2284
    %v2290 = vxor.u32 %v2289, 2147483648
    %v2291 = vmul.f32 %v2290, 1.442695
    %v2292 = vpow.pop %v2291
    %v2293 = vadd.f32 %v2292, 1.0
    %v2294 = vrcp.pop %v2293
    %v2295 = vmul.f32 1.0, %v2294
    %v2296 = vmul.f32 %v2295, 2.0
    %v2297 = vsub.f32 %v2296, 1.0
    %v2298 = vmul.f32 %v2295, %v2009
    %2300 = vrot.lane.b32.xlu0 %v2297, 32
    %v2301 = vpop.permute.xlu0 %2300
    %v2303 = vmul.f32 %v2295, %v2301
    %2305 = vrot.lane.b32.xlu0 %v2303, 32
    %v2306 = vpop.permute.xlu0 %2305
    %v2308 = vadd.f32 %v2298, %v2306
    %v2309 = vtanh.pop %v2308
    %2311 = vrot.lane.b32.xlu0 %v2309, 32
    %v2312 = vpop.permute.xlu0 %2311
    %v2314 = vmul.f32 %v2295, %v2312
    %v2315 = vpack.c.bf16 %v2314, %v2314
    %2317 = vrot.lane.b32.xlu0 %v2315, 64
    %v2318 = vpop.permute.xlu0 %2317
    %v2320 = vsel %vm245, %v2318, 0
    %2322 = vmatprep.subr.bf16.mxu0 0
    %2323 = vmatpush1.bf16.msra.mxu0 %v589
    %2324 = vmatprep.subr.bf16.mxu0 0
    %2325 = vmatpush1.bf16.msra.mxu0 %v590
    %2326 = vmatprep.subr.bf16.mxu0 0
    %2327 = vmatpush1.bf16.msra.mxu0 0
    %2328 = vmatprep.subr.bf16.mxu0 0
    %2329 = vmatpush1.bf16.msra.mxu0 0
    %2330 = vmatprep.subr.bf16.mxu0 0
    %2331 = vmatpush1.bf16.msra.mxu0 0
    %2332 = vmatprep.subr.bf16.mxu0 0
    %2333 = vmatpush1.bf16.msra.mxu0 0
    %2334 = vmatprep.subr.bf16.mxu0 0
    %2335 = vmatpush1.bf16.msra.mxu0 0
    %2336 = vmatprep.subr.bf16.mxu0 0
    %2337 = vmatpush1.bf16.msra.mxu0 0
    %2338 = vmatprep.subr.bf16.mxu0 0
    %2339 = vmatpush1.bf16.msra.mxu0 0
    %2340 = vmatprep.subr.bf16.mxu0 0
    %2341 = vmatpush1.bf16.msra.mxu0 0
    %2342 = vmatprep.subr.bf16.mxu0 0
    %2343 = vmatpush1.bf16.msra.mxu0 0
    %2344 = vmatprep.subr.bf16.mxu0 0
    %2345 = vmatpush1.bf16.msra.mxu0 0
    %2346 = vmatprep.subr.bf16.mxu0 0
    %2347 = vmatpush1.bf16.msra.mxu0 0
    %2348 = vmatprep.subr.bf16.mxu0 0
    %2349 = vmatpush1.bf16.msra.mxu0 0
    %2350 = vmatprep.subr.bf16.mxu0 0
    %2351 = vmatpush1.bf16.msra.mxu0 0
    %2352 = vmatprep.subr.bf16.mxu0 0
    %2353 = vmatpush1.bf16.msra.mxu0 0
    %2354 = vmatprep.mubr.bf16.mxu0 0
    %2355 = vmatmul.mubr.bf16.gmra.mrb[0].mxu0 %v2320
    %v2356 = vpop.f32.mrb[0].mxu0
    %v2357 = vadd.f32 %v576, %v2356
    %v2358 = vpop.f32.mrb[0].mxu0
    %v2359 = vpop.f32.mrb[0].mxu0
    %v2360 = vpop.f32.mrb[0].mxu0
    %2361 = vdwg.mxu0
    %v2362 = vpack.c.bf16 %v2135, %v2135
    %2364 = vrot.lane.b32.xlu0 %v2362, 64
    %v2365 = vpop.permute.xlu0 %2364
    %v2367 = vsel %vm245, %v2365, 0
    %2369 = vmatprep.subr.bf16.mxu0 0
    %2370 = vmatpush1.bf16.msra.mxu0 %v870
    %2371 = vmatprep.subr.bf16.mxu0 0
    %2372 = vmatpush1.bf16.msra.mxu0 %v871
    %2373 = vmatprep.subr.bf16.mxu0 0
    %2374 = vmatpush1.bf16.msra.mxu0 0
    %2375 = vmatprep.subr.bf16.mxu0 0
    %2376 = vmatpush1.bf16.msra.mxu0 0
    %2377 = vmatprep.subr.bf16.mxu0 0
    %2378 = vmatpush1.bf16.msra.mxu0 0
    %2379 = vmatprep.subr.bf16.mxu0 0
    %2380 = vmatpush1.bf16.msra.mxu0 0
    %2381 = vmatprep.subr.bf16.mxu0 0
    %2382 = vmatpush1.bf16.msra.mxu0 0
    %2383 = vmatprep.subr.bf16.mxu0 0
    %2384 = vmatpush1.bf16.msra.mxu0 0
    %2385 = vmatprep.subr.bf16.mxu0 0
    %2386 = vmatpush1.bf16.msra.mxu0 0
    %2387 = vmatprep.subr.bf16.mxu0 0
    %2388 = vmatpush1.bf16.msra.mxu0 0
    %2389 = vmatprep.subr.bf16.mxu0 0
    %2390 = vmatpush1.bf16.msra.mxu0 0
    %2391 = vmatprep.subr.bf16.mxu0 0
    %2392 = vmatpush1.bf16.msra.mxu0 0
    %2393 = vmatprep.subr.bf16.mxu0 0
    %2394 = vmatpush1.bf16.msra.mxu0 0
    %2395 = vmatprep.subr.bf16.mxu0 0
    %2396 = vmatpush1.bf16.msra.mxu0 0
    %2397 = vmatprep.subr.bf16.mxu0 0
    %2398 = vmatpush1.bf16.msra.mxu0 0
    %2399 = vmatprep.subr.bf16.mxu0 0
    %2400 = vmatpush1.bf16.msra.mxu0 0
    %2401 = vmatprep.mubr.bf16.mxu0 0
    %2402 = vmatmul.mubr.bf16.gmra.mrb[0].mxu0 %v2367
    %v2403 = vpop.f32.mrb[0].mxu0
    %v2404 = vadd.f32 0.0, %v2403
    %v2405 = vpop.f32.mrb[0].mxu0
    %v2406 = vpop.f32.mrb[0].mxu0
    %v2407 = vpop.f32.mrb[0].mxu0
    %2408 = vdwg.mxu0
    %v2409 = vadd.f32 %v2058, %v2404
    %v2410 = vxor.u32 %v2409, 2147483648
    %v2411 = vmul.f32 %v2410, 1.442695
    %v2412 = vpow.pop %v2411
    %v2413 = vadd.f32 %v2412, 1.0
    %v2414 = vrcp.pop %v2413
    %v2415 = vmul.f32 1.0, %v2414
    %v2416 = vmul.f32 %v2415, 2.0
    %v2417 = vsub.f32 %v2416, 1.0
    %v2418 = vmul.f32 %v2415, %v2129
    %2420 = vrot.lane.b32.xlu0 %v2417, 32
    %v2421 = vpop.permute.xlu0 %2420
    %v2423 = vmul.f32 %v2415, %v2421
    %2425 = vrot.lane.b32.xlu0 %v2423, 32
    %v2426 = vpop.permute.xlu0 %2425
    %v2428 = vadd.f32 %v2418, %v2426
    %v2429 = vtanh.pop %v2428
    %2431 = vrot.lane.b32.xlu0 %v2429, 32
    %v2432 = vpop.permute.xlu0 %2431
    %v2434 = vmul.f32 %v2415, %v2432
    %2435 = vmatprep.subr.bf16.mxu0 0
    %2436 = vmatpush1.bf16.msra.mxu0 %v501
    %2437 = vmatprep.subr.bf16.mxu0 0
    %2438 = vmatpush1.bf16.msra.mxu0 %v502
    %2439 = vmatprep.subr.bf16.mxu0 0
    %2440 = vmatpush1.bf16.msra.mxu0 0
    %2441 = vmatprep.subr.bf16.mxu0 0
    %2442 = vmatpush1.bf16.msra.mxu0 0
    %2443 = vmatprep.subr.bf16.mxu0 0
    %2444 = vmatpush1.bf16.msra.mxu0 0
    %2445 = vmatprep.subr.bf16.mxu0 0
    %2446 = vmatpush1.bf16.msra.mxu0 0
    %2447 = vmatprep.subr.bf16.mxu0 0
    %2448 = vmatpush1.bf16.msra.mxu0 0
    %2449 = vmatprep.subr.bf16.mxu0 0
    %2450 = vmatpush1.bf16.msra.mxu0 0
    %2451 = vmatprep.subr.bf16.mxu0 0
    %2452 = vmatpush1.bf16.msra.mxu0 0
    %2453 = vmatprep.subr.bf16.mxu0 0
    %2454 = vmatpush1.bf16.msra.mxu0 0
    %2455 = vmatprep.subr.bf16.mxu0 0
    %2456 = vmatpush1.bf16.msra.mxu0 0
    %2457 = vmatprep.subr.bf16.mxu0 0
    %2458 = vmatpush1.bf16.msra.mxu0 0
    %2459 = vmatprep.subr.bf16.mxu0 0
    %2460 = vmatpush1.bf16.msra.mxu0 0
    %2461 = vmatprep.subr.bf16.mxu0 0
    %2462 = vmatpush1.bf16.msra.mxu0 0
    %2463 = vmatprep.subr.bf16.mxu0 0
    %2464 = vmatpush1.bf16.msra.mxu0 0
    %2465 = vmatprep.subr.bf16.mxu0 0
    %2466 = vmatpush1.bf16.msra.mxu0 0
    %2467 = vmatprep.mubr.bf16.mxu0 0
    %2468 = vmatmul.mubr.bf16.gmra.mrb[0].mxu0 %v2320
    %v2469 = vpop.f32.mrb[0].mxu0
    %v2470 = vadd.f32 0.0, %v2469
    %v2471 = vpop.f32.mrb[0].mxu0
    %v2472 = vpop.f32.mrb[0].mxu0
    %v2473 = vpop.f32.mrb[0].mxu0
    %2474 = vdwg.mxu0
    %v2475 = vadd.f32 %v2244, %v2470
    %v2476 = vxor.u32 %v2475, 2147483648
    %v2477 = vmul.f32 %v2476, 1.442695
    %v2478 = vpow.pop %v2477
    %v2479 = vadd.f32 %v2478, 1.0
    %v2480 = vrcp.pop %v2479
    %v2481 = vmul.f32 1.0, %v2480
    %v2482 = vmul.f32 %v2481, 2.0
    %v2483 = vsub.f32 %v2482, 1.0
    %v2484 = vmul.f32 %v2481, %v2308
    %2486 = vrot.lane.b32.xlu0 %v2483, 32
    %v2487 = vpop.permute.xlu0 %2486
    %v2489 = vmul.f32 %v2481, %v2487
    %2491 = vrot.lane.b32.xlu0 %v2489, 32
    %v2492 = vpop.permute.xlu0 %2491
    %v2494 = vadd.f32 %v2484, %v2492
    %v2495 = vtanh.pop %v2494
    %2497 = vrot.lane.b32.xlu0 %v2495, 32
    %v2498 = vpop.permute.xlu0 %2497
    %v2500 = vmul.f32 %v2481, %v2498
    %v2501 = vpack.c.bf16 %v2500, %v2500
    %2503 = vrot.lane.b32.xlu0 %v2501, 64
    %v2504 = vpop.permute.xlu0 %2503
    %v2506 = vsel %vm245, %v2504, 0
    %2508 = vmatprep.subr.bf16.mxu0 0
    %2509 = vmatpush1.bf16.msra.mxu0 %v589
    %2510 = vmatprep.subr.bf16.mxu0 0
    %2511 = vmatpush1.bf16.msra.mxu0 %v590
    %2512 = vmatprep.subr.bf16.mxu0 0
    %2513 = vmatpush1.bf16.msra.mxu0 0
    %2514 = vmatprep.subr.bf16.mxu0 0
    %2515 = vmatpush1.bf16.msra.mxu0 0
    %2516 = vmatprep.subr.bf16.mxu0 0
    %2517 = vmatpush1.bf16.msra.mxu0 0
    %2518 = vmatprep.subr.bf16.mxu0 0
    %2519 = vmatpush1.bf16.msra.mxu0 0
    %2520 = vmatprep.subr.bf16.mxu0 0
    %2521 = vmatpush1.bf16.msra.mxu0 0
    %2522 = vmatprep.subr.bf16.mxu0 0
    %2523 = vmatpush1.bf16.msra.mxu0 0
    %2524 = vmatprep.subr.bf16.mxu0 0
    %2525 = vmatpush1.bf16.msra.mxu0 0
    %2526 = vmatprep.subr.bf16.mxu0 0
    %2527 = vmatpush1.bf16.msra.mxu0 0
    %2528 = vmatprep.subr.bf16.mxu0 0
    %2529 = vmatpush1.bf16.msra.mxu0 0
    %2530 = vmatprep.subr.bf16.mxu0 0
    %2531 = vmatpush1.bf16.msra.mxu0 0
    %2532 = vmatprep.subr.bf16.mxu0 0
    %2533 = vmatpush1.bf16.msra.mxu0 0
    %2534 = vmatprep.subr.bf16.mxu0 0
    %2535 = vmatpush1.bf16.msra.mxu0 0
    %2536 = vmatprep.subr.bf16.mxu0 0
    %2537 = vmatpush1.bf16.msra.mxu0 0
    %2538 = vmatprep.subr.bf16.mxu0 0
    %2539 = vmatpush1.bf16.msra.mxu0 0
    %2540 = vmatprep.mubr.bf16.mxu0 0
    %2541 = vmatmul.mubr.bf16.gmra.mrb[0].mxu0 %v2506
    %v2542 = vpop.f32.mrb[0].mxu0
    %v2543 = vadd.f32 %v576, %v2542
    %v2544 = vpop.f32.mrb[0].mxu0
    %v2545 = vpop.f32.mrb[0].mxu0
    %v2546 = vpop.f32.mrb[0].mxu0
    %2547 = vdwg.mxu0
    %v2548 = vpack.c.bf16 %v2434, %v2434
    %2550 = vrot.lane.b32.xlu0 %v2548, 64
    %v2551 = vpop.permute.xlu0 %2550
    %v2553 = vsel %vm245, %v2551, 0
    %2555 = vmatprep.subr.bf16.mxu0 0
    %2556 = vmatpush1.bf16.msra.mxu0 %v870
    %2557 = vmatprep.subr.bf16.mxu0 0
    %2558 = vmatpush1.bf16.msra.mxu0 %v871
    %2559 = vmatprep.subr.bf16.mxu0 0
    %2560 = vmatpush1.bf16.msra.mxu0 0
    %2561 = vmatprep.subr.bf16.mxu0 0
    %2562 = vmatpush1.bf16.msra.mxu0 0
    %2563 = vmatprep.subr.bf16.mxu0 0
    %2564 = vmatpush1.bf16.msra.mxu0 0
    %2565 = vmatprep.subr.bf16.mxu0 0
    %2566 = vmatpush1.bf16.msra.mxu0 0
    %2567 = vmatprep.subr.bf16.mxu0 0
    %2568 = vmatpush1.bf16.msra.mxu0 0
    %2569 = vmatprep.subr.bf16.mxu0 0
    %2570 = vmatpush1.bf16.msra.mxu0 0
    %2571 = vmatprep.subr.bf16.mxu0 0
    %2572 = vmatpush1.bf16.msra.mxu0 0
    %2573 = vmatprep.subr.bf16.mxu0 0
    %2574 = vmatpush1.bf16.msra.mxu0 0
    %2575 = vmatprep.subr.bf16.mxu0 0
    %2576 = vmatpush1.bf16.msra.mxu0 0
    %2577 = vmatprep.subr.bf16.mxu0 0
    %2578 = vmatpush1.bf16.msra.mxu0 0
    %2579 = vmatprep.subr.bf16.mxu0 0
    %2580 = vmatpush1.bf16.msra.mxu0 0
    %2581 = vmatprep.subr.bf16.mxu0 0
    %2582 = vmatpush1.bf16.msra.mxu0 0
    %2583 = vmatprep.subr.bf16.mxu0 0
    %2584 = vmatpush1.bf16.msra.mxu0 0
    %2585 = vmatprep.subr.bf16.mxu0 0
    %2586 = vmatpush1.bf16.msra.mxu0 0
    %2587 = vmatprep.mubr.bf16.mxu0 0
    %2588 = vmatmul.mubr.bf16.gmra.mrb[0].mxu0 %v2553
    %v2589 = vpop.f32.mrb[0].mxu0
    %v2590 = vadd.f32 0.0, %v2589
    %v2591 = vpop.f32.mrb[0].mxu0
    %v2592 = vpop.f32.mrb[0].mxu0
    %v2593 = vpop.f32.mrb[0].mxu0
    %2594 = vdwg.mxu0
    %v2595 = vadd.f32 %v2357, %v2590
    %v2596 = vxor.u32 %v2595, 2147483648
    %v2597 = vmul.f32 %v2596, 1.442695
    %v2598 = vpow.pop %v2597
    %v2599 = vadd.f32 %v2598, 1.0
    %v2600 = vrcp.pop %v2599
    %v2601 = vmul.f32 1.0, %v2600
    %v2602 = vmul.f32 %v2601, 2.0
    %v2603 = vsub.f32 %v2602, 1.0
    %v2604 = vmul.f32 %v2601, %v2428
    %2606 = vrot.lane.b32.xlu0 %v2603, 32
    %v2607 = vpop.permute.xlu0 %2606
    %v2609 = vmul.f32 %v2601, %v2607
    %2611 = vrot.lane.b32.xlu0 %v2609, 32
    %v2612 = vpop.permute.xlu0 %2611
    %v2614 = vadd.f32 %v2604, %v2612
    %v2615 = vtanh.pop %v2614
    %2617 = vrot.lane.b32.xlu0 %v2615, 32
    %v2618 = vpop.permute.xlu0 %2617
    %v2620 = vmul.f32 %v2601, %v2618
    %v2621 = vpack.c.bf16 %v2620, %v2620
    %2623 = vrot.lane.b32.xlu0 %v2621, 64
    %v2624 = vpop.permute.xlu0 %2623
    %v2626 = vsel %vm245, %v2624, 0
    %2628 = vmatprep.subr.bf16.mxu0 0
    %2629 = vmatpush1.bf16.msra.mxu0 %v870
    %2630 = vmatprep.subr.bf16.mxu0 0
    %2631 = vmatpush1.bf16.msra.mxu0 %v871
    %2632 = vmatprep.subr.bf16.mxu0 0
    %2633 = vmatpush1.bf16.msra.mxu0 0
    %2634 = vmatprep.subr.bf16.mxu0 0
    %2635 = vmatpush1.bf16.msra.mxu0 0
    %2636 = vmatprep.subr.bf16.mxu0 0
    %2637 = vmatpush1.bf16.msra.mxu0 0
    %2638 = vmatprep.subr.bf16.mxu0 0
    %2639 = vmatpush1.bf16.msra.mxu0 0
    %2640 = vmatprep.subr.bf16.mxu0 0
    %2641 = vmatpush1.bf16.msra.mxu0 0
    %2642 = vmatprep.subr.bf16.mxu0 0
    %2643 = vmatpush1.bf16.msra.mxu0 0
    %2644 = vmatprep.subr.bf16.mxu0 0
    %2645 = vmatpush1.bf16.msra.mxu0 0
    %2646 = vmatprep.subr.bf16.mxu0 0
    %2647 = vmatpush1.bf16.msra.mxu0 0
    %2648 = vmatprep.subr.bf16.mxu0 0
    %2649 = vmatpush1.bf16.msra.mxu0 0
    %2650 = vmatprep.subr.bf16.mxu0 0
    %2651 = vmatpush1.bf16.msra.mxu0 0
    %2652 = vmatprep.subr.bf16.mxu0 0
    %2653 = vmatpush1.bf16.msra.mxu0 0
    %2654 = vmatprep.subr.bf16.mxu0 0
    %2655 = vmatpush1.bf16.msra.mxu0 0
    %2656 = vmatprep.subr.bf16.mxu0 0
    %2657 = vmatpush1.bf16.msra.mxu0 0
    %2658 = vmatprep.subr.bf16.mxu0 0
    %2659 = vmatpush1.bf16.msra.mxu0 0
    %2660 = vmatprep.mubr.bf16.mxu0 0
    %2661 = vmatmul.mubr.bf16.gmra.mrb[0].mxu0 %v2626
    %v2662 = vpop.f32.mrb[0].mxu0
    %v2663 = vadd.f32 0.0, %v2662
    %v2664 = vpop.f32.mrb[0].mxu0
    %v2665 = vpop.f32.mrb[0].mxu0
    %v2666 = vpop.f32.mrb[0].mxu0
    %2667 = vdwg.mxu0
    %v2668 = vadd.f32 %v2543, %v2663
    %v2669 = vxor.u32 %v2668, 2147483648
    %v2670 = vmul.f32 %v2669, 1.442695
    %v2671 = vpow.pop %v2670
    %v2672 = vadd.f32 %v2671, 1.0
    %v2673 = vrcp.pop %v2672
    %v2674 = vmul.f32 1.0, %v2673
    %v2675 = vmul.f32 %v2674, 2.0
    %v2676 = vsub.f32 %v2675, 1.0
    %v2677 = vmul.f32 %v2674, %v2614
    %2679 = vrot.lane.b32.xlu0 %v2676, 32
    %v2680 = vpop.permute.xlu0 %2679
    %v2682 = vmul.f32 %v2674, %v2680
    %2684 = vrot.lane.b32.xlu0 %v2682, 32
    %v2685 = vpop.permute.xlu0 %2684
    %v2687 = vadd.f32 %v2677, %v2685
    %v2688 = vtanh.pop %v2687
    %2690 = vrot.lane.b32.xlu0 %v2688, 32
    %v2691 = vpop.permute.xlu0 %2690
    %v2693 = vmul.f32 %v2674, %v2691
    %v2694 = vld [vmem:[%s10] sm:$0x1]
    %v2696 = vlaneseq
    %v2697 = vshrl.u32 %v2696, 7
    %v2698 = vsub.s32 0, %v2697
    %v2699 = vrot.slane %v2694, %v2698
    %2700 = vrot.lane.b32.xlu0 %v2699, 64
    %v2701 = vpop.permute.xlu0 %2700
    %v2703 = vmul.f32 %v2693, %v2701
    %2705 = vrot.lane.b32.xlu0 %v2703, 64
    %v2706 = vpop.permute.xlu0 %2705
    %v2708 = vsel %vm245, %v2706, 0.0
    %2709 = vadd.xlane.f32.xlu0 %v2708
    %v2710 = vpop.xlane.xlu0 %2709
    %v2711 = vld [vmem:[#allocation2] sm:$0x1]
    %v2713 = vlaneseq
    %v2714 = vshrl.u32 %v2713, 7
    %v2715 = vsub.s32 0, %v2714
    %v2716 = vrot.slane %v2711, %v2715
    %v2718 = vadd.f32 %v2710, %v2716
    %vm2719 = vcmask 7168
    %2720 = vst.msk [vmem:[%s12] sm:$0xff] %vm2719, %v2718
    // Predicated region
    $region66: #{tpu_custom_call.1} parent=1 // pred_check
      _
    $region67: #{tpu_custom_call.1} parent=1 // pred_check_branch
      %2722 = sbr.rel (0) target = $region69
    $region68: #{tpu_custom_call.1} parent=1 // pred_region
      _
    $region69: #{tpu_custom_call.1} parent=1 // pred_fallthru
      _
    // Predicated region
    $region70: #{tpu_custom_call.1} parent=1 // pred_check
      _
    $region71: #{tpu_custom_call.1} parent=1 // pred_check_branch
      %2724 = sbr.rel (0) target = $region73
    $region72: #{tpu_custom_call.1} parent=1 // pred_region
      _
    $region73: #{tpu_custom_call.1} parent=1 // pred_fallthru
      _
    %2725 = vsyncpa [#allocation4], 1
    %2726 = vsyncpa [#allocation6], 1
    %2727 = vsyncpa [#allocation9], 1

</llo_original>
